<compile_context>
chip_gen: v5e
topology: v5e:2x2
jax: 0.10.0
libtpu: 0.0.40
codegen_flags: <defaults>
</compile_context>

<pallas_src>
import functools
import jax
import jax.numpy as jnp
from jax import lax
from jax.experimental import pallas as pl
from jax.experimental.pallas import tpu as pltpu

F32_EPS = float(jnp.finfo(jnp.float32).eps)  # nn.RMSNorm(eps=None) -> finfo eps
PREC_HI = lax.Precision.HIGHEST              # only for the tiny scan matmuls


def _softplus(x):
    return jnp.maximum(x, 0.0) + jnp.log1p(jnp.exp(-jnp.abs(x)))


def _rmsnorm(x, w):
    return x * lax.rsqrt(jnp.mean(x * x, axis=-1, keepdims=True) + F32_EPS) * w


def _hybrid_kernel(heads, dim_head, chunk,
                   x_ref, wqkv_ref, whg_ref, wrn_ref, wan_ref, wout_ref,
                   o_ref,
                   lc_ref, lv_ref, h_ref, a_ref, r_ref):
    n, _ = x_ref.shape
    di = heads * dim_head
    C = chunk

    xb = x_ref[...].astype(jnp.bfloat16)

    # --- projections: bf16 MXU, f32 accumulation ---
    qkv = jnp.dot(xb, wqkv_ref[...], preferred_element_type=jnp.float32)   # (N, 3*di)
    hg = jnp.dot(xb, whg_ref[...], preferred_element_type=jnp.float32)     # (N, 2*di)

    hidden = hg[:, :di]
    gate = hg[:, di:]

    # minGRU log-space terms.  Single softplus(gate):
    #   log_coeffs = log(1 - z) = -softplus(gate)
    #   log(z)     = -softplus(-gate) = gate - softplus(gate) = gate + log_coeffs
    log_coeffs = -_softplus(gate)
    log_g_h = jnp.where(hidden >= 0,
                        jnp.log(jnp.maximum(hidden, 0.0) + 0.5),
                        -_softplus(-hidden))
    log_values = gate + log_coeffs + log_g_h
    lc_ref[...] = log_coeffs
    lv_ref[...] = log_values

    # --- blocked Heinsen scan: C rows per step, (1, di) carries ---
    a_ref[...] = jnp.zeros(a_ref.shape, jnp.float32)          # running cumsum(log_coeffs)
    r_ref[...] = jnp.full(r_ref.shape, -1e30, jnp.float32)    # running logsumexp

    row = lax.broadcasted_iota(jnp.int32, (C, C), 0)
    col = lax.broadcasted_iota(jnp.int32, (C, C), 1)
    tril = jnp.where(row >= col, 1.0, 0.0).astype(jnp.float32)  # inclusive prefix-sum

    @pl.loop(0, n // C)
    def _(c):
        start = pl.multiple_of(c * C, C)
        lc_c = lc_ref[pl.ds(start, C), :]                       # (C, di)
        lv_c = lv_ref[pl.ds(start, C), :]
        # exact in-chunk cumsum of log_coeffs (tiny matmul -> keep f32 precision)
        cs = jnp.dot(tril, lc_c, preferred_element_type=jnp.float32,
                     precision=PREC_HI)
        a_star = a_ref[...] + cs                                # (C, di)
        xv = lv_c - a_star
        m = jnp.maximum(jnp.max(xv, axis=0, keepdims=True), r_ref[...])   # (1, di)
        e = jnp.exp(xv - m)
        ce = jnp.dot(tril, e, preferred_element_type=jnp.float32,
                     precision=PREC_HI)                         # prefix sums of exp
        tot = ce + jnp.exp(r_ref[...] - m)
        r_c = m + jnp.log(tot)                                  # (C, di)
        h_ref[pl.ds(start, C), :] = jnp.exp(a_star + r_c)
        a_ref[...] = a_star[C - 1:C, :]
        r_ref[...] = r_c[C - 1:C, :]

    # --- head-major tensors (heads, N, dim_head) ---
    scale = 1.0 / (dim_head ** 0.5)

    def to_heads(t):  # (N, di) -> (heads, N, dim_head)
        return jnp.stack(
            [t[:, hh * dim_head:(hh + 1) * dim_head] for hh in range(heads)], axis=0)

    qh = to_heads(qkv[:, :di] * scale).astype(jnp.bfloat16)
    kh = to_heads(qkv[:, di:2 * di]).astype(jnp.bfloat16)
    vh = to_heads(qkv[:, 2 * di:]).astype(jnp.bfloat16)
    rh = to_heads(h_ref[...])                                   # minGRU output (f32)

    # --- causal attention, all heads batched through the MXU ---
    s = jnp.einsum('hnd,hmd->hnm', qh, kh,
                   preferred_element_type=jnp.float32)          # (H, N, N)
    rows = lax.broadcasted_iota(jnp.int32, (n, n), 0)
    cols = lax.broadcasted_iota(jnp.int32, (n, n), 1)
    causal = (rows >= cols)[None, :, :]
    s = jnp.where(causal, s, -1e30)
    s = s - jnp.max(s, axis=-1, keepdims=True)
    p = jnp.exp(s)
    p = p * pl.reciprocal(jnp.sum(p, axis=-1, keepdims=True), approx=True)
    attn = jnp.einsum('hnm,hmd->hnd', p.astype(jnp.bfloat16), vh,
                      preferred_element_type=jnp.float32)       # (H, N, dh)

    # --- per-head RMSNorm + 0.5 * mix ---
    wr = wrn_ref[...].reshape(1, 1, dim_head)
    wa = wan_ref[...].reshape(1, 1, dim_head)
    out_h = 0.5 * (_rmsnorm(rh, wr) + _rmsnorm(attn, wa))       # (H, N, dh) f32

    # --- output projection: accumulate per-head (no lane concat) ---
    out_hb = out_h.astype(jnp.bfloat16)
    acc = jnp.zeros((n, o_ref.shape[-1]), jnp.float32)
    for hh in range(heads):
        acc = acc + jnp.dot(out_hb[hh], wout_ref[hh],
                            preferred_element_type=jnp.float32)
    o_ref[...] = acc


def min_gru_attn_hybrid(x, params, *, heads, dim_head):
    B, N, D = x.shape
    di = heads * dim_head
    assert N % 8 == 0, "sequence length must be a multiple of 8"
    chunk = 16 if N % 16 == 0 else 8

    # bf16 weights for the MXU; W_out reshaped head-major so the kernel can
    # index heads on the (cheap) leading dim.
    wqkv = params["w_qkv"].astype(jnp.bfloat16)
    whg = params["w_hg"].astype(jnp.bfloat16)
    wout = params["w_out"].reshape(heads, dim_head, D).astype(jnp.bfloat16)

    kernel = functools.partial(_hybrid_kernel, heads, dim_head, chunk)
    return pl.pallas_call(
        kernel,
        out_shape=jax.ShapeDtypeStruct((B, N, D), jnp.float32),
        grid_spec=pltpu.PrefetchScalarGridSpec(
            num_scalar_prefetch=0,
            grid=(B,),
            in_specs=[
                pl.BlockSpec((None, N, D), lambda b: (b, 0, 0)),          # x (batch-sliced)
                pl.BlockSpec((D, 3 * di), lambda b: (0, 0)),              # W_qkv (bf16)
                pl.BlockSpec((D, 2 * di), lambda b: (0, 0)),              # W_hidden_gate (bf16)
                pl.BlockSpec((1, dim_head), lambda b: (0, 0)),            # rnn_out_norm weight
                pl.BlockSpec((1, dim_head), lambda b: (0, 0)),            # attn_out_norm weight
                pl.BlockSpec((heads, dim_head, D), lambda b: (0, 0, 0)),  # W_out (head-major, bf16)
            ],
            out_specs=pl.BlockSpec((None, N, D), lambda b: (b, 0, 0)),
            scratch_shapes=[
                pltpu.VMEM((N, di), jnp.float32),   # log_coeffs
                pltpu.VMEM((N, di), jnp.float32),   # log_values
                pltpu.VMEM((N, di), jnp.float32),   # minGRU hidden states
                pltpu.VMEM((1, di), jnp.float32),   # scan carry: cumsum of log_coeffs
                pltpu.VMEM((1, di), jnp.float32),   # scan carry: running logsumexp
            ],
        ),
        compiler_params=pltpu.CompilerParams(
            dimension_semantics=("parallel",)),     # batch elems are independent
    )(x, wqkv, whg, params["rnn_norm_w"], params["attn_norm_w"], wout)


# ----------------- pure-JAX reference (mirrors the PyTorch module, f32) -----------------
def reference(x, params, *, heads, dim_head):
    B, N, D = x.shape
    di = heads * dim_head
    prec = lax.Precision.HIGHEST

    qkv = jnp.einsum('bnd,de->bne', x, params["w_qkv"], precision=prec)
    qkv = qkv.reshape(B, N, 3, heads, dim_head).transpose(2, 0, 3, 1, 4)  # (3,B,H,N,dh)
    q, k, v = qkv[0], qkv[1], qkv[2]

    hg = jnp.einsum('bnd,de->bne', x, params["w_hg"], precision=prec)
    hidden, gate = hg[..., :di], hg[..., di:]
    log_coeffs = -jax.nn.softplus(gate)
    log_values = -jax.nn.softplus(-gate) + jnp.where(
        hidden >= 0, jnp.log(jax.nn.relu(hidden) + 0.5), -jax.nn.softplus(-hidden))
    a_star = jnp.cumsum(log_coeffs, axis=1)
    log_h = a_star + lax.cumlogsumexp(log_values - a_star, axis=1)
    rnn = jnp.exp(log_h)                                             # (B,N,di)
    rnn = rnn.reshape(B, N, heads, dim_head).transpose(0, 2, 1, 3)   # (B,H,N,dh)

    scale = 1.0 / (dim_head ** 0.5)
    s = jnp.einsum('bhnd,bhmd->bhnm', q, k, precision=prec) * scale
    causal = jnp.tril(jnp.ones((N, N), dtype=bool))
    s = jnp.where(causal, s, -jnp.inf)
    p = jax.nn.softmax(s, axis=-1)
    attn = jnp.einsum('bhnm,bhmd->bhnd', p, v, precision=prec)

    def rmsnorm(t, w):
        return t * lax.rsqrt(jnp.mean(t * t, axis=-1, keepdims=True) + F32_EPS) * w

    out = 0.5 * (rmsnorm(rnn, params["rnn_norm_w"][0]) + rmsnorm(attn, params["attn_norm_w"][0]))
    out = out.transpose(0, 2, 1, 3).reshape(B, N, di)
    return jnp.einsum('bne,ed->bnd', out, params["w_out"], precision=prec)


if __name__ == "__main__":
    B, N, D = 2, 64, 32
    heads, dim_head = 4, 16
    di = heads * dim_head

    key = jax.random.PRNGKey(0)
    kx, k1, k2, k3 = jax.random.split(key, 4)
    x = jax.random.normal(kx, (B, N, D), dtype=jnp.float32)
    params = dict(
        w_qkv=jax.random.normal(k1, (D, 3 * di), jnp.float32) / jnp.sqrt(D),
        w_hg=jax.random.normal(k2, (D, 2 * di), jnp.float32) / jnp.sqrt(D),
        rnn_norm_w=jnp.ones((1, dim_head), jnp.float32),    # nn.RMSNorm default init
        attn_norm_w=jnp.ones((1, dim_head), jnp.float32),
        w_out=jax.random.normal(k3, (di, D), jnp.float32) / jnp.sqrt(di),
    )

    out = jax.block_until_ready(min_gru_attn_hybrid(x, params, heads=heads, dim_head=dim_head))
    ref = jax.block_until_ready(reference(x, params, heads=heads, dim_head=dim_head))

    assert out.shape == (B, N, D)
    # Kernel uses bf16 MXU passes; compare against the f32 reference with
    # tolerances sized for bf16 matmul error.
    max_err = float(jnp.max(jnp.abs(out - ref)))
    rel_rms = float(jnp.sqrt(jnp.mean((out - ref) ** 2) / jnp.mean(ref ** 2)))
    assert rel_rms < 4e-2, f"relative RMS error vs reference: {rel_rms}"
    assert max_err < 0.25, f"max abs error vs reference: {max_err}"
    print("KERNEL_OK")
</pallas_src>

<mosaic_0001>
module attributes {stable_mosaic.version = 11 : i64} {
  func.func @_hybrid_kernel(%arg0: i32, %arg1: memref<1x64x32xf32, #tpu.memory_space<vmem>>, %arg2: memref<32x192xbf16, #tpu.memory_space<vmem>>, %arg3: memref<32x128xbf16, #tpu.memory_space<vmem>>, %arg4: memref<1x16xf32, #tpu.memory_space<vmem>>, %arg5: memref<1x16xf32, #tpu.memory_space<vmem>>, %arg6: memref<4x16x32xbf16, #tpu.memory_space<vmem>>, %arg7: memref<1x64x32xf32, #tpu.memory_space<vmem>>, %arg8: memref<64x64xf32, #tpu.memory_space<vmem>>, %arg9: memref<64x64xf32, #tpu.memory_space<vmem>>, %arg10: memref<64x64xf32, #tpu.memory_space<vmem>>, %arg11: memref<1x64xf32, #tpu.memory_space<vmem>>, %arg12: memref<1x64xf32, #tpu.memory_space<vmem>>) attributes {dimension_semantics = [#tpu.dimension_semantics<parallel>], iteration_bounds = array<i64: 2>, scalar_prefetch = 0 : i64, scratch_operands = 5 : i64, tpu.core_type = #tpu.core_type<tc>, window_params = [{transform_indices = @transform_0, window_bounds = array<i64: 1, 64, 32>}, {pipeline_mode = #tpu.pipeline_mode<synchronous>, transform_indices = @transform_1, window_bounds = array<i64: 32, 192>}, {pipeline_mode = #tpu.pipeline_mode<synchronous>, transform_indices = @transform_2, window_bounds = array<i64: 32, 128>}, {pipeline_mode = #tpu.pipeline_mode<synchronous>, transform_indices = @transform_3, window_bounds = array<i64: 1, 16>}, {pipeline_mode = #tpu.pipeline_mode<synchronous>, transform_indices = @transform_4, window_bounds = array<i64: 1, 16>}, {pipeline_mode = #tpu.pipeline_mode<synchronous>, transform_indices = @transform_5, window_bounds = array<i64: 4, 16, 32>}, {transform_indices = @transform_6, window_bounds = array<i64: 1, 64, 32>}]} {
    %c0 = arith.constant 0 : index
    %c0_0 = arith.constant 0 : index
    %c0_1 = arith.constant 0 : index
    %0 = vector.load %arg1[%c0, %c0_0, %c0_1] : memref<1x64x32xf32, #tpu.memory_space<vmem>>, vector<1x64x32xf32>
    %1 = vector.shape_cast %0 : vector<1x64x32xf32> to vector<64x32xf32>
    %2 = arith.truncf %1 : vector<64x32xf32> to vector<64x32xbf16>
    %c0_2 = arith.constant 0 : index
    %c0_3 = arith.constant 0 : index
    %3 = vector.load %arg2[%c0_2, %c0_3] : memref<32x192xbf16, #tpu.memory_space<vmem>>, vector<32x192xbf16>
    %cst = arith.constant dense<0.000000e+00> : vector<64x192xf32>
    %4 = tpu.matmul %2, %3, %cst {dimension_numbers = #tpu.dot_dimension_numbers<[1], [0], [0], [1], [0, 0, 1, 1], [], []>} : vector<64x32xbf16>, vector<32x192xbf16>, vector<64x192xf32> -> vector<64x192xf32>
    %c0_4 = arith.constant 0 : index
    %c0_5 = arith.constant 0 : index
    %5 = vector.load %arg3[%c0_4, %c0_5] : memref<32x128xbf16, #tpu.memory_space<vmem>>, vector<32x128xbf16>
    %cst_6 = arith.constant dense<0.000000e+00> : vector<64x128xf32>
    %6 = tpu.matmul %2, %5, %cst_6 {dimension_numbers = #tpu.dot_dimension_numbers<[1], [0], [0], [1], [0, 0, 1, 1], [], []>} : vector<64x32xbf16>, vector<32x128xbf16>, vector<64x128xf32> -> vector<64x128xf32>
    %7 = vector.extract_strided_slice %6 {offsets = [0, 0], sizes = [64, 64], strides = [1, 1]} : vector<64x128xf32> to vector<64x64xf32>
    %8 = vector.extract_strided_slice %6 {offsets = [0, 64], sizes = [64, 64], strides = [1, 1]} : vector<64x128xf32> to vector<64x64xf32>
    %cst_7 = arith.constant 0.000000e+00 : f32
    %9 = vector.broadcast %cst_7 : f32 to vector<64x64xf32>
    %10 = arith.maximumf %8, %9 : vector<64x64xf32>
    %11 = math.absf %8 : vector<64x64xf32>
    %cst_8 = arith.constant 0.000000e+00 : f32
    %12 = vector.broadcast %cst_8 : f32 to vector<64x64xf32>
    %13 = arith.subf %12, %11 : vector<64x64xf32>
    %14 = math.exp %13 : vector<64x64xf32>
    %15 = math.log1p %14 : vector<64x64xf32>
    %16 = arith.addf %10, %15 : vector<64x64xf32>
    %cst_9 = arith.constant 0.000000e+00 : f32
    %17 = vector.broadcast %cst_9 : f32 to vector<64x64xf32>
    %18 = arith.subf %17, %16 : vector<64x64xf32>
    %cst_10 = arith.constant 0.000000e+00 : f32
    %19 = vector.broadcast %cst_10 : f32 to vector<64x64xf32>
    %20 = arith.cmpf oge, %7, %19 : vector<64x64xf32>
    %cst_11 = arith.constant 0.000000e+00 : f32
    %21 = vector.broadcast %cst_11 : f32 to vector<64x64xf32>
    %22 = arith.maximumf %7, %21 : vector<64x64xf32>
    %cst_12 = arith.constant 5.000000e-01 : f32
    %23 = vector.broadcast %cst_12 : f32 to vector<64x64xf32>
    %24 = arith.addf %22, %23 : vector<64x64xf32>
    %25 = math.log %24 : vector<64x64xf32>
    %cst_13 = arith.constant 0.000000e+00 : f32
    %26 = vector.broadcast %cst_13 : f32 to vector<64x64xf32>
    %27 = arith.subf %26, %7 : vector<64x64xf32>
    %cst_14 = arith.constant 0.000000e+00 : f32
    %28 = vector.broadcast %cst_14 : f32 to vector<64x64xf32>
    %29 = arith.maximumf %27, %28 : vector<64x64xf32>
    %30 = math.absf %27 : vector<64x64xf32>
    %cst_15 = arith.constant 0.000000e+00 : f32
    %31 = vector.broadcast %cst_15 : f32 to vector<64x64xf32>
    %32 = arith.subf %31, %30 : vector<64x64xf32>
    %33 = math.exp %32 : vector<64x64xf32>
    %34 = math.log1p %33 : vector<64x64xf32>
    %35 = arith.addf %29, %34 : vector<64x64xf32>
    %cst_16 = arith.constant 0.000000e+00 : f32
    %36 = vector.broadcast %cst_16 : f32 to vector<64x64xf32>
    %37 = arith.subf %36, %35 : vector<64x64xf32>
    %38 = arith.select %20, %25, %37 : vector<64x64xi1>, vector<64x64xf32>
    %39 = arith.addf %8, %18 : vector<64x64xf32>
    %40 = arith.addf %39, %38 : vector<64x64xf32>
    %c0_17 = arith.constant 0 : index
    %c0_18 = arith.constant 0 : index
    %41 = vector.load %arg8[%c0_17, %c0_18] : memref<64x64xf32, #tpu.memory_space<vmem>>, vector<64x64xf32>
    tpu.vector_store %arg8[%c0_17, %c0_18], %18 {strides = array<i32>} : memref<64x64xf32, #tpu.memory_space<vmem>>, vector<64x64xf32>,
    %c0_19 = arith.constant 0 : index
    %c0_20 = arith.constant 0 : index
    %42 = vector.load %arg9[%c0_19, %c0_20] : memref<64x64xf32, #tpu.memory_space<vmem>>, vector<64x64xf32>
    tpu.vector_store %arg9[%c0_19, %c0_20], %40 {strides = array<i32>} : memref<64x64xf32, #tpu.memory_space<vmem>>, vector<64x64xf32>,
    %cst_21 = arith.constant 0.000000e+00 : f32
    %43 = vector.broadcast %cst_21 : f32 to vector<1x64xf32>
    %c0_22 = arith.constant 0 : index
    %c0_23 = arith.constant 0 : index
    %44 = vector.load %arg11[%c0_22, %c0_23] : memref<1x64xf32, #tpu.memory_space<vmem>>, vector<1x64xf32>
    tpu.vector_store %arg11[%c0_22, %c0_23], %43 {strides = array<i32>} : memref<1x64xf32, #tpu.memory_space<vmem>>, vector<1x64xf32>,
    %cst_24 = arith.constant -1.000000e+30 : f32
    %45 = vector.broadcast %cst_24 : f32 to vector<1x64xf32>
    %c0_25 = arith.constant 0 : index
    %c0_26 = arith.constant 0 : index
    %46 = vector.load %arg12[%c0_25, %c0_26] : memref<1x64xf32, #tpu.memory_space<vmem>>, vector<1x64xf32>
    tpu.vector_store %arg12[%c0_25, %c0_26], %45 {strides = array<i32>} : memref<1x64xf32, #tpu.memory_space<vmem>>, vector<1x64xf32>,
    %47 = tpu.iota {dimensions = array<i32: 0>} : vector<16x16xi32>
    %48 = tpu.iota {dimensions = array<i32: 1>} : vector<16x16xi32>
    %49 = arith.cmpi sge, %47, %48 : vector<16x16xi32>
    %cst_27 = arith.constant 1.000000e+00 : f32
    %cst_28 = arith.constant 0.000000e+00 : f32
    %50 = vector.broadcast %cst_27 : f32 to vector<16x16xf32>
    %51 = vector.broadcast %cst_28 : f32 to vector<16x16xf32>
    %52 = arith.select %49, %50, %51 : vector<16x16xi1>, vector<16x16xf32>
    %c0_i32 = arith.constant 0 : i32
    %c4_i32 = arith.constant 4 : i32
    %53 = arith.addi %c0_i32, %c4_i32 : i32
    %c1_i32 = arith.constant 1 : i32
    scf.for %arg13 = %c0_i32 to %53 step %c1_i32  : i32 {
      %c1_i32_66 = arith.constant 1 : i32
      %180 = arith.muli %arg13, %c1_i32_66 : i32
      %c0_i32_67 = arith.constant 0 : i32
      %181 = arith.addi %c0_i32_67, %180 : i32
      %c16_i32 = arith.constant 16 : i32
      %182 = arith.muli %181, %c16_i32 : i32
      %183 = tpu.assume_multiple %182, 16 : i32
      %184 = arith.index_cast %183 : i32 to index
      %c0_68 = arith.constant 0 : index
      %185 = vector.load %arg8[%184, %c0_68] : memref<64x64xf32, #tpu.memory_space<vmem>>, vector<16x64xf32>
      %186 = arith.index_cast %183 : i32 to index
      %c0_69 = arith.constant 0 : index
      %187 = vector.load %arg9[%186, %c0_69] : memref<64x64xf32, #tpu.memory_space<vmem>>, vector<16x64xf32>
      %cst_70 = arith.constant dense<0.000000e+00> : vector<16x64xf32>
      %188 = tpu.matmul %52, %185, %cst_70 {dimension_numbers = #tpu.dot_dimension_numbers<[1], [0], [0], [1], [0, 0, 1, 1], [], []>, precision = #tpu.contract_precision<fp32>} : vector<16x16xf32>, vector<16x64xf32>, vector<16x64xf32> -> vector<16x64xf32>
      %c0_71 = arith.constant 0 : index
      %c0_72 = arith.constant 0 : index
      %189 = vector.load %arg11[%c0_71, %c0_72] : memref<1x64xf32, #tpu.memory_space<vmem>>, vector<1x64xf32>
      %190 = vector.broadcast %189 : vector<1x64xf32> to vector<16x64xf32>
      %191 = arith.addf %190, %188 : vector<16x64xf32>
      %192 = arith.subf %187, %191 : vector<16x64xf32>
      %cst_73 = arith.constant dense<0xFF800000> : vector<64xf32>
      %193 = vector.multi_reduction <maximumf>, %192, %cst_73 [0] : vector<16x64xf32> to vector<64xf32>
      %194 = vector.shape_cast %193 : vector<64xf32> to vector<1x64xf32>
      %c0_74 = arith.constant 0 : index
      %c0_75 = arith.constant 0 : index
      %195 = vector.load %arg12[%c0_74, %c0_75] : memref<1x64xf32, #tpu.memory_space<vmem>>, vector<1x64xf32>
      %196 = arith.maximumf %194, %195 : vector<1x64xf32>
      %197 = vector.broadcast %196 : vector<1x64xf32> to vector<16x64xf32>
      %198 = arith.subf %192, %197 : vector<16x64xf32>
      %199 = math.exp %198 : vector<16x64xf32>
      %cst_76 = arith.constant dense<0.000000e+00> : vector<16x64xf32>
      %200 = tpu.matmul %52, %199, %cst_76 {dimension_numbers = #tpu.dot_dimension_numbers<[1], [0], [0], [1], [0, 0, 1, 1], [], []>, precision = #tpu.contract_precision<fp32>} : vector<16x16xf32>, vector<16x64xf32>, vector<16x64xf32> -> vector<16x64xf32>
      %c0_77 = arith.constant 0 : index
      %c0_78 = arith.constant 0 : index
      %201 = vector.load %arg12[%c0_77, %c0_78] : memref<1x64xf32, #tpu.memory_space<vmem>>, vector<1x64xf32>
      %202 = arith.subf %201, %196 : vector<1x64xf32>
      %203 = math.exp %202 : vector<1x64xf32>
      %204 = vector.broadcast %203 : vector<1x64xf32> to vector<16x64xf32>
      %205 = arith.addf %200, %204 : vector<16x64xf32>
      %206 = math.log %205 : vector<16x64xf32>
      %207 = vector.broadcast %196 : vector<1x64xf32> to vector<16x64xf32>
      %208 = arith.addf %207, %206 : vector<16x64xf32>
      %209 = arith.addf %191, %208 : vector<16x64xf32>
      %210 = math.exp %209 : vector<16x64xf32>
      %211 = arith.index_cast %183 : i32 to index
      %c0_79 = arith.constant 0 : index
      %212 = vector.load %arg10[%211, %c0_79] : memref<64x64xf32, #tpu.memory_space<vmem>>, vector<16x64xf32>
      tpu.vector_store %arg10[%211, %c0_79], %210 {strides = array<i32>} : memref<64x64xf32, #tpu.memory_space<vmem>>, vector<16x64xf32>,
      %213 = vector.extract_strided_slice %191 {offsets = [15, 0], sizes = [1, 64], strides = [1, 1]} : vector<16x64xf32> to vector<1x64xf32>
      %c0_80 = arith.constant 0 : index
      %c0_81 = arith.constant 0 : index
      %214 = vector.load %arg11[%c0_80, %c0_81] : memref<1x64xf32, #tpu.memory_space<vmem>>, vector<1x64xf32>
      tpu.vector_store %arg11[%c0_80, %c0_81], %213 {strides = array<i32>} : memref<1x64xf32, #tpu.memory_space<vmem>>, vector<1x64xf32>,
      %215 = vector.extract_strided_slice %208 {offsets = [15, 0], sizes = [1, 64], strides = [1, 1]} : vector<16x64xf32> to vector<1x64xf32>
      %c0_82 = arith.constant 0 : index
      %c0_83 = arith.constant 0 : index
      %216 = vector.load %arg12[%c0_82, %c0_83] : memref<1x64xf32, #tpu.memory_space<vmem>>, vector<1x64xf32>
      tpu.vector_store %arg12[%c0_82, %c0_83], %215 {strides = array<i32>} : memref<1x64xf32, #tpu.memory_space<vmem>>, vector<1x64xf32>,
    }
    %c4_i32_29 = arith.constant 4 : i32
    %54 = vector.extract_strided_slice %4 {offsets = [0, 0], sizes = [64, 64], strides = [1, 1]} : vector<64x192xf32> to vector<64x64xf32>
    %cst_30 = arith.constant 2.500000e-01 : f32
    %55 = vector.broadcast %cst_30 : f32 to vector<64x64xf32>
    %56 = arith.mulf %54, %55 : vector<64x64xf32>
    %57 = vector.extract_strided_slice %56 {offsets = [0, 0], sizes = [64, 16], strides = [1, 1]} : vector<64x64xf32> to vector<64x16xf32>
    %58 = vector.extract_strided_slice %56 {offsets = [0, 16], sizes = [64, 16], strides = [1, 1]} : vector<64x64xf32> to vector<64x16xf32>
    %59 = vector.extract_strided_slice %56 {offsets = [0, 32], sizes = [64, 16], strides = [1, 1]} : vector<64x64xf32> to vector<64x16xf32>
    %60 = vector.extract_strided_slice %56 {offsets = [0, 48], sizes = [64, 16], strides = [1, 1]} : vector<64x64xf32> to vector<64x16xf32>
    %61 = vector.shape_cast %57 : vector<64x16xf32> to vector<1x64x16xf32>
    %62 = vector.shape_cast %58 : vector<64x16xf32> to vector<1x64x16xf32>
    %63 = vector.shape_cast %59 : vector<64x16xf32> to vector<1x64x16xf32>
    %64 = vector.shape_cast %60 : vector<64x16xf32> to vector<1x64x16xf32>
    %65 = tpu.concatenate %61, %62, %63, %64 in 0 : vector<1x64x16xf32>, vector<1x64x16xf32>, vector<1x64x16xf32>, vector<1x64x16xf32> -> vector<4x64x16xf32>
    %66 = arith.truncf %65 : vector<4x64x16xf32> to vector<4x64x16xbf16>
    %67 = vector.extract_strided_slice %4 {offsets = [0, 64], sizes = [64, 64], strides = [1, 1]} : vector<64x192xf32> to vector<64x64xf32>
    %68 = vector.extract_strided_slice %67 {offsets = [0, 0], sizes = [64, 16], strides = [1, 1]} : vector<64x64xf32> to vector<64x16xf32>
    %69 = vector.extract_strided_slice %67 {offsets = [0, 16], sizes = [64, 16], strides = [1, 1]} : vector<64x64xf32> to vector<64x16xf32>
    %70 = vector.extract_strided_slice %67 {offsets = [0, 32], sizes = [64, 16], strides = [1, 1]} : vector<64x64xf32> to vector<64x16xf32>
    %71 = vector.extract_strided_slice %67 {offsets = [0, 48], sizes = [64, 16], strides = [1, 1]} : vector<64x64xf32> to vector<64x16xf32>
    %72 = vector.shape_cast %68 : vector<64x16xf32> to vector<1x64x16xf32>
    %73 = vector.shape_cast %69 : vector<64x16xf32> to vector<1x64x16xf32>
    %74 = vector.shape_cast %70 : vector<64x16xf32> to vector<1x64x16xf32>
    %75 = vector.shape_cast %71 : vector<64x16xf32> to vector<1x64x16xf32>
    %76 = tpu.concatenate %72, %73, %74, %75 in 0 : vector<1x64x16xf32>, vector<1x64x16xf32>, vector<1x64x16xf32>, vector<1x64x16xf32> -> vector<4x64x16xf32>
    %77 = arith.truncf %76 : vector<4x64x16xf32> to vector<4x64x16xbf16>
    %78 = vector.extract_strided_slice %4 {offsets = [0, 128], sizes = [64, 64], strides = [1, 1]} : vector<64x192xf32> to vector<64x64xf32>
    %79 = vector.extract_strided_slice %78 {offsets = [0, 0], sizes = [64, 16], strides = [1, 1]} : vector<64x64xf32> to vector<64x16xf32>
    %80 = vector.extract_strided_slice %78 {offsets = [0, 16], sizes = [64, 16], strides = [1, 1]} : vector<64x64xf32> to vector<64x16xf32>
    %81 = vector.extract_strided_slice %78 {offsets = [0, 32], sizes = [64, 16], strides = [1, 1]} : vector<64x64xf32> to vector<64x16xf32>
    %82 = vector.extract_strided_slice %78 {offsets = [0, 48], sizes = [64, 16], strides = [1, 1]} : vector<64x64xf32> to vector<64x16xf32>
    %83 = vector.shape_cast %79 : vector<64x16xf32> to vector<1x64x16xf32>
    %84 = vector.shape_cast %80 : vector<64x16xf32> to vector<1x64x16xf32>
    %85 = vector.shape_cast %81 : vector<64x16xf32> to vector<1x64x16xf32>
    %86 = vector.shape_cast %82 : vector<64x16xf32> to vector<1x64x16xf32>
    %87 = tpu.concatenate %83, %84, %85, %86 in 0 : vector<1x64x16xf32>, vector<1x64x16xf32>, vector<1x64x16xf32>, vector<1x64x16xf32> -> vector<4x64x16xf32>
    %88 = arith.truncf %87 : vector<4x64x16xf32> to vector<4x64x16xbf16>
    %c0_31 = arith.constant 0 : index
    %c0_32 = arith.constant 0 : index
    %89 = vector.load %arg10[%c0_31, %c0_32] : memref<64x64xf32, #tpu.memory_space<vmem>>, vector<64x64xf32>
    %90 = vector.extract_strided_slice %89 {offsets = [0, 0], sizes = [64, 16], strides = [1, 1]} : vector<64x64xf32> to vector<64x16xf32>
    %91 = vector.extract_strided_slice %89 {offsets = [0, 16], sizes = [64, 16], strides = [1, 1]} : vector<64x64xf32> to vector<64x16xf32>
    %92 = vector.extract_strided_slice %89 {offsets = [0, 32], sizes = [64, 16], strides = [1, 1]} : vector<64x64xf32> to vector<64x16xf32>
    %93 = vector.extract_strided_slice %89 {offsets = [0, 48], sizes = [64, 16], strides = [1, 1]} : vector<64x64xf32> to vector<64x16xf32>
    %94 = vector.shape_cast %90 : vector<64x16xf32> to vector<1x64x16xf32>
    %95 = vector.shape_cast %91 : vector<64x16xf32> to vector<1x64x16xf32>
    %96 = vector.shape_cast %92 : vector<64x16xf32> to vector<1x64x16xf32>
    %97 = vector.shape_cast %93 : vector<64x16xf32> to vector<1x64x16xf32>
    %98 = tpu.concatenate %94, %95, %96, %97 in 0 : vector<1x64x16xf32>, vector<1x64x16xf32>, vector<1x64x16xf32>, vector<1x64x16xf32> -> vector<4x64x16xf32>
    "tpu.trace_start"() <{level = 10 : i32, message = "hnd,hmd->hnm"}> : () -> ()
    %cst_33 = arith.constant dense<0.000000e+00> : vector<4x64x64xf32>
    %99 = tpu.matmul %66, %77, %cst_33 {dimension_numbers = #tpu.dot_dimension_numbers<[2], [2], [1], [1], [0, 0, 0, 1, 1, 1], [0], [0]>} : vector<4x64x16xbf16>, vector<4x64x16xbf16>, vector<4x64x64xf32> -> vector<4x64x64xf32>
    "tpu.trace_stop"() : () -> ()
    %100 = tpu.iota {dimensions = array<i32: 0>} : vector<64x64xi32>
    %101 = tpu.iota {dimensions = array<i32: 1>} : vector<64x64xi32>
    %102 = arith.cmpi sge, %100, %101 : vector<64x64xi32>
    %103 = vector.shape_cast %102 : vector<64x64xi1> to vector<1x64x64xi1>
    %cst_34 = arith.constant -1.000000e+30 : f32
    %104 = vector.shape_cast %103 : vector<1x64x64xi1> to vector<1x64x64xi1>
    %105 = vector.broadcast %104 : vector<1x64x64xi1> to vector<4x64x64xi1>
    %106 = vector.broadcast %cst_34 : f32 to vector<4x64x64xf32>
    %107 = arith.select %105, %99, %106 : vector<4x64x64xi1>, vector<4x64x64xf32>
    %cst_35 = arith.constant dense<0xFF800000> : vector<4x64xf32>
    %108 = vector.multi_reduction <maximumf>, %107, %cst_35 [2] : vector<4x64x64xf32> to vector<4x64xf32>
    %109 = vector.shape_cast %108 : vector<4x64xf32> to vector<4x64x1xf32>
    %110 = vector.broadcast %109 : vector<4x64x1xf32> to vector<4x64x64xf32>
    %111 = arith.subf %107, %110 : vector<4x64x64xf32>
    %112 = math.exp %111 : vector<4x64x64xf32>
    %cst_36 = arith.constant dense<0.000000e+00> : vector<4x64xf32>
    %113 = vector.multi_reduction <add>, %112, %cst_36 [2] : vector<4x64x64xf32> to vector<4x64xf32>
    %114 = vector.shape_cast %113 : vector<4x64xf32> to vector<4x64x1xf32>
    %115 = tpu.reciprocal %114 {approx = true} : vector<4x64x1xf32> -> vector<4x64x1xf32>
    %116 = vector.broadcast %115 : vector<4x64x1xf32> to vector<4x64x64xf32>
    %117 = arith.mulf %112, %116 : vector<4x64x64xf32>
    %118 = arith.truncf %117 : vector<4x64x64xf32> to vector<4x64x64xbf16>
    "tpu.trace_start"() <{level = 10 : i32, message = "hnm,hmd->hnd"}> : () -> ()
    %cst_37 = arith.constant dense<0.000000e+00> : vector<4x64x16xf32>
    %119 = tpu.matmul %118, %88, %cst_37 {dimension_numbers = #tpu.dot_dimension_numbers<[2], [1], [1], [2], [0, 0, 0, 1, 1, 2], [0], [0]>} : vector<4x64x64xbf16>, vector<4x64x16xbf16>, vector<4x64x16xf32> -> vector<4x64x16xf32>
    "tpu.trace_stop"() : () -> ()
    %c0_38 = arith.constant 0 : index
    %c0_39 = arith.constant 0 : index
    %120 = vector.load %arg4[%c0_38, %c0_39] : memref<1x16xf32, #tpu.memory_space<vmem>>, vector<1x16xf32>
    %121 = vector.shape_cast %120 : vector<1x16xf32> to vector<1x1x16xf32>
    %c0_40 = arith.constant 0 : index
    %c0_41 = arith.constant 0 : index
    %122 = vector.load %arg5[%c0_40, %c0_41] : memref<1x16xf32, #tpu.memory_space<vmem>>, vector<1x16xf32>
    %123 = vector.shape_cast %122 : vector<1x16xf32> to vector<1x1x16xf32>
    %124 = arith.mulf %98, %98 : vector<4x64x16xf32>
    %cst_42 = arith.constant dense<0.000000e+00> : vector<4x64xf32>
    %125 = vector.multi_reduction <add>, %124, %cst_42 [2] : vector<4x64x16xf32> to vector<4x64xf32>
    %126 = vector.shape_cast %125 : vector<4x64xf32> to vector<4x64x1xf32>
    %cst_43 = arith.constant 1.600000e+01 : f32
    %127 = vector.broadcast %cst_43 : f32 to vector<4x64x1xf32>
    %128 = arith.divf %126, %127 : vector<4x64x1xf32>
    %cst_44 = arith.constant 1.1920929E-7 : f32
    %129 = vector.broadcast %cst_44 : f32 to vector<4x64x1xf32>
    %130 = arith.addf %128, %129 : vector<4x64x1xf32>
    %131 = math.rsqrt %130 : vector<4x64x1xf32>
    %132 = vector.broadcast %131 : vector<4x64x1xf32> to vector<4x64x16xf32>
    %133 = arith.mulf %98, %132 : vector<4x64x16xf32>
    %134 = vector.broadcast %121 : vector<1x1x16xf32> to vector<4x64x16xf32>
    %135 = arith.mulf %133, %134 : vector<4x64x16xf32>
    %136 = arith.mulf %119, %119 : vector<4x64x16xf32>
    %cst_45 = arith.constant dense<0.000000e+00> : vector<4x64xf32>
    %137 = vector.multi_reduction <add>, %136, %cst_45 [2] : vector<4x64x16xf32> to vector<4x64xf32>
    %138 = vector.shape_cast %137 : vector<4x64xf32> to vector<4x64x1xf32>
    %cst_46 = arith.constant 1.600000e+01 : f32
    %139 = vector.broadcast %cst_46 : f32 to vector<4x64x1xf32>
    %140 = arith.divf %138, %139 : vector<4x64x1xf32>
    %cst_47 = arith.constant 1.1920929E-7 : f32
    %141 = vector.broadcast %cst_47 : f32 to vector<4x64x1xf32>
    %142 = arith.addf %140, %141 : vector<4x64x1xf32>
    %143 = math.rsqrt %142 : vector<4x64x1xf32>
    %144 = vector.broadcast %143 : vector<4x64x1xf32> to vector<4x64x16xf32>
    %145 = arith.mulf %119, %144 : vector<4x64x16xf32>
    %146 = vector.broadcast %123 : vector<1x1x16xf32> to vector<4x64x16xf32>
    %147 = arith.mulf %145, %146 : vector<4x64x16xf32>
    %148 = arith.addf %135, %147 : vector<4x64x16xf32>
    %cst_48 = arith.constant 5.000000e-01 : f32
    %149 = vector.broadcast %cst_48 : f32 to vector<4x64x16xf32>
    %150 = arith.mulf %149, %148 : vector<4x64x16xf32>
    %151 = arith.truncf %150 : vector<4x64x16xf32> to vector<4x64x16xbf16>
    %cst_49 = arith.constant 0.000000e+00 : f32
    %152 = vector.broadcast %cst_49 : f32 to vector<64x32xf32>
    %153 = vector.extract_strided_slice %151 {offsets = [0, 0, 0], sizes = [1, 64, 16], strides = [1, 1, 1]} : vector<4x64x16xbf16> to vector<1x64x16xbf16>
    %154 = vector.shape_cast %153 : vector<1x64x16xbf16> to vector<64x16xbf16>
    %c0_50 = arith.constant 0 : index
    %c0_51 = arith.constant 0 : index
    %c0_52 = arith.constant 0 : index
    %155 = vector.load %arg6[%c0_50, %c0_51, %c0_52] : memref<4x16x32xbf16, #tpu.memory_space<vmem>>, vector<1x16x32xbf16>
    %156 = vector.shape_cast %155 : vector<1x16x32xbf16> to vector<16x32xbf16>
    %cst_53 = arith.constant dense<0.000000e+00> : vector<64x32xf32>
    %157 = tpu.matmul %154, %156, %cst_53 {dimension_numbers = #tpu.dot_dimension_numbers<[1], [0], [0], [1], [0, 0, 1, 1], [], []>} : vector<64x16xbf16>, vector<16x32xbf16>, vector<64x32xf32> -> vector<64x32xf32>
    %158 = arith.addf %152, %157 : vector<64x32xf32>
    %159 = vector.extract_strided_slice %151 {offsets = [1, 0, 0], sizes = [1, 64, 16], strides = [1, 1, 1]} : vector<4x64x16xbf16> to vector<1x64x16xbf16>
    %160 = vector.shape_cast %159 : vector<1x64x16xbf16> to vector<64x16xbf16>
    %c1 = arith.constant 1 : index
    %c0_54 = arith.constant 0 : index
    %c0_55 = arith.constant 0 : index
    %161 = vector.load %arg6[%c1, %c0_54, %c0_55] : memref<4x16x32xbf16, #tpu.memory_space<vmem>>, vector<1x16x32xbf16>
    %162 = vector.shape_cast %161 : vector<1x16x32xbf16> to vector<16x32xbf16>
    %cst_56 = arith.constant dense<0.000000e+00> : vector<64x32xf32>
    %163 = tpu.matmul %160, %162, %cst_56 {dimension_numbers = #tpu.dot_dimension_numbers<[1], [0], [0], [1], [0, 0, 1, 1], [], []>} : vector<64x16xbf16>, vector<16x32xbf16>, vector<64x32xf32> -> vector<64x32xf32>
    %164 = arith.addf %158, %163 : vector<64x32xf32>
    %165 = vector.extract_strided_slice %151 {offsets = [2, 0, 0], sizes = [1, 64, 16], strides = [1, 1, 1]} : vector<4x64x16xbf16> to vector<1x64x16xbf16>
    %166 = vector.shape_cast %165 : vector<1x64x16xbf16> to vector<64x16xbf16>
    %c2 = arith.constant 2 : index
    %c0_57 = arith.constant 0 : index
    %c0_58 = arith.constant 0 : index
    %167 = vector.load %arg6[%c2, %c0_57, %c0_58] : memref<4x16x32xbf16, #tpu.memory_space<vmem>>, vector<1x16x32xbf16>
    %168 = vector.shape_cast %167 : vector<1x16x32xbf16> to vector<16x32xbf16>
    %cst_59 = arith.constant dense<0.000000e+00> : vector<64x32xf32>
    %169 = tpu.matmul %166, %168, %cst_59 {dimension_numbers = #tpu.dot_dimension_numbers<[1], [0], [0], [1], [0, 0, 1, 1], [], []>} : vector<64x16xbf16>, vector<16x32xbf16>, vector<64x32xf32> -> vector<64x32xf32>
    %170 = arith.addf %164, %169 : vector<64x32xf32>
    %171 = vector.extract_strided_slice %151 {offsets = [3, 0, 0], sizes = [1, 64, 16], strides = [1, 1, 1]} : vector<4x64x16xbf16> to vector<1x64x16xbf16>
    %172 = vector.shape_cast %171 : vector<1x64x16xbf16> to vector<64x16xbf16>
    %c3 = arith.constant 3 : index
    %c0_60 = arith.constant 0 : index
    %c0_61 = arith.constant 0 : index
    %173 = vector.load %arg6[%c3, %c0_60, %c0_61] : memref<4x16x32xbf16, #tpu.memory_space<vmem>>, vector<1x16x32xbf16>
    %174 = vector.shape_cast %173 : vector<1x16x32xbf16> to vector<16x32xbf16>
    %cst_62 = arith.constant dense<0.000000e+00> : vector<64x32xf32>
    %175 = tpu.matmul %172, %174, %cst_62 {dimension_numbers = #tpu.dot_dimension_numbers<[1], [0], [0], [1], [0, 0, 1, 1], [], []>} : vector<64x16xbf16>, vector<16x32xbf16>, vector<64x32xf32> -> vector<64x32xf32>
    %176 = arith.addf %170, %175 : vector<64x32xf32>
    %c0_63 = arith.constant 0 : index
    %c0_64 = arith.constant 0 : index
    %c0_65 = arith.constant 0 : index
    %177 = vector.load %arg7[%c0_63, %c0_64, %c0_65] : memref<1x64x32xf32, #tpu.memory_space<vmem>>, vector<1x64x32xf32>
    %178 = vector.shape_cast %177 : vector<1x64x32xf32> to vector<64x32xf32>
    %179 = vector.shape_cast %176 : vector<64x32xf32> to vector<1x64x32xf32>
    tpu.vector_store %arg7[%c0_63, %c0_64, %c0_65], %179 {strides = array<i32>} : memref<1x64x32xf32, #tpu.memory_space<vmem>>, vector<1x64x32xf32>,
    return
  }
  func.func @transform_0(%arg0: i32) -> (i32, i32, i32) {
    %c0_i32 = arith.constant 0 : i32
    %c0_i32_0 = arith.constant 0 : i32
    %c0_i32_1 = arith.constant 0 : i32
    return %arg0, %c0_i32, %c0_i32_0 : i32, i32, i32
  }
  func.func @transform_1(%arg0: i32) -> (i32, i32) {
    %c0_i32 = arith.constant 0 : i32
    %c0_i32_0 = arith.constant 0 : i32
    %c0_i32_1 = arith.constant 0 : i32
    return %c0_i32, %c0_i32_0 : i32, i32
  }
  func.func @transform_2(%arg0: i32) -> (i32, i32) {
    %c0_i32 = arith.constant 0 : i32
    %c0_i32_0 = arith.constant 0 : i32
    %c0_i32_1 = arith.constant 0 : i32
    return %c0_i32, %c0_i32_0 : i32, i32
  }
  func.func @transform_3(%arg0: i32) -> (i32, i32) {
    %c0_i32 = arith.constant 0 : i32
    %c0_i32_0 = arith.constant 0 : i32
    %c0_i32_1 = arith.constant 0 : i32
    return %c0_i32, %c0_i32_0 : i32, i32
  }
  func.func @transform_4(%arg0: i32) -> (i32, i32) {
    %c0_i32 = arith.constant 0 : i32
    %c0_i32_0 = arith.constant 0 : i32
    %c0_i32_1 = arith.constant 0 : i32
    return %c0_i32, %c0_i32_0 : i32, i32
  }
  func.func @transform_5(%arg0: i32) -> (i32, i32, i32) {
    %c0_i32 = arith.constant 0 : i32
    %c0_i32_0 = arith.constant 0 : i32
    %c0_i32_1 = arith.constant 0 : i32
    %c0_i32_2 = arith.constant 0 : i32
    return %c0_i32, %c0_i32_0, %c0_i32_1 : i32, i32, i32
  }
  func.func @transform_6(%arg0: i32) -> (i32, i32, i32) {
    %c0_i32 = arith.constant 0 : i32
    %c0_i32_0 = arith.constant 0 : i32
    %c0_i32_1 = arith.constant 0 : i32
    return %arg0, %c0_i32, %c0_i32_0 : i32, i32, i32
  }
}

</mosaic_0001>

<llo_original>
// kernel: tpu_custom_call.1
$region0: #{tpu_custom_call.1}
  #allocation0 [shape = 'u32[]', space=smem, size = 0x4, offset = 0x4, fixed_abs, tag = 'smem constant byte address 0x4 - core index']
  #allocation1 [shape = 'u32[72,128]{1,0:T(1,128)}', space=vmem, size = 0x9000, scoped, tag = 'internal scratch']
  #allocation2 [shape = 'f32[64,64]{1,0:T(8,128)}', space=vmem, size = 0x8000, scoped, tag = 'scratch operand']
  #allocation3 [shape = 'f32[64,64]{1,0:T(8,128)}', space=vmem, size = 0x8000, scoped, tag = 'scratch operand']
  #allocation4 [shape = 'f32[64,64]{1,0:T(8,128)}', space=vmem, size = 0x8000, scoped, tag = 'scratch operand']
  #allocation5 [shape = 'f32[1,64]{1,0:T(1,128)}', space=vmem, size = 0x200, scoped, tag = 'scratch operand']
  #allocation6 [shape = 'f32[1,64]{1,0:T(1,128)}', space=vmem, size = 0x200, scoped, tag = 'scratch operand']
  %s0 = inlined_call_operand.vmem [shape: f32[2,64,32], index: 0, kind: input, shape index: {}]
  %s1 = inlined_call_operand.vmem [shape: bf16[32,192], index: 1, kind: input, shape index: {}]
  %s2 = inlined_call_operand.vmem [shape: bf16[32,128], index: 2, kind: input, shape index: {}]
  %s3 = inlined_call_operand.vmem [shape: f32[1,16], index: 3, kind: input, shape index: {}]
  %s4 = inlined_call_operand.vmem [shape: f32[1,16], index: 4, kind: input, shape index: {}]
  %s5 = inlined_call_operand.vmem [shape: bf16[4,16,32], index: 5, kind: input, shape index: {}]
  %s6 = inlined_call_operand.vmem [shape: f32[2,64,32], index: 6, kind: output, shape index: {}]
  %s7 = sld [smem:[#allocation0]]
  $region64: #{tpu_custom_call.1} parent=0
    _
  %s9 = ssub.s32 1, %s7
  %s10 = scalar_select 0, %s9, %s7
  loop: start=0, step=1, limit=4
  $region2: #{tpu_custom_call.1} parent=0 // loop_pre_header
    _
  $region3: #{tpu_custom_call.1} parent=0 // loop_header
    %s12 = sphi 0, %s16
    %p13 = scmp.ge.s32.totalorder %s12, 4
    %s22 = sphi 0, %s24
    %s25 = sphi 0, %s22
    %s26 = sphi 0, %s25
    %s42 = sphi 0, %s26
    %s46 = sphi 0, %s46
    %s48 = sphi 0, %s46
    %s49 = sphi 0, %s48
    %s63 = sphi 0, %s49
    %s67 = sphi 0, %s67
    %s69 = sphi 0, %s67
    %s70 = sphi 0, %s69
    %s84 = sphi 0, %s70
    %s88 = sphi 0, %s88
    %s90 = sphi 0, %s88
    %s91 = sphi 0, %s90
    %s105 = sphi 0, %s91
    %s109 = sphi 0, %s109
    %s111 = sphi 0, %s109
    %s112 = sphi 0, %s111
    %s126 = sphi 0, %s112
    %s130 = sphi 0, %s130
    %s132 = sphi 0, %s130
    %s133 = sphi 0, %s132
    %s147 = sphi 0, %s133
    %s153 = sphi 0, %s155
    %s156 = sphi 0, %s153
    %s157 = sphi 0, %s156
    %s173 = sphi 0, %s157
  $region4: #{tpu_custom_call.1} parent=0 // loop_header_branch
    %15 = sbr.rel (%p13) target = $region8
  $region5: #{tpu_custom_call.1} parent=0 // loop_body
    %s17 = ssub.s32 %s12, 1
    %s18 = ssub.s32 %s12, 2
    %s19 = sadd.s32 %s12, 1
    %s20 = ssub.s32 %s12, %s19
    %p21 = scmp.eq.s32.totalorder %s20, 0
    %s23 = sadd.s32 %s22, 1
    %s24 = scalar_select %p21, %s22, %s23
    %p27 = pneg %p21
    %p28 = scmp.eq.s32.totalorder %s12, 1
    %p29 = por %p27, %p28
    %p30 = scmp.ne.s32.totalorder %s22, %s25
    %p31 = scmp.eq.s32.totalorder %s12, 0
    %p32 = por %p30, %p31
    %p33 = scmp.ne.s32.totalorder %s22, %s25
    %p34 = scmp.eq.s32.totalorder %s17, 1
    %p35 = por %p33, %p34
    %p36 = scmp.ne.s32.totalorder %s25, %s26
    %p37 = scmp.eq.s32.totalorder %s17, 0
    %p38 = por %p36, %p37
    %p39 = scmp.ne.s32.totalorder %s25, %s26
    %p40 = scmp.eq.s32.totalorder %s18, 1
    %p41 = por %p39, %p40
    %p43 = scmp.ne.s32.totalorder %s26, %s42
    %p44 = scmp.eq.s32.totalorder %s18, 0
    %p45 = por %p43, %p44
    %s47 = sadd.s32 %s46, 1
    %p50 = scmp.eq.s32.totalorder %s12, 1
    %p51 = scmp.ne.s32.totalorder %s46, %s48
    %p52 = scmp.eq.s32.totalorder %s12, 0
    %p53 = por %p51, %p52
    %p54 = scmp.ne.s32.totalorder %s46, %s48
    %p55 = scmp.eq.s32.totalorder %s17, 1
    %p56 = por %p54, %p55
    %p57 = scmp.ne.s32.totalorder %s48, %s49
    %p58 = scmp.eq.s32.totalorder %s17, 0
    %p59 = por %p57, %p58
    %p60 = scmp.ne.s32.totalorder %s48, %s49
    %p61 = scmp.eq.s32.totalorder %s18, 1
    %p62 = por %p60, %p61
    %p64 = scmp.ne.s32.totalorder %s49, %s63
    %p65 = scmp.eq.s32.totalorder %s18, 0
    %p66 = por %p64, %p65
    %s68 = sadd.s32 %s67, 1
    %p71 = scmp.eq.s32.totalorder %s12, 1
    %p72 = scmp.ne.s32.totalorder %s67, %s69
    %p73 = scmp.eq.s32.totalorder %s12, 0
    %p74 = por %p72, %p73
    %p75 = scmp.ne.s32.totalorder %s67, %s69
    %p76 = scmp.eq.s32.totalorder %s17, 1
    %p77 = por %p75, %p76
    %p78 = scmp.ne.s32.totalorder %s69, %s70
    %p79 = scmp.eq.s32.totalorder %s17, 0
    %p80 = por %p78, %p79
    %p81 = scmp.ne.s32.totalorder %s69, %s70
    %p82 = scmp.eq.s32.totalorder %s18, 1
    %p83 = por %p81, %p82
    %p85 = scmp.ne.s32.totalorder %s70, %s84
    %p86 = scmp.eq.s32.totalorder %s18, 0
    %p87 = por %p85, %p86
    %s89 = sadd.s32 %s88, 1
    %p92 = scmp.eq.s32.totalorder %s12, 1
    %p93 = scmp.ne.s32.totalorder %s88, %s90
    %p94 = scmp.eq.s32.totalorder %s12, 0
    %p95 = por %p93, %p94
    %p96 = scmp.ne.s32.totalorder %s88, %s90
    %p97 = scmp.eq.s32.totalorder %s17, 1
    %p98 = por %p96, %p97
    %p99 = scmp.ne.s32.totalorder %s90, %s91
    %p100 = scmp.eq.s32.totalorder %s17, 0
    %p101 = por %p99, %p100
    %p102 = scmp.ne.s32.totalorder %s90, %s91
    %p103 = scmp.eq.s32.totalorder %s18, 1
    %p104 = por %p102, %p103
    %p106 = scmp.ne.s32.totalorder %s91, %s105
    %p107 = scmp.eq.s32.totalorder %s18, 0
    %p108 = por %p106, %p107
    %s110 = sadd.s32 %s109, 1
    %p113 = scmp.eq.s32.totalorder %s12, 1
    %p114 = scmp.ne.s32.totalorder %s109, %s111
    %p115 = scmp.eq.s32.totalorder %s12, 0
    %p116 = por %p114, %p115
    %p117 = scmp.ne.s32.totalorder %s109, %s111
    %p118 = scmp.eq.s32.totalorder %s17, 1
    %p119 = por %p117, %p118
    %p120 = scmp.ne.s32.totalorder %s111, %s112
    %p121 = scmp.eq.s32.totalorder %s17, 0
    %p122 = por %p120, %p121
    %p123 = scmp.ne.s32.totalorder %s111, %s112
    %p124 = scmp.eq.s32.totalorder %s18, 1
    %p125 = por %p123, %p124
    %p127 = scmp.ne.s32.totalorder %s112, %s126
    %p128 = scmp.eq.s32.totalorder %s18, 0
    %p129 = por %p127, %p128
    %s131 = sadd.s32 %s130, 1
    %p134 = scmp.eq.s32.totalorder %s12, 1
    %p135 = scmp.ne.s32.totalorder %s130, %s132
    %p136 = scmp.eq.s32.totalorder %s12, 0
    %p137 = por %p135, %p136
    %p138 = scmp.ne.s32.totalorder %s130, %s132
    %p139 = scmp.eq.s32.totalorder %s17, 1
    %p140 = por %p138, %p139
    %p141 = scmp.ne.s32.totalorder %s132, %s133
    %p142 = scmp.eq.s32.totalorder %s17, 0
    %p143 = por %p141, %p142
    %p144 = scmp.ne.s32.totalorder %s132, %s133
    %p145 = scmp.eq.s32.totalorder %s18, 1
    %p146 = por %p144, %p145
    %p148 = scmp.ne.s32.totalorder %s133, %s147
    %p149 = scmp.eq.s32.totalorder %s18, 0
    %p150 = por %p148, %p149
    %s151 = ssub.s32 %s12, %s19
    %p152 = scmp.eq.s32.totalorder %s151, 0
    %s154 = sadd.s32 %s153, 1
    %s155 = scalar_select %p152, %s153, %s154
    %p158 = pneg %p152
    %p159 = scmp.eq.s32.totalorder %s12, 1
    %p160 = por %p158, %p159
    %p161 = scmp.ne.s32.totalorder %s153, %s156
    %p162 = scmp.eq.s32.totalorder %s12, 0
    %p163 = por %p161, %p162
    %p164 = scmp.ne.s32.totalorder %s153, %s156
    %p165 = scmp.eq.s32.totalorder %s17, 1
    %p166 = por %p164, %p165
    %p167 = scmp.ne.s32.totalorder %s156, %s157
    %p168 = scmp.eq.s32.totalorder %s17, 0
    %p169 = por %p167, %p168
    %p170 = scmp.ne.s32.totalorder %s156, %s157
    %p171 = scmp.eq.s32.totalorder %s18, 1
    %p172 = por %p170, %p171
    %p174 = scmp.ne.s32.totalorder %s157, %s173
    %p175 = scmp.eq.s32.totalorder %s18, 0
    %p176 = por %p174, %p175
    %p177 = scmp.le.s32.totalorder 1, %s12
    %p178 = scmp.lt.s32.totalorder %s12, 3
    %p179 = pnand %p177, %p178
    %p180 = pneg %p179
    // Predicated region
    $region9: #{tpu_custom_call.1} parent=5 // pred_check
      _
    $region10: #{tpu_custom_call.1} parent=5 // pred_check_branch
      %182 = sbr.rel (%p179) target = $region12
    $region11: #{tpu_custom_call.1} parent=5 // pred_region
      %s183 = ssub.s32 %s12, 1
      // Predicated region
      $region13: #{tpu_custom_call.1} parent=11 // pred_check
        %p184 = pneg %p59
      $region14: #{tpu_custom_call.1} parent=11 // pred_check_branch
        %186 = sbr.rel (%p184) target = $region16
      $region15: #{tpu_custom_call.1} parent=11 // pred_region
        _
      $region16: #{tpu_custom_call.1} parent=11 // pred_fallthru
        _
      // Predicated region
      $region17: #{tpu_custom_call.1} parent=11 // pred_check
        %p187 = pneg %p80
      $region18: #{tpu_custom_call.1} parent=11 // pred_check_branch
        %189 = sbr.rel (%p187) target = $region20
      $region19: #{tpu_custom_call.1} parent=11 // pred_region
        _
      $region20: #{tpu_custom_call.1} parent=11 // pred_fallthru
        _
      // Predicated region
      $region21: #{tpu_custom_call.1} parent=11 // pred_check
        %p190 = pneg %p101
      $region22: #{tpu_custom_call.1} parent=11 // pred_check_branch
        %192 = sbr.rel (%p190) target = $region24
      $region23: #{tpu_custom_call.1} parent=11 // pred_region
        _
      $region24: #{tpu_custom_call.1} parent=11 // pred_fallthru
        _
      // Predicated region
      $region25: #{tpu_custom_call.1} parent=11 // pred_check
        %p193 = pneg %p122
      $region26: #{tpu_custom_call.1} parent=11 // pred_check_branch
        %195 = sbr.rel (%p193) target = $region28
      $region27: #{tpu_custom_call.1} parent=11 // pred_region
        _
      $region28: #{tpu_custom_call.1} parent=11 // pred_fallthru
        _
      // Predicated region
      $region29: #{tpu_custom_call.1} parent=11 // pred_check
        %p196 = pneg %p143
      $region30: #{tpu_custom_call.1} parent=11 // pred_check_branch
        %198 = sbr.rel (%p196) target = $region32
      $region31: #{tpu_custom_call.1} parent=11 // pred_region
        _
      $region32: #{tpu_custom_call.1} parent=11 // pred_fallthru
        _
    $region12: #{tpu_custom_call.1} parent=5 // pred_fallthru
      _
    %p199 = scmp.lt.s32.totalorder %s12, 2
    // Predicated region
    $region33: #{tpu_custom_call.1} parent=5 // pred_check
      %p200 = pneg %p199
    $region34: #{tpu_custom_call.1} parent=5 // pred_check_branch
      %202 = sbr.rel (%p200) target = $region36
    $region35: #{tpu_custom_call.1} parent=5 // pred_region
      // Predicated region
      $region37: #{tpu_custom_call.1} parent=35 // pred_check
        %p203 = pneg %p32
      $region38: #{tpu_custom_call.1} parent=35 // pred_check_branch
        %205 = sbr.rel (%p203) target = $region40
      $region39: #{tpu_custom_call.1} parent=35 // pred_region
        %p206 = scmp.lt.s32.totalorder %s12, 1
        %s207 = scalar_select %p206, %s12, 1
        %s208 = smul.addr %s207, 8
        %s209 = smul.addr %s208, 8
        %s210 = scalar_lea.vmem %s0, %s209
      $region40: #{tpu_custom_call.1} parent=35 // pred_fallthru
        _
    $region36: #{tpu_custom_call.1} parent=5 // pred_fallthru
      _
    %p211 = scmp.le.s32.totalorder 1, %s12
    %p212 = scmp.lt.s32.totalorder %s12, 3
    %p213 = pnand %p211, %p212
    %p214 = pneg %p213
    // Predicated region
    $region41: #{tpu_custom_call.1} parent=5 // pred_check
      _
    $region42: #{tpu_custom_call.1} parent=5 // pred_check_branch
      %216 = sbr.rel (%p213) target = $region44
    $region43: #{tpu_custom_call.1} parent=5 // pred_region
      %s217 = ssub.s32 %s12, 1
      %p218 = scmp.lt.s32.totalorder %s17, 1
      %s219 = scalar_select %p218, %s17, 1
      %s220 = smul.addr %s219, 8
      %s221 = smul.addr %s220, 8
      %s222 = scalar_lea.vmem %s0, %s221
      %p223 = pneg %p38
      %p224 = pneg %p35
      %p225 = pneg %p59
      %p226 = pneg %p56
      %p227 = pneg %p80
      %p228 = pneg %p77
      %p229 = pneg %p101
      %p230 = pneg %p98
      %p231 = pneg %p122
      %p232 = pneg %p119
      %p233 = pneg %p143
      %p234 = pneg %p140
      %p235 = pneg %p169
      %p236 = pneg %p166
      %p237 = scmp.lt.s32.totalorder %s17, 1
      %s238 = scalar_select %p237, %s17, 1
      %s239 = smul.addr %s238, 8
      %s240 = smul.addr %s239, 8
      %s241 = scalar_lea.vmem %s6, %s240
      %p242 = scmp.lt.s32.totalorder %s17, 1
      %s243 = scalar_select %p242, %s17, 1
      %s244 = smul.addr %s243, 8
      %s245 = smul.addr %s244, 8
      %s246 = scalar_lea.vmem %s0, %s245
      %p247 = scmp.lt.s32.totalorder %s17, 1
      %s248 = scalar_select %p247, %s17, 1
      %s249 = smul.addr %s248, 8
      %s250 = smul.addr %s249, 8
      %s251 = scalar_lea.vmem %s6, %s250
      %v253 = vld [vmem:[%s246] sm:$0xff]
      %v254 = vld [vmem:[%s246 + $0x8] sm:$0xff]
      %v255 = vld [vmem:[%s246 + $0x10] sm:$0xff]
      %v256 = vld [vmem:[%s246 + $0x18] sm:$0xff]
      %v257 = vld [vmem:[%s246 + $0x20] sm:$0xff]
      %v258 = vld [vmem:[%s246 + $0x28] sm:$0xff]
      %v259 = vld [vmem:[%s246 + $0x30] sm:$0xff]
      %v260 = vld [vmem:[%s246 + $0x38] sm:$0xff]
      %v261 = vpack.c.bf16 %v254, %v253
      %v262 = vpack.c.bf16 %v256, %v255
      %v263 = vpack.c.bf16 %v258, %v257
      %v264 = vpack.c.bf16 %v260, %v259
      %v265 = vld [vmem:[%s1] sm:$0xff]
      %v266 = vld [vmem:[%s1 + $0x8] sm:$0xff]
      %v267 = vld [vmem:[%s1 + $0x10] sm:$0xff]
      %v268 = vld [vmem:[%s1 + $0x18] sm:$0xff]
      %v273 = vunpack.c.l.b16 %v265
      %v274 = vunpack.c.h.b16 %v265
      %v275 = vunpack.c.l.b16 %v266
      %v276 = vunpack.c.h.b16 %v266
      %v277 = vunpack.c.l.b16 %v267
      %v278 = vunpack.c.h.b16 %v267
      %v279 = vunpack.c.l.b16 %v268
      %v280 = vunpack.c.h.b16 %v268
      %v281 = vpack.c.b16 %v275, %v273
      %v282 = vpack.c.b16 %v276, %v274
      %v283 = vpack.c.b16 %v279, %v277
      %v284 = vpack.c.b16 %v280, %v278
      %vm289 = vcmask 261120
      %v291 = vsel %vm289, %v261, 0
      %v294 = vsel %vm289, %v262, 0
      %v297 = vsel %vm289, %v263, 0
      %v300 = vsel %vm289, %v264, 0
      %302 = vmatpush.bf16.msra.mxu0 0
      %303 = vmatpush.bf16.msra.mxu0 0
      %304 = vmatpush.bf16.msra.mxu0 0
      %305 = vmatpush.bf16.msra.mxu0 0
      %306 = vmatpush.bf16.msra.mxu0 0
      %307 = vmatpush.bf16.msra.mxu0 0
      %308 = vmatpush.bf16.msra.mxu0 %v283
      %309 = vmatpush.bf16.msra.mxu0 %v281
      %310 = vmatmul.bf16.gmra.mxu0 %v291
      %v311 = vpop.f32.mrf.mxu0
      %v312 = vadd.f32 0.0, %v311
      %v313 = vpop.f32.mrf.mxu0
      %v314 = vadd.f32 0.0, %v313
      %315 = vmatmul.bf16.gmra.mxu0 %v294
      %v316 = vpop.f32.mrf.mxu0
      %v317 = vadd.f32 0.0, %v316
      %v318 = vpop.f32.mrf.mxu0
      %v319 = vadd.f32 0.0, %v318
      %320 = vmatmul.bf16.gmra.mxu0 %v297
      %v321 = vpop.f32.mrf.mxu0
      %v322 = vadd.f32 0.0, %v321
      %v323 = vpop.f32.mrf.mxu0
      %v324 = vadd.f32 0.0, %v323
      %325 = vmatmul.bf16.gmra.mxu0 %v300
      %v326 = vpop.f32.mrf.mxu0
      %v327 = vadd.f32 0.0, %v326
      %v328 = vpop.f32.mrf.mxu0
      %v329 = vadd.f32 0.0, %v328
      %330 = vdwg.mxu0
      %331 = vmatpush.bf16.msra.mxu0 0
      %332 = vmatpush.bf16.msra.mxu0 0
      %333 = vmatpush.bf16.msra.mxu0 0
      %334 = vmatpush.bf16.msra.mxu0 0
      %335 = vmatpush.bf16.msra.mxu0 0
      %336 = vmatpush.bf16.msra.mxu0 0
      %337 = vmatpush.bf16.msra.mxu0 %v284
      %338 = vmatpush.bf16.msra.mxu0 %v282
      %339 = vmatmul.bf16.gmra.mxu0 %v291
      %v340 = vpop.f32.mrf.mxu0
      %v341 = vadd.f32 0.0, %v340
      %v342 = vpop.f32.mrf.mxu0
      %v343 = vadd.f32 0.0, %v342
      %344 = vmatmul.bf16.gmra.mxu0 %v294
      %v345 = vpop.f32.mrf.mxu0
      %v346 = vadd.f32 0.0, %v345
      %v347 = vpop.f32.mrf.mxu0
      %v348 = vadd.f32 0.0, %v347
      %349 = vmatmul.bf16.gmra.mxu0 %v297
      %v350 = vpop.f32.mrf.mxu0
      %v351 = vadd.f32 0.0, %v350
      %v352 = vpop.f32.mrf.mxu0
      %v353 = vadd.f32 0.0, %v352
      %354 = vmatmul.bf16.gmra.mxu0 %v300
      %v355 = vpop.f32.mrf.mxu0
      %v356 = vadd.f32 0.0, %v355
      %v357 = vpop.f32.mrf.mxu0
      %v358 = vadd.f32 0.0, %v357
      %359 = vdwg.mxu0
      %v360 = vld [vmem:[%s2] sm:$0xf]
      %v361 = vld [vmem:[%s2 + $0x4] sm:$0xf]
      %v362 = vld [vmem:[%s2 + $0x8] sm:$0xf]
      %v363 = vld [vmem:[%s2 + $0xc] sm:$0xf]
      %v368 = vunpack.c.l.b16 %v360
      %v369 = vunpack.c.l.b16 %v361
      %v370 = vunpack.c.l.b16 %v362
      %v371 = vunpack.c.l.b16 %v363
      %v372 = vpack.c.b16 %v369, %v368
      %v373 = vpack.c.b16 %v371, %v370
      %376 = vmatpush.bf16.msra.mxu0 0
      %377 = vmatpush.bf16.msra.mxu0 0
      %378 = vmatpush.bf16.msra.mxu0 0
      %379 = vmatpush.bf16.msra.mxu0 0
      %380 = vmatpush.bf16.msra.mxu0 0
      %381 = vmatpush.bf16.msra.mxu0 0
      %382 = vmatpush.bf16.msra.mxu0 %v373
      %383 = vmatpush.bf16.msra.mxu0 %v372
      %384 = vmatmul.bf16.gmra.mxu0 %v291
      %v385 = vpop.f32.mrf.mxu0
      %v386 = vadd.f32 0.0, %v385
      %v387 = vpop.f32.mrf.mxu0
      %v388 = vadd.f32 0.0, %v387
      %389 = vmatmul.bf16.gmra.mxu0 %v294
      %v390 = vpop.f32.mrf.mxu0
      %v391 = vadd.f32 0.0, %v390
      %v392 = vpop.f32.mrf.mxu0
      %v393 = vadd.f32 0.0, %v392
      %394 = vmatmul.bf16.gmra.mxu0 %v297
      %v395 = vpop.f32.mrf.mxu0
      %v396 = vadd.f32 0.0, %v395
      %v397 = vpop.f32.mrf.mxu0
      %v398 = vadd.f32 0.0, %v397
      %399 = vmatmul.bf16.gmra.mxu0 %v300
      %v400 = vpop.f32.mrf.mxu0
      %v401 = vadd.f32 0.0, %v400
      %v402 = vpop.f32.mrf.mxu0
      %v403 = vadd.f32 0.0, %v402
      %404 = vdwg.mxu0
      %v405 = vmax.f32 %v386, 0.0
      %v406 = vmax.f32 %v388, 0.0
      %v407 = vmax.f32 %v391, 0.0
      %v408 = vmax.f32 %v393, 0.0
      %v409 = vmax.f32 %v396, 0.0
      %v410 = vmax.f32 %v398, 0.0
      %v411 = vmax.f32 %v401, 0.0
      %v412 = vmax.f32 %v403, 0.0
      %v413 = vand.u32 2147483647, %v386
      %v414 = vand.u32 2147483647, %v388
      %v415 = vand.u32 2147483647, %v391
      %v416 = vand.u32 2147483647, %v393
      %v417 = vand.u32 2147483647, %v396
      %v418 = vand.u32 2147483647, %v398
      %v419 = vand.u32 2147483647, %v401
      %v420 = vand.u32 2147483647, %v403
      %v421 = vsub.f32 0.0, %v413
      %v422 = vsub.f32 0.0, %v414
      %v423 = vsub.f32 0.0, %v415
      %v424 = vsub.f32 0.0, %v416
      %v425 = vsub.f32 0.0, %v417
      %v426 = vsub.f32 0.0, %v418
      %v427 = vsub.f32 0.0, %v419
      %v428 = vsub.f32 0.0, %v420
      %v429 = vmul.f32 %v421, 1.442695
      %v430 = vpow.pop %v429
      %v431 = vmul.f32 %v422, 1.442695
      %v432 = vpow.pop %v431
      %v433 = vmul.f32 %v423, 1.442695
      %v434 = vpow.pop %v433
      %v435 = vmul.f32 %v424, 1.442695
      %v436 = vpow.pop %v435
      %v437 = vmul.f32 %v425, 1.442695
      %v438 = vpow.pop %v437
      %v439 = vmul.f32 %v426, 1.442695
      %v440 = vpow.pop %v439
      %v441 = vmul.f32 %v427, 1.442695
      %v442 = vpow.pop %v441
      %v443 = vmul.f32 %v428, 1.442695
      %v444 = vpow.pop %v443
      %v445 = vadd.f32 %v430, 1.0
      %v446 = vlog2.pop %v445
      %v447 = vmul.f32 %v446, 0.6931472
      %v448 = vmul.f32 -0.5, %v430
      %v449 = vadd.f32 %v448, 1.0
      %v450 = vmul.f32 %v449, %v430
      %v451 = vand.u32 2147483647, %v430
      %vm452 = vcmp.lt.f32.partialorder %v451, 0.0004427343
      %v453 = vsel %vm452, %v450, %v447
      %v454 = vadd.f32 %v432, 1.0
      %v455 = vlog2.pop %v454
      %v456 = vmul.f32 %v455, 0.6931472
      %v457 = vmul.f32 -0.5, %v432
      %v458 = vadd.f32 %v457, 1.0
      %v459 = vmul.f32 %v458, %v432
      %v460 = vand.u32 2147483647, %v432
      %vm461 = vcmp.lt.f32.partialorder %v460, 0.0004427343
      %v462 = vsel %vm461, %v459, %v456
      %v463 = vadd.f32 %v434, 1.0
      %v464 = vlog2.pop %v463
      %v465 = vmul.f32 %v464, 0.6931472
      %v466 = vmul.f32 -0.5, %v434
      %v467 = vadd.f32 %v466, 1.0
      %v468 = vmul.f32 %v467, %v434
      %v469 = vand.u32 2147483647, %v434
      %vm470 = vcmp.lt.f32.partialorder %v469, 0.0004427343
      %v471 = vsel %vm470, %v468, %v465
      %v472 = vadd.f32 %v436, 1.0
      %v473 = vlog2.pop %v472
      %v474 = vmul.f32 %v473, 0.6931472
      %v475 = vmul.f32 -0.5, %v436
      %v476 = vadd.f32 %v475, 1.0
      %v477 = vmul.f32 %v476, %v436
      %v478 = vand.u32 2147483647, %v436
      %vm479 = vcmp.lt.f32.partialorder %v478, 0.0004427343
      %v480 = vsel %vm479, %v477, %v474
      %v481 = vadd.f32 %v438, 1.0
      %v482 = vlog2.pop %v481
      %v483 = vmul.f32 %v482, 0.6931472
      %v484 = vmul.f32 -0.5, %v438
      %v485 = vadd.f32 %v484, 1.0
      %v486 = vmul.f32 %v485, %v438
      %v487 = vand.u32 2147483647, %v438
      %vm488 = vcmp.lt.f32.partialorder %v487, 0.0004427343
      %v489 = vsel %vm488, %v486, %v483
      %v490 = vadd.f32 %v440, 1.0
      %v491 = vlog2.pop %v490
      %v492 = vmul.f32 %v491, 0.6931472
      %v493 = vmul.f32 -0.5, %v440
      %v494 = vadd.f32 %v493, 1.0
      %v495 = vmul.f32 %v494, %v440
      %v496 = vand.u32 2147483647, %v440
      %vm497 = vcmp.lt.f32.partialorder %v496, 0.0004427343
      %v498 = vsel %vm497, %v495, %v492
      %v499 = vadd.f32 %v442, 1.0
      %v500 = vlog2.pop %v499
      %v501 = vmul.f32 %v500, 0.6931472
      %v502 = vmul.f32 -0.5, %v442
      %v503 = vadd.f32 %v502, 1.0
      %v504 = vmul.f32 %v503, %v442
      %v505 = vand.u32 2147483647, %v442
      %vm506 = vcmp.lt.f32.partialorder %v505, 0.0004427343
      %v507 = vsel %vm506, %v504, %v501
      %v508 = vadd.f32 %v444, 1.0
      %v509 = vlog2.pop %v508
      %v510 = vmul.f32 %v509, 0.6931472
      %v511 = vmul.f32 -0.5, %v444
      %v512 = vadd.f32 %v511, 1.0
      %v513 = vmul.f32 %v512, %v444
      %v514 = vand.u32 2147483647, %v444
      %vm515 = vcmp.lt.f32.partialorder %v514, 0.0004427343
      %v516 = vsel %vm515, %v513, %v510
      %v517 = vadd.f32 %v405, %v453
      %v518 = vadd.f32 %v406, %v462
      %v519 = vadd.f32 %v407, %v471
      %v520 = vadd.f32 %v408, %v480
      %v521 = vadd.f32 %v409, %v489
      %v522 = vadd.f32 %v410, %v498
      %v523 = vadd.f32 %v411, %v507
      %v524 = vadd.f32 %v412, %v516
      %v525 = vsub.f32 0.0, %v517
      %v526 = vsub.f32 0.0, %v518
      %v527 = vsub.f32 0.0, %v519
      %v528 = vsub.f32 0.0, %v520
      %v529 = vsub.f32 0.0, %v521
      %v530 = vsub.f32 0.0, %v522
      %v531 = vsub.f32 0.0, %v523
      %v532 = vsub.f32 0.0, %v524
      %vm533 = vcmp.ge.f32.partialorder %v386, 0.0
      %vm534 = vcmp.ge.f32.partialorder %v388, 0.0
      %vm535 = vcmp.ge.f32.partialorder %v391, 0.0
      %vm536 = vcmp.ge.f32.partialorder %v393, 0.0
      %vm537 = vcmp.ge.f32.partialorder %v396, 0.0
      %vm538 = vcmp.ge.f32.partialorder %v398, 0.0
      %vm539 = vcmp.ge.f32.partialorder %v401, 0.0
      %vm540 = vcmp.ge.f32.partialorder %v403, 0.0
      %v541 = vadd.f32 %v405, 0.5
      %v542 = vadd.f32 %v406, 0.5
      %v543 = vadd.f32 %v407, 0.5
      %v544 = vadd.f32 %v408, 0.5
      %v545 = vadd.f32 %v409, 0.5
      %v546 = vadd.f32 %v410, 0.5
      %v547 = vadd.f32 %v411, 0.5
      %v548 = vadd.f32 %v412, 0.5
      %v549 = vlog2.pop %v541
      %v550 = vmul.f32 %v549, 0.6931472
      %v551 = vlog2.pop %v542
      %v552 = vmul.f32 %v551, 0.6931472
      %v553 = vlog2.pop %v543
      %v554 = vmul.f32 %v553, 0.6931472
      %v555 = vlog2.pop %v544
      %v556 = vmul.f32 %v555, 0.6931472
      %v557 = vlog2.pop %v545
      %v558 = vmul.f32 %v557, 0.6931472
      %v559 = vlog2.pop %v546
      %v560 = vmul.f32 %v559, 0.6931472
      %v561 = vlog2.pop %v547
      %v562 = vmul.f32 %v561, 0.6931472
      %v563 = vlog2.pop %v548
      %v564 = vmul.f32 %v563, 0.6931472
      %v565 = vsub.f32 0.0, %v386
      %v566 = vsub.f32 0.0, %v388
      %v567 = vsub.f32 0.0, %v391
      %v568 = vsub.f32 0.0, %v393
      %v569 = vsub.f32 0.0, %v396
      %v570 = vsub.f32 0.0, %v398
      %v571 = vsub.f32 0.0, %v401
      %v572 = vsub.f32 0.0, %v403
      %v573 = vmax.f32 %v565, 0.0
      %v574 = vmax.f32 %v566, 0.0
      %v575 = vmax.f32 %v567, 0.0
      %v576 = vmax.f32 %v568, 0.0
      %v577 = vmax.f32 %v569, 0.0
      %v578 = vmax.f32 %v570, 0.0
      %v579 = vmax.f32 %v571, 0.0
      %v580 = vmax.f32 %v572, 0.0
      %v581 = vand.u32 2147483647, %v565
      %v582 = vand.u32 2147483647, %v566
      %v583 = vand.u32 2147483647, %v567
      %v584 = vand.u32 2147483647, %v568
      %v585 = vand.u32 2147483647, %v569
      %v586 = vand.u32 2147483647, %v570
      %v587 = vand.u32 2147483647, %v571
      %v588 = vand.u32 2147483647, %v572
      %v589 = vsub.f32 0.0, %v581
      %v590 = vsub.f32 0.0, %v582
      %v591 = vsub.f32 0.0, %v583
      %v592 = vsub.f32 0.0, %v584
      %v593 = vsub.f32 0.0, %v585
      %v594 = vsub.f32 0.0, %v586
      %v595 = vsub.f32 0.0, %v587
      %v596 = vsub.f32 0.0, %v588
      %v597 = vmul.f32 %v589, 1.442695
      %v598 = vpow.pop %v597
      %v599 = vmul.f32 %v590, 1.442695
      %v600 = vpow.pop %v599
      %v601 = vmul.f32 %v591, 1.442695
      %v602 = vpow.pop %v601
      %v603 = vmul.f32 %v592, 1.442695
      %v604 = vpow.pop %v603
      %v605 = vmul.f32 %v593, 1.442695
      %v606 = vpow.pop %v605
      %v607 = vmul.f32 %v594, 1.442695
      %v608 = vpow.pop %v607
      %v609 = vmul.f32 %v595, 1.442695
      %v610 = vpow.pop %v609
      %v611 = vmul.f32 %v596, 1.442695
      %v612 = vpow.pop %v611
      %v613 = vadd.f32 %v598, 1.0
      %v614 = vlog2.pop %v613
      %v615 = vmul.f32 %v614, 0.6931472
      %v616 = vmul.f32 -0.5, %v598
      %v617 = vadd.f32 %v616, 1.0
      %v618 = vmul.f32 %v617, %v598
      %v619 = vand.u32 2147483647, %v598
      %vm620 = vcmp.lt.f32.partialorder %v619, 0.0004427343
      %v621 = vsel %vm620, %v618, %v615
      %v622 = vadd.f32 %v600, 1.0
      %v623 = vlog2.pop %v622
      %v624 = vmul.f32 %v623, 0.6931472
      %v625 = vmul.f32 -0.5, %v600
      %v626 = vadd.f32 %v625, 1.0
      %v627 = vmul.f32 %v626, %v600
      %v628 = vand.u32 2147483647, %v600
      %vm629 = vcmp.lt.f32.partialorder %v628, 0.0004427343
      %v630 = vsel %vm629, %v627, %v624
      %v631 = vadd.f32 %v602, 1.0
      %v632 = vlog2.pop %v631
      %v633 = vmul.f32 %v632, 0.6931472
      %v634 = vmul.f32 -0.5, %v602
      %v635 = vadd.f32 %v634, 1.0
      %v636 = vmul.f32 %v635, %v602
      %v637 = vand.u32 2147483647, %v602
      %vm638 = vcmp.lt.f32.partialorder %v637, 0.0004427343
      %v639 = vsel %vm638, %v636, %v633
      %v640 = vadd.f32 %v604, 1.0
      %v641 = vlog2.pop %v640
      %v642 = vmul.f32 %v641, 0.6931472
      %v643 = vmul.f32 -0.5, %v604
      %v644 = vadd.f32 %v643, 1.0
      %v645 = vmul.f32 %v644, %v604
      %v646 = vand.u32 2147483647, %v604
      %vm647 = vcmp.lt.f32.partialorder %v646, 0.0004427343
      %v648 = vsel %vm647, %v645, %v642
      %v649 = vadd.f32 %v606, 1.0
      %v650 = vlog2.pop %v649
      %v651 = vmul.f32 %v650, 0.6931472
      %v652 = vmul.f32 -0.5, %v606
      %v653 = vadd.f32 %v652, 1.0
      %v654 = vmul.f32 %v653, %v606
      %v655 = vand.u32 2147483647, %v606
      %vm656 = vcmp.lt.f32.partialorder %v655, 0.0004427343
      %v657 = vsel %vm656, %v654, %v651
      %v658 = vadd.f32 %v608, 1.0
      %v659 = vlog2.pop %v658
      %v660 = vmul.f32 %v659, 0.6931472
      %v661 = vmul.f32 -0.5, %v608
      %v662 = vadd.f32 %v661, 1.0
      %v663 = vmul.f32 %v662, %v608
      %v664 = vand.u32 2147483647, %v608
      %vm665 = vcmp.lt.f32.partialorder %v664, 0.0004427343
      %v666 = vsel %vm665, %v663, %v660
      %v667 = vadd.f32 %v610, 1.0
      %v668 = vlog2.pop %v667
      %v669 = vmul.f32 %v668, 0.6931472
      %v670 = vmul.f32 -0.5, %v610
      %v671 = vadd.f32 %v670, 1.0
      %v672 = vmul.f32 %v671, %v610
      %v673 = vand.u32 2147483647, %v610
      %vm674 = vcmp.lt.f32.partialorder %v673, 0.0004427343
      %v675 = vsel %vm674, %v672, %v669
      %v676 = vadd.f32 %v612, 1.0
      %v677 = vlog2.pop %v676
      %v678 = vmul.f32 %v677, 0.6931472
      %v679 = vmul.f32 -0.5, %v612
      %v680 = vadd.f32 %v679, 1.0
      %v681 = vmul.f32 %v680, %v612
      %v682 = vand.u32 2147483647, %v612
      %vm683 = vcmp.lt.f32.partialorder %v682, 0.0004427343
      %v684 = vsel %vm683, %v681, %v678
      %v685 = vadd.f32 %v573, %v621
      %v686 = vadd.f32 %v574, %v630
      %v687 = vadd.f32 %v575, %v639
      %v688 = vadd.f32 %v576, %v648
      %v689 = vadd.f32 %v577, %v657
      %v690 = vadd.f32 %v578, %v666
      %v691 = vadd.f32 %v579, %v675
      %v692 = vadd.f32 %v580, %v684
      %v693 = vsub.f32 0.0, %v685
      %v694 = vsub.f32 0.0, %v686
      %v695 = vsub.f32 0.0, %v687
      %v696 = vsub.f32 0.0, %v688
      %v697 = vsub.f32 0.0, %v689
      %v698 = vsub.f32 0.0, %v690
      %v699 = vsub.f32 0.0, %v691
      %v700 = vsub.f32 0.0, %v692
      %v701 = vsel %vm533, %v550, %v693
      %v702 = vsel %vm534, %v552, %v694
      %v703 = vsel %vm535, %v554, %v695
      %v704 = vsel %vm536, %v556, %v696
      %v705 = vsel %vm537, %v558, %v697
      %v706 = vsel %vm538, %v560, %v698
      %v707 = vsel %vm539, %v562, %v699
      %v708 = vsel %vm540, %v564, %v700
      %v709 = vadd.f32 %v386, %v525
      %v710 = vadd.f32 %v388, %v526
      %v711 = vadd.f32 %v391, %v527
      %v712 = vadd.f32 %v393, %v528
      %v713 = vadd.f32 %v396, %v529
      %v714 = vadd.f32 %v398, %v530
      %v715 = vadd.f32 %v401, %v531
      %v716 = vadd.f32 %v403, %v532
      %725 = vrot.lane.b32.xlu0 %v701, 64
      %v726 = vpop.permute.xlu0 %725
      %727 = vrot.lane.b32.xlu0 %v702, 64
      %v728 = vpop.permute.xlu0 %727
      %729 = vrot.lane.b32.xlu0 %v703, 64
      %v730 = vpop.permute.xlu0 %729
      %731 = vrot.lane.b32.xlu0 %v704, 64
      %v732 = vpop.permute.xlu0 %731
      %733 = vrot.lane.b32.xlu0 %v705, 64
      %v734 = vpop.permute.xlu0 %733
      %735 = vrot.lane.b32.xlu0 %v706, 64
      %v736 = vpop.permute.xlu0 %735
      %737 = vrot.lane.b32.xlu0 %v707, 64
      %v738 = vpop.permute.xlu0 %737
      %739 = vrot.lane.b32.xlu0 %v708, 64
      %v740 = vpop.permute.xlu0 %739
      %v749 = vadd.f32 %v709, %v726
      %v750 = vadd.f32 %v710, %v728
      %v751 = vadd.f32 %v711, %v730
      %v752 = vadd.f32 %v712, %v732
      %v753 = vadd.f32 %v713, %v734
      %v754 = vadd.f32 %v714, %v736
      %v755 = vadd.f32 %v715, %v738
      %v756 = vadd.f32 %v716, %v740
      %765 = vrot.lane.b32.xlu0 %v525, 64
      %v766 = vpop.permute.xlu0 %765
      %767 = vrot.lane.b32.xlu0 %v526, 64
      %v768 = vpop.permute.xlu0 %767
      %769 = vrot.lane.b32.xlu0 %v527, 64
      %v770 = vpop.permute.xlu0 %769
      %771 = vrot.lane.b32.xlu0 %v528, 64
      %v772 = vpop.permute.xlu0 %771
      %773 = vrot.lane.b32.xlu0 %v529, 64
      %v774 = vpop.permute.xlu0 %773
      %775 = vrot.lane.b32.xlu0 %v530, 64
      %v776 = vpop.permute.xlu0 %775
      %777 = vrot.lane.b32.xlu0 %v531, 64
      %v778 = vpop.permute.xlu0 %777
      %779 = vrot.lane.b32.xlu0 %v532, 64
      %v780 = vpop.permute.xlu0 %779
      %vm789 = vcmask 523264
      %790 = vst.msk [vmem:[#allocation2] sm:$0xff] %vm789, %v766
      %791 = vst.msk [vmem:[#allocation2 + $0x8] sm:$0xff] %vm789, %v768
      %792 = vst.msk [vmem:[#allocation2 + $0x10] sm:$0xff] %vm789, %v770
      %793 = vst.msk [vmem:[#allocation2 + $0x18] sm:$0xff] %vm789, %v772
      %794 = vst.msk [vmem:[#allocation2 + $0x20] sm:$0xff] %vm789, %v774
      %795 = vst.msk [vmem:[#allocation2 + $0x28] sm:$0xff] %vm789, %v776
      %796 = vst.msk [vmem:[#allocation2 + $0x30] sm:$0xff] %vm789, %v778
      %797 = vst.msk [vmem:[#allocation2 + $0x38] sm:$0xff] %vm789, %v780
      %806 = vrot.lane.b32.xlu0 %v749, 64
      %v807 = vpop.permute.xlu0 %806
      %808 = vrot.lane.b32.xlu0 %v750, 64
      %v809 = vpop.permute.xlu0 %808
      %810 = vrot.lane.b32.xlu0 %v751, 64
      %v811 = vpop.permute.xlu0 %810
      %812 = vrot.lane.b32.xlu0 %v752, 64
      %v813 = vpop.permute.xlu0 %812
      %814 = vrot.lane.b32.xlu0 %v753, 64
      %v815 = vpop.permute.xlu0 %814
      %816 = vrot.lane.b32.xlu0 %v754, 64
      %v817 = vpop.permute.xlu0 %816
      %818 = vrot.lane.b32.xlu0 %v755, 64
      %v819 = vpop.permute.xlu0 %818
      %820 = vrot.lane.b32.xlu0 %v756, 64
      %v821 = vpop.permute.xlu0 %820
      %830 = vst.msk [vmem:[#allocation3] sm:$0xff] %vm789, %v807
      %831 = vst.msk [vmem:[#allocation3 + $0x8] sm:$0xff] %vm789, %v809
      %832 = vst.msk [vmem:[#allocation3 + $0x10] sm:$0xff] %vm789, %v811
      %833 = vst.msk [vmem:[#allocation3 + $0x18] sm:$0xff] %vm789, %v813
      %834 = vst.msk [vmem:[#allocation3 + $0x20] sm:$0xff] %vm789, %v815
      %835 = vst.msk [vmem:[#allocation3 + $0x28] sm:$0xff] %vm789, %v817
      %836 = vst.msk [vmem:[#allocation3 + $0x30] sm:$0xff] %vm789, %v819
      %837 = vst.msk [vmem:[#allocation3 + $0x38] sm:$0xff] %vm789, %v821
      %vm838 = vcmask 516096
      %839 = vst.msk [vmem:[#allocation5] sm:$0x1] %vm838, 0.0
      %840 = vst.msk [vmem:[#allocation6] sm:$0x1] %vm838, -1e+30
      %v841 = vlaneseq
      %v842 = vshrl.u32 %v841, 7
      %v843 = vadd.s32 %v842, 8
      %v844 = vlaneseq
      %v845 = vand.u32 %v844, 127
      %vm846 = vcmp.ge.s32.totalorder %v842, %v845
      %vm847 = vcmp.ge.s32.totalorder %v843, %v845
      %v848 = vsel %vm846, 1.0, 0.0
      %v849 = vsel %vm847, 1.0, 0.0
      loop: start=0, step=1, limit=4
      $region45: #{tpu_custom_call.1} parent=43 // loop_pre_header
        _
      $region46: #{tpu_custom_call.1} parent=43 // loop_header
        %s851 = sphi 0, %s855
        %p852 = scmp.ge.s32.totalorder %s851, 4
      $region47: #{tpu_custom_call.1} parent=43 // loop_header_branch
        %854 = sbr.rel (%p852) target = $region51
      $region48: #{tpu_custom_call.1} parent=43 // loop_body
        %s856 = smul.u32 %s851, 16
        %s857 = scalar_lea.vmem [#allocation2], %s856
        %v858 = vld [vmem:[%s857] sm:$0xff]
        %v859 = vld [vmem:[%s857 + $0x8] sm:$0xff]
        %s860 = scalar_lea.vmem [#allocation3], %s856
        %v861 = vld [vmem:[%s860] sm:$0xff]
        %v862 = vld [vmem:[%s860 + $0x8] sm:$0xff]
        %vm863 = vcmask 130048
        %v865 = vsel %vm863, %v848, 0
        %v868 = vsel %vm863, %v849, 0
        %870 = vmatpush.msra.mxu0 0.0
        %871 = vmatpush.msra.mxu0 0.0
        %872 = vmatpush.msra.mxu0 0.0
        %873 = vmatpush.msra.mxu0 0.0
        %874 = vmatpush.msra.mxu0 0.0
        %875 = vmatpush.msra.mxu0 0.0
        %876 = vmatpush.msra.mxu0 0.0
        %877 = vmatpush.msra.mxu0 0.0
        %878 = vmatpush.msra.mxu0 0.0
        %879 = vmatpush.msra.mxu0 0.0
        %880 = vmatpush.msra.mxu0 0.0
        %881 = vmatpush.msra.mxu0 0.0
        %882 = vmatpush.msra.mxu0 0.0
        %883 = vmatpush.msra.mxu0 0.0
        %v884 = vand.u32 %v859, 4294901760
        %885 = vmatpush.msra.mxu0 %v884
        %v886 = vand.u32 %v858, 4294901760
        %887 = vmatpush.msra.mxu0 %v886
        %v888 = vand.u32 %v865, 4294901760
        %v889 = vsub.f32 %v865, %v888
        %v890 = vand.u32 %v889, 4294901760
        %v891 = vsub.f32 %v889, %v890
        %v892 = vand.u32 %v891, 4294901760
        %893 = vmatmul.f32.gmra.mxu0 %v892
        %v894 = vpop.f32.mrf.mxu0
        %v895 = vadd.f32 0.0, %v894
        %v896 = vand.u32 %v868, 4294901760
        %v897 = vsub.f32 %v868, %v896
        %v898 = vand.u32 %v897, 4294901760
        %v899 = vsub.f32 %v897, %v898
        %v900 = vand.u32 %v899, 4294901760
        %901 = vmatmul.f32.gmra.mxu0 %v900
        %v902 = vpop.f32.mrf.mxu0
        %v903 = vadd.f32 0.0, %v902
        %904 = vdwg.mxu0
        %905 = vmatpush.msra.mxu0 0.0
        %906 = vmatpush.msra.mxu0 0.0
        %907 = vmatpush.msra.mxu0 0.0
        %908 = vmatpush.msra.mxu0 0.0
        %909 = vmatpush.msra.mxu0 0.0
        %910 = vmatpush.msra.mxu0 0.0
        %911 = vmatpush.msra.mxu0 0.0
        %912 = vmatpush.msra.mxu0 0.0
        %913 = vmatpush.msra.mxu0 0.0
        %914 = vmatpush.msra.mxu0 0.0
        %915 = vmatpush.msra.mxu0 0.0
        %916 = vmatpush.msra.mxu0 0.0
        %917 = vmatpush.msra.mxu0 0.0
        %918 = vmatpush.msra.mxu0 0.0
        %v919 = vand.u32 %v859, 4294901760
        %v920 = vsub.f32 %v859, %v919
        %v921 = vand.u32 %v920, 4294901760
        %v922 = vsub.f32 %v920, %v921
        %v923 = vand.u32 %v922, 4294901760
        %924 = vmatpush.msra.mxu0 %v923
        %v925 = vand.u32 %v858, 4294901760
        %v926 = vsub.f32 %v858, %v925
        %v927 = vand.u32 %v926, 4294901760
        %v928 = vsub.f32 %v926, %v927
        %v929 = vand.u32 %v928, 4294901760
        %930 = vmatpush.msra.mxu0 %v929
        %v931 = vand.u32 %v865, 4294901760
        %932 = vmatmul.f32.gmra.mxu0 %v931
        %v933 = vpop.f32.mrf.mxu0
        %v934 = vadd.f32 %v895, %v933
        %v935 = vand.u32 %v868, 4294901760
        %936 = vmatmul.f32.gmra.mxu0 %v935
        %v937 = vpop.f32.mrf.mxu0
        %v938 = vadd.f32 %v903, %v937
        %939 = vdwg.mxu0
        %940 = vmatpush.msra.mxu0 0.0
        %941 = vmatpush.msra.mxu0 0.0
        %942 = vmatpush.msra.mxu0 0.0
        %943 = vmatpush.msra.mxu0 0.0
        %944 = vmatpush.msra.mxu0 0.0
        %945 = vmatpush.msra.mxu0 0.0
        %946 = vmatpush.msra.mxu0 0.0
        %947 = vmatpush.msra.mxu0 0.0
        %948 = vmatpush.msra.mxu0 0.0
        %949 = vmatpush.msra.mxu0 0.0
        %950 = vmatpush.msra.mxu0 0.0
        %951 = vmatpush.msra.mxu0 0.0
        %952 = vmatpush.msra.mxu0 0.0
        %953 = vmatpush.msra.mxu0 0.0
        %v954 = vand.u32 %v859, 4294901760
        %v955 = vsub.f32 %v859, %v954
        %956 = vmatpush.msra.mxu0 %v955
        %v957 = vand.u32 %v858, 4294901760
        %v958 = vsub.f32 %v858, %v957
        %959 = vmatpush.msra.mxu0 %v958
        %v960 = vand.u32 %v865, 4294901760
        %v961 = vsub.f32 %v865, %v960
        %962 = vmatmul.f32.gmra.mxu0 %v961
        %v963 = vpop.f32.mrf.mxu0
        %v964 = vadd.f32 %v934, %v963
        %v965 = vand.u32 %v868, 4294901760
        %v966 = vsub.f32 %v868, %v965
        %967 = vmatmul.f32.gmra.mxu0 %v966
        %v968 = vpop.f32.mrf.mxu0
        %v969 = vadd.f32 %v938, %v968
        %970 = vdwg.mxu0
        %971 = vmatpush.msra.mxu0 0.0
        %972 = vmatpush.msra.mxu0 0.0
        %973 = vmatpush.msra.mxu0 0.0
        %974 = vmatpush.msra.mxu0 0.0
        %975 = vmatpush.msra.mxu0 0.0
        %976 = vmatpush.msra.mxu0 0.0
        %977 = vmatpush.msra.mxu0 0.0
        %978 = vmatpush.msra.mxu0 0.0
        %979 = vmatpush.msra.mxu0 0.0
        %980 = vmatpush.msra.mxu0 0.0
        %981 = vmatpush.msra.mxu0 0.0
        %982 = vmatpush.msra.mxu0 0.0
        %983 = vmatpush.msra.mxu0 0.0
        %984 = vmatpush.msra.mxu0 0.0
        %v985 = vand.u32 %v859, 4294901760
        %986 = vmatpush.msra.mxu0 %v985
        %v987 = vand.u32 %v858, 4294901760
        %988 = vmatpush.msra.mxu0 %v987
        %v989 = vand.u32 %v865, 4294901760
        %v990 = vsub.f32 %v865, %v989
        %v991 = vand.u32 %v990, 4294901760
        %992 = vmatmul.f32.gmra.mxu0 %v991
        %v993 = vpop.f32.mrf.mxu0
        %v994 = vadd.f32 %v964, %v993
        %v995 = vand.u32 %v868, 4294901760
        %v996 = vsub.f32 %v868, %v995
        %v997 = vand.u32 %v996, 4294901760
        %998 = vmatmul.f32.gmra.mxu0 %v997
        %v999 = vpop.f32.mrf.mxu0
        %v1000 = vadd.f32 %v969, %v999
        %1001 = vdwg.mxu0
        %1002 = vmatpush.msra.mxu0 0.0
        %1003 = vmatpush.msra.mxu0 0.0
        %1004 = vmatpush.msra.mxu0 0.0
        %1005 = vmatpush.msra.mxu0 0.0
        %1006 = vmatpush.msra.mxu0 0.0
        %1007 = vmatpush.msra.mxu0 0.0
        %1008 = vmatpush.msra.mxu0 0.0
        %1009 = vmatpush.msra.mxu0 0.0
        %1010 = vmatpush.msra.mxu0 0.0
        %1011 = vmatpush.msra.mxu0 0.0
        %1012 = vmatpush.msra.mxu0 0.0
        %1013 = vmatpush.msra.mxu0 0.0
        %1014 = vmatpush.msra.mxu0 0.0
        %1015 = vmatpush.msra.mxu0 0.0
        %v1016 = vand.u32 %v859, 4294901760
        %v1017 = vsub.f32 %v859, %v1016
        %v1018 = vand.u32 %v1017, 4294901760
        %1019 = vmatpush.msra.mxu0 %v1018
        %v1020 = vand.u32 %v858, 4294901760
        %v1021 = vsub.f32 %v858, %v1020
        %v1022 = vand.u32 %v1021, 4294901760
        %1023 = vmatpush.msra.mxu0 %v1022
        %v1024 = vand.u32 %v865, 4294901760
        %1025 = vmatmul.f32.gmra.mxu0 %v1024
        %v1026 = vpop.f32.mrf.mxu0
        %v1027 = vadd.f32 %v994, %v1026
        %v1028 = vand.u32 %v868, 4294901760
        %1029 = vmatmul.f32.gmra.mxu0 %v1028
        %v1030 = vpop.f32.mrf.mxu0
        %v1031 = vadd.f32 %v1000, %v1030
        %1032 = vdwg.mxu0
        %1033 = vmatpush.msra.mxu0 0.0
        %1034 = vmatpush.msra.mxu0 0.0
        %1035 = vmatpush.msra.mxu0 0.0
        %1036 = vmatpush.msra.mxu0 0.0
        %1037 = vmatpush.msra.mxu0 0.0
        %1038 = vmatpush.msra.mxu0 0.0
        %1039 = vmatpush.msra.mxu0 0.0
        %1040 = vmatpush.msra.mxu0 0.0
        %1041 = vmatpush.msra.mxu0 0.0
        %1042 = vmatpush.msra.mxu0 0.0
        %1043 = vmatpush.msra.mxu0 0.0
        %1044 = vmatpush.msra.mxu0 0.0
        %1045 = vmatpush.msra.mxu0 0.0
        %1046 = vmatpush.msra.mxu0 0.0
        %v1047 = vand.u32 %v859, 4294901760
        %1048 = vmatpush.msra.mxu0 %v1047
        %v1049 = vand.u32 %v858, 4294901760
        %1050 = vmatpush.msra.mxu0 %v1049
        %v1051 = vand.u32 %v865, 4294901760
        %1052 = vmatmul.f32.gmra.mxu0 %v1051
        %v1053 = vpop.f32.mrf.mxu0
        %v1054 = vadd.f32 %v1027, %v1053
        %v1055 = vand.u32 %v868, 4294901760
        %1056 = vmatmul.f32.gmra.mxu0 %v1055
        %v1057 = vpop.f32.mrf.mxu0
        %v1058 = vadd.f32 %v1031, %v1057
        %1059 = vdwg.mxu0
        %v1060 = vld [vmem:[#allocation5] sm:$0x1]
        %v1062 = vperm.slane %v1060, 0
        %v1064 = vadd.f32 %v1062, %v1054
        %v1065 = vadd.f32 %v1062, %v1058
        %v1066 = vsub.f32 %v861, %v1064
        %v1067 = vsub.f32 %v862, %v1065
        %v1068 = vsel %vm789, %v1066, -inf
        %v1069 = vsel %vm789, %v1067, -inf
        %v1070 = vmax.f32 %v1068, %v1069
        %v1071 = vrot.slane %v1070, 4
        %v1072 = vmax.f32 %v1070, %v1071
        %v1073 = vrot.slane %v1072, 2
        %v1074 = vmax.f32 %v1072, %v1073
        %v1075 = vrot.slane %v1074, 1
        %v1076 = vmax.f32 %v1074, %v1075
        %v1077 = vld [vmem:[#allocation6] sm:$0x1]
        %v1078 = vmax.f32 %v1076, %v1077
        %v1079 = vperm.slane %v1078, 0
        %v1080 = vsub.f32 %v1066, %v1079
        %v1081 = vsub.f32 %v1067, %v1079
        %v1082 = vmul.f32 %v1080, 1.442695
        %v1083 = vpow.pop %v1082
        %v1084 = vmul.f32 %v1081, 1.442695
        %v1085 = vpow.pop %v1084
        %v1086 = vsub.f32 %v1077, %v1078
        %v1087 = vmul.f32 %v1086, 1.442695
        %v1088 = vpow.pop %v1087
        %v1090 = vperm.slane %v1088, 0
        %1092 = vmatpush.msra.mxu0 0.0
        %1093 = vmatpush.msra.mxu0 0.0
        %1094 = vmatpush.msra.mxu0 0.0
        %1095 = vmatpush.msra.mxu0 0.0
        %1096 = vmatpush.msra.mxu0 0.0
        %1097 = vmatpush.msra.mxu0 0.0
        %1098 = vmatpush.msra.mxu0 0.0
        %1099 = vmatpush.msra.mxu0 0.0
        %1100 = vmatpush.msra.mxu0 0.0
        %1101 = vmatpush.msra.mxu0 0.0
        %1102 = vmatpush.msra.mxu0 0.0
        %1103 = vmatpush.msra.mxu0 0.0
        %1104 = vmatpush.msra.mxu0 0.0
        %1105 = vmatpush.msra.mxu0 0.0
        %v1106 = vand.u32 %v1085, 4294901760
        %1107 = vmatpush.msra.mxu0 %v1106
        %v1108 = vand.u32 %v1083, 4294901760
        %1109 = vmatpush.msra.mxu0 %v1108
        %v1110 = vand.u32 %v865, 4294901760
        %v1111 = vsub.f32 %v865, %v1110
        %v1112 = vand.u32 %v1111, 4294901760
        %v1113 = vsub.f32 %v1111, %v1112
        %v1114 = vand.u32 %v1113, 4294901760
        %1115 = vmatmul.f32.gmra.mxu0 %v1114
        %v1116 = vpop.f32.mrf.mxu0
        %v1117 = vadd.f32 %v1090, %v1116
        %v1118 = vand.u32 %v868, 4294901760
        %v1119 = vsub.f32 %v868, %v1118
        %v1120 = vand.u32 %v1119, 4294901760
        %v1121 = vsub.f32 %v1119, %v1120
        %v1122 = vand.u32 %v1121, 4294901760
        %1123 = vmatmul.f32.gmra.mxu0 %v1122
        %v1124 = vpop.f32.mrf.mxu0
        %v1125 = vadd.f32 %v1090, %v1124
        %1126 = vdwg.mxu0
        %1127 = vmatpush.msra.mxu0 0.0
        %1128 = vmatpush.msra.mxu0 0.0
        %1129 = vmatpush.msra.mxu0 0.0
        %1130 = vmatpush.msra.mxu0 0.0
        %1131 = vmatpush.msra.mxu0 0.0
        %1132 = vmatpush.msra.mxu0 0.0
        %1133 = vmatpush.msra.mxu0 0.0
        %1134 = vmatpush.msra.mxu0 0.0
        %1135 = vmatpush.msra.mxu0 0.0
        %1136 = vmatpush.msra.mxu0 0.0
        %1137 = vmatpush.msra.mxu0 0.0
        %1138 = vmatpush.msra.mxu0 0.0
        %1139 = vmatpush.msra.mxu0 0.0
        %1140 = vmatpush.msra.mxu0 0.0
        %v1141 = vand.u32 %v1085, 4294901760
        %v1142 = vsub.f32 %v1085, %v1141
        %v1143 = vand.u32 %v1142, 4294901760
        %v1144 = vsub.f32 %v1142, %v1143
        %v1145 = vand.u32 %v1144, 4294901760
        %1146 = vmatpush.msra.mxu0 %v1145
        %v1147 = vand.u32 %v1083, 4294901760
        %v1148 = vsub.f32 %v1083, %v1147
        %v1149 = vand.u32 %v1148, 4294901760
        %v1150 = vsub.f32 %v1148, %v1149
        %v1151 = vand.u32 %v1150, 4294901760
        %1152 = vmatpush.msra.mxu0 %v1151
        %v1153 = vand.u32 %v865, 4294901760
        %1154 = vmatmul.f32.gmra.mxu0 %v1153
        %v1155 = vpop.f32.mrf.mxu0
        %v1156 = vadd.f32 %v1117, %v1155
        %v1157 = vand.u32 %v868, 4294901760
        %1158 = vmatmul.f32.gmra.mxu0 %v1157
        %v1159 = vpop.f32.mrf.mxu0
        %v1160 = vadd.f32 %v1125, %v1159
        %1161 = vdwg.mxu0
        %1162 = vmatpush.msra.mxu0 0.0
        %1163 = vmatpush.msra.mxu0 0.0
        %1164 = vmatpush.msra.mxu0 0.0
        %1165 = vmatpush.msra.mxu0 0.0
        %1166 = vmatpush.msra.mxu0 0.0
        %1167 = vmatpush.msra.mxu0 0.0
        %1168 = vmatpush.msra.mxu0 0.0
        %1169 = vmatpush.msra.mxu0 0.0
        %1170 = vmatpush.msra.mxu0 0.0
        %1171 = vmatpush.msra.mxu0 0.0
        %1172 = vmatpush.msra.mxu0 0.0
        %1173 = vmatpush.msra.mxu0 0.0
        %1174 = vmatpush.msra.mxu0 0.0
        %1175 = vmatpush.msra.mxu0 0.0
        %v1176 = vand.u32 %v1085, 4294901760
        %v1177 = vsub.f32 %v1085, %v1176
        %1178 = vmatpush.msra.mxu0 %v1177
        %v1179 = vand.u32 %v1083, 4294901760
        %v1180 = vsub.f32 %v1083, %v1179
        %1181 = vmatpush.msra.mxu0 %v1180
        %v1182 = vand.u32 %v865, 4294901760
        %v1183 = vsub.f32 %v865, %v1182
        %1184 = vmatmul.f32.gmra.mxu0 %v1183
        %v1185 = vpop.f32.mrf.mxu0
        %v1186 = vadd.f32 %v1156, %v1185
        %v1187 = vand.u32 %v868, 4294901760
        %v1188 = vsub.f32 %v868, %v1187
        %1189 = vmatmul.f32.gmra.mxu0 %v1188
        %v1190 = vpop.f32.mrf.mxu0
        %v1191 = vadd.f32 %v1160, %v1190
        %1192 = vdwg.mxu0
        %1193 = vmatpush.msra.mxu0 0.0
        %1194 = vmatpush.msra.mxu0 0.0
        %1195 = vmatpush.msra.mxu0 0.0
        %1196 = vmatpush.msra.mxu0 0.0
        %1197 = vmatpush.msra.mxu0 0.0
        %1198 = vmatpush.msra.mxu0 0.0
        %1199 = vmatpush.msra.mxu0 0.0
        %1200 = vmatpush.msra.mxu0 0.0
        %1201 = vmatpush.msra.mxu0 0.0
        %1202 = vmatpush.msra.mxu0 0.0
        %1203 = vmatpush.msra.mxu0 0.0
        %1204 = vmatpush.msra.mxu0 0.0
        %1205 = vmatpush.msra.mxu0 0.0
        %1206 = vmatpush.msra.mxu0 0.0
        %v1207 = vand.u32 %v1085, 4294901760
        %1208 = vmatpush.msra.mxu0 %v1207
        %v1209 = vand.u32 %v1083, 4294901760
        %1210 = vmatpush.msra.mxu0 %v1209
        %v1211 = vand.u32 %v865, 4294901760
        %v1212 = vsub.f32 %v865, %v1211
        %v1213 = vand.u32 %v1212, 4294901760
        %1214 = vmatmul.f32.gmra.mxu0 %v1213
        %v1215 = vpop.f32.mrf.mxu0
        %v1216 = vadd.f32 %v1186, %v1215
        %v1217 = vand.u32 %v868, 4294901760
        %v1218 = vsub.f32 %v868, %v1217
        %v1219 = vand.u32 %v1218, 4294901760
        %1220 = vmatmul.f32.gmra.mxu0 %v1219
        %v1221 = vpop.f32.mrf.mxu0
        %v1222 = vadd.f32 %v1191, %v1221
        %1223 = vdwg.mxu0
        %1224 = vmatpush.msra.mxu0 0.0
        %1225 = vmatpush.msra.mxu0 0.0
        %1226 = vmatpush.msra.mxu0 0.0
        %1227 = vmatpush.msra.mxu0 0.0
        %1228 = vmatpush.msra.mxu0 0.0
        %1229 = vmatpush.msra.mxu0 0.0
        %1230 = vmatpush.msra.mxu0 0.0
        %1231 = vmatpush.msra.mxu0 0.0
        %1232 = vmatpush.msra.mxu0 0.0
        %1233 = vmatpush.msra.mxu0 0.0
        %1234 = vmatpush.msra.mxu0 0.0
        %1235 = vmatpush.msra.mxu0 0.0
        %1236 = vmatpush.msra.mxu0 0.0
        %1237 = vmatpush.msra.mxu0 0.0
        %v1238 = vand.u32 %v1085, 4294901760
        %v1239 = vsub.f32 %v1085, %v1238
        %v1240 = vand.u32 %v1239, 4294901760
        %1241 = vmatpush.msra.mxu0 %v1240
        %v1242 = vand.u32 %v1083, 4294901760
        %v1243 = vsub.f32 %v1083, %v1242
        %v1244 = vand.u32 %v1243, 4294901760
        %1245 = vmatpush.msra.mxu0 %v1244
        %v1246 = vand.u32 %v865, 4294901760
        %1247 = vmatmul.f32.gmra.mxu0 %v1246
        %v1248 = vpop.f32.mrf.mxu0
        %v1249 = vadd.f32 %v1216, %v1248
        %v1250 = vand.u32 %v868, 4294901760
        %1251 = vmatmul.f32.gmra.mxu0 %v1250
        %v1252 = vpop.f32.mrf.mxu0
        %v1253 = vadd.f32 %v1222, %v1252
        %1254 = vdwg.mxu0
        %1255 = vmatpush.msra.mxu0 0.0
        %1256 = vmatpush.msra.mxu0 0.0
        %1257 = vmatpush.msra.mxu0 0.0
        %1258 = vmatpush.msra.mxu0 0.0
        %1259 = vmatpush.msra.mxu0 0.0
        %1260 = vmatpush.msra.mxu0 0.0
        %1261 = vmatpush.msra.mxu0 0.0
        %1262 = vmatpush.msra.mxu0 0.0
        %1263 = vmatpush.msra.mxu0 0.0
        %1264 = vmatpush.msra.mxu0 0.0
        %1265 = vmatpush.msra.mxu0 0.0
        %1266 = vmatpush.msra.mxu0 0.0
        %1267 = vmatpush.msra.mxu0 0.0
        %1268 = vmatpush.msra.mxu0 0.0
        %v1269 = vand.u32 %v1085, 4294901760
        %1270 = vmatpush.msra.mxu0 %v1269
        %v1271 = vand.u32 %v1083, 4294901760
        %1272 = vmatpush.msra.mxu0 %v1271
        %v1273 = vand.u32 %v865, 4294901760
        %1274 = vmatmul.f32.gmra.mxu0 %v1273
        %v1275 = vpop.f32.mrf.mxu0
        %v1276 = vadd.f32 %v1249, %v1275
        %v1277 = vand.u32 %v868, 4294901760
        %1278 = vmatmul.f32.gmra.mxu0 %v1277
        %v1279 = vpop.f32.mrf.mxu0
        %v1280 = vadd.f32 %v1253, %v1279
        %1281 = vdwg.mxu0
        %v1282 = vlog2.pop %v1276
        %v1283 = vmul.f32 %v1282, 0.6931472
        %v1284 = vlog2.pop %v1280
        %v1285 = vmul.f32 %v1284, 0.6931472
        %v1286 = vadd.f32 %v1079, %v1283
        %v1287 = vadd.f32 %v1079, %v1285
        %v1288 = vadd.f32 %v1064, %v1286
        %v1289 = vadd.f32 %v1065, %v1287
        %v1290 = vmul.f32 %v1288, 1.442695
        %v1291 = vpow.pop %v1290
        %v1292 = vmul.f32 %v1289, 1.442695
        %v1293 = vpow.pop %v1292
        %s1294 = scalar_lea.vmem [#allocation4], %s856
        %1295 = vst.msk [vmem:[%s1294] sm:$0xff] %vm789, %v1291
        %1296 = vst.msk [vmem:[%s1294 + $0x8] sm:$0xff] %vm789, %v1293
        %vm1297 = vcmask 523271
        %1298 = vst.msk [vmem:[#allocation5 - $0x7] sm:$0x80] %vm1297, %v1065
        %1299 = vst.msk [vmem:[#allocation6 - $0x7] sm:$0x80] %vm1297, %v1287
      $region49: #{tpu_custom_call.1} parent=43 // loop_footer
        %s855 = sadd.s32 1, %s851
      $region50: #{tpu_custom_call.1} parent=43 // loop_footer_branch
        %850 = sbr.rel target = $region46
      $region51: #{tpu_custom_call.1} parent=43 // loop_exit
        _
      %v1300 = vmul.f32 %v312, 0.25
      %v1301 = vmul.f32 %v314, 0.25
      %v1302 = vmul.f32 %v317, 0.25
      %v1303 = vmul.f32 %v319, 0.25
      %v1304 = vmul.f32 %v322, 0.25
      %v1305 = vmul.f32 %v324, 0.25
      %v1306 = vmul.f32 %v327, 0.25
      %v1307 = vmul.f32 %v329, 0.25
      %1316 = vrot.lane.b32.xlu0 %v1300, 112
      %v1317 = vpop.permute.xlu0 %1316
      %1318 = vrot.lane.b32.xlu0 %v1301, 112
      %v1319 = vpop.permute.xlu0 %1318
      %1320 = vrot.lane.b32.xlu0 %v1302, 112
      %v1321 = vpop.permute.xlu0 %1320
      %1322 = vrot.lane.b32.xlu0 %v1303, 112
      %v1323 = vpop.permute.xlu0 %1322
      %1324 = vrot.lane.b32.xlu0 %v1304, 112
      %v1325 = vpop.permute.xlu0 %1324
      %1326 = vrot.lane.b32.xlu0 %v1305, 112
      %v1327 = vpop.permute.xlu0 %1326
      %1328 = vrot.lane.b32.xlu0 %v1306, 112
      %v1329 = vpop.permute.xlu0 %1328
      %1330 = vrot.lane.b32.xlu0 %v1307, 112
      %v1331 = vpop.permute.xlu0 %1330
      %1340 = vrot.lane.b32.xlu0 %v1300, 96
      %v1341 = vpop.permute.xlu0 %1340
      %1342 = vrot.lane.b32.xlu0 %v1301, 96
      %v1343 = vpop.permute.xlu0 %1342
      %1344 = vrot.lane.b32.xlu0 %v1302, 96
      %v1345 = vpop.permute.xlu0 %1344
      %1346 = vrot.lane.b32.xlu0 %v1303, 96
      %v1347 = vpop.permute.xlu0 %1346
      %1348 = vrot.lane.b32.xlu0 %v1304, 96
      %v1349 = vpop.permute.xlu0 %1348
      %1350 = vrot.lane.b32.xlu0 %v1305, 96
      %v1351 = vpop.permute.xlu0 %1350
      %1352 = vrot.lane.b32.xlu0 %v1306, 96
      %v1353 = vpop.permute.xlu0 %1352
      %1354 = vrot.lane.b32.xlu0 %v1307, 96
      %v1355 = vpop.permute.xlu0 %1354
      %1364 = vrot.lane.b32.xlu0 %v1300, 80
      %v1365 = vpop.permute.xlu0 %1364
      %1366 = vrot.lane.b32.xlu0 %v1301, 80
      %v1367 = vpop.permute.xlu0 %1366
      %1368 = vrot.lane.b32.xlu0 %v1302, 80
      %v1369 = vpop.permute.xlu0 %1368
      %1370 = vrot.lane.b32.xlu0 %v1303, 80
      %v1371 = vpop.permute.xlu0 %1370
      %1372 = vrot.lane.b32.xlu0 %v1304, 80
      %v1373 = vpop.permute.xlu0 %1372
      %1374 = vrot.lane.b32.xlu0 %v1305, 80
      %v1375 = vpop.permute.xlu0 %1374
      %1376 = vrot.lane.b32.xlu0 %v1306, 80
      %v1377 = vpop.permute.xlu0 %1376
      %1378 = vrot.lane.b32.xlu0 %v1307, 80
      %v1379 = vpop.permute.xlu0 %1378
      %v1388 = vpack.c.bf16 %v1300, %v1300
      %v1389 = vpack.c.bf16 %v1301, %v1301
      %v1390 = vpack.c.bf16 %v1302, %v1302
      %v1391 = vpack.c.bf16 %v1303, %v1303
      %v1392 = vpack.c.bf16 %v1304, %v1304
      %v1393 = vpack.c.bf16 %v1305, %v1305
      %v1394 = vpack.c.bf16 %v1306, %v1306
      %v1395 = vpack.c.bf16 %v1307, %v1307
      %v1396 = vpack.c.bf16 %v1317, %v1317
      %v1397 = vpack.c.bf16 %v1319, %v1319
      %v1398 = vpack.c.bf16 %v1321, %v1321
      %v1399 = vpack.c.bf16 %v1323, %v1323
      %v1400 = vpack.c.bf16 %v1325, %v1325
      %v1401 = vpack.c.bf16 %v1327, %v1327
      %v1402 = vpack.c.bf16 %v1329, %v1329
      %v1403 = vpack.c.bf16 %v1331, %v1331
      %v1404 = vpack.c.bf16 %v1341, %v1341
      %v1405 = vpack.c.bf16 %v1343, %v1343
      %v1406 = vpack.c.bf16 %v1345, %v1345
      %v1407 = vpack.c.bf16 %v1347, %v1347
      %v1408 = vpack.c.bf16 %v1349, %v1349
      %v1409 = vpack.c.bf16 %v1351, %v1351
      %v1410 = vpack.c.bf16 %v1353, %v1353
      %v1411 = vpack.c.bf16 %v1355, %v1355
      %v1412 = vpack.c.bf16 %v1365, %v1365
      %v1413 = vpack.c.bf16 %v1367, %v1367
      %v1414 = vpack.c.bf16 %v1369, %v1369
      %v1415 = vpack.c.bf16 %v1371, %v1371
      %v1416 = vpack.c.bf16 %v1373, %v1373
      %v1417 = vpack.c.bf16 %v1375, %v1375
      %v1418 = vpack.c.bf16 %v1377, %v1377
      %v1419 = vpack.c.bf16 %v1379, %v1379
      %1428 = vrot.lane.b32.xlu0 %v312, 112
      %v1429 = vpop.permute.xlu0 %1428
      %1430 = vrot.lane.b32.xlu0 %v314, 112
      %v1431 = vpop.permute.xlu0 %1430
      %1432 = vrot.lane.b32.xlu0 %v317, 112
      %v1433 = vpop.permute.xlu0 %1432
      %1434 = vrot.lane.b32.xlu0 %v319, 112
      %v1435 = vpop.permute.xlu0 %1434
      %1436 = vrot.lane.b32.xlu0 %v322, 112
      %v1437 = vpop.permute.xlu0 %1436
      %1438 = vrot.lane.b32.xlu0 %v324, 112
      %v1439 = vpop.permute.xlu0 %1438
      %1440 = vrot.lane.b32.xlu0 %v327, 112
      %v1441 = vpop.permute.xlu0 %1440
      %1442 = vrot.lane.b32.xlu0 %v329, 112
      %v1443 = vpop.permute.xlu0 %1442
      %1452 = vrot.lane.b32.xlu0 %v312, 96
      %v1453 = vpop.permute.xlu0 %1452
      %1454 = vrot.lane.b32.xlu0 %v314, 96
      %v1455 = vpop.permute.xlu0 %1454
      %1456 = vrot.lane.b32.xlu0 %v317, 96
      %v1457 = vpop.permute.xlu0 %1456
      %1458 = vrot.lane.b32.xlu0 %v319, 96
      %v1459 = vpop.permute.xlu0 %1458
      %1460 = vrot.lane.b32.xlu0 %v322, 96
      %v1461 = vpop.permute.xlu0 %1460
      %1462 = vrot.lane.b32.xlu0 %v324, 96
      %v1463 = vpop.permute.xlu0 %1462
      %1464 = vrot.lane.b32.xlu0 %v327, 96
      %v1465 = vpop.permute.xlu0 %1464
      %1466 = vrot.lane.b32.xlu0 %v329, 96
      %v1467 = vpop.permute.xlu0 %1466
      %1476 = vrot.lane.b32.xlu0 %v312, 80
      %v1477 = vpop.permute.xlu0 %1476
      %1478 = vrot.lane.b32.xlu0 %v314, 80
      %v1479 = vpop.permute.xlu0 %1478
      %1480 = vrot.lane.b32.xlu0 %v317, 80
      %v1481 = vpop.permute.xlu0 %1480
      %1482 = vrot.lane.b32.xlu0 %v319, 80
      %v1483 = vpop.permute.xlu0 %1482
      %1484 = vrot.lane.b32.xlu0 %v322, 80
      %v1485 = vpop.permute.xlu0 %1484
      %1486 = vrot.lane.b32.xlu0 %v324, 80
      %v1487 = vpop.permute.xlu0 %1486
      %1488 = vrot.lane.b32.xlu0 %v327, 80
      %v1489 = vpop.permute.xlu0 %1488
      %1490 = vrot.lane.b32.xlu0 %v329, 80
      %v1491 = vpop.permute.xlu0 %1490
      %v1500 = vpack.c.bf16 %v312, %v312
      %v1501 = vpack.c.bf16 %v314, %v314
      %v1502 = vpack.c.bf16 %v317, %v317
      %v1503 = vpack.c.bf16 %v319, %v319
      %v1504 = vpack.c.bf16 %v322, %v322
      %v1505 = vpack.c.bf16 %v324, %v324
      %v1506 = vpack.c.bf16 %v327, %v327
      %v1507 = vpack.c.bf16 %v329, %v329
      %v1508 = vpack.c.bf16 %v1429, %v1429
      %v1509 = vpack.c.bf16 %v1431, %v1431
      %v1510 = vpack.c.bf16 %v1433, %v1433
      %v1511 = vpack.c.bf16 %v1435, %v1435
      %v1512 = vpack.c.bf16 %v1437, %v1437
      %v1513 = vpack.c.bf16 %v1439, %v1439
      %v1514 = vpack.c.bf16 %v1441, %v1441
      %v1515 = vpack.c.bf16 %v1443, %v1443
      %v1516 = vpack.c.bf16 %v1453, %v1453
      %v1517 = vpack.c.bf16 %v1455, %v1455
      %v1518 = vpack.c.bf16 %v1457, %v1457
      %v1519 = vpack.c.bf16 %v1459, %v1459
      %v1520 = vpack.c.bf16 %v1461, %v1461
      %v1521 = vpack.c.bf16 %v1463, %v1463
      %v1522 = vpack.c.bf16 %v1465, %v1465
      %v1523 = vpack.c.bf16 %v1467, %v1467
      %v1524 = vpack.c.bf16 %v1477, %v1477
      %v1525 = vpack.c.bf16 %v1479, %v1479
      %v1526 = vpack.c.bf16 %v1481, %v1481
      %v1527 = vpack.c.bf16 %v1483, %v1483
      %v1528 = vpack.c.bf16 %v1485, %v1485
      %v1529 = vpack.c.bf16 %v1487, %v1487
      %v1530 = vpack.c.bf16 %v1489, %v1489
      %v1531 = vpack.c.bf16 %v1491, %v1491
      %1540 = vrot.lane.b32.xlu0 %v341, 112
      %v1541 = vpop.permute.xlu0 %1540
      %1542 = vrot.lane.b32.xlu0 %v343, 112
      %v1543 = vpop.permute.xlu0 %1542
      %1544 = vrot.lane.b32.xlu0 %v346, 112
      %v1545 = vpop.permute.xlu0 %1544
      %1546 = vrot.lane.b32.xlu0 %v348, 112
      %v1547 = vpop.permute.xlu0 %1546
      %1548 = vrot.lane.b32.xlu0 %v351, 112
      %v1549 = vpop.permute.xlu0 %1548
      %1550 = vrot.lane.b32.xlu0 %v353, 112
      %v1551 = vpop.permute.xlu0 %1550
      %1552 = vrot.lane.b32.xlu0 %v356, 112
      %v1553 = vpop.permute.xlu0 %1552
      %1554 = vrot.lane.b32.xlu0 %v358, 112
      %v1555 = vpop.permute.xlu0 %1554
      %1564 = vrot.lane.b32.xlu0 %v341, 96
      %v1565 = vpop.permute.xlu0 %1564
      %1566 = vrot.lane.b32.xlu0 %v343, 96
      %v1567 = vpop.permute.xlu0 %1566
      %1568 = vrot.lane.b32.xlu0 %v346, 96
      %v1569 = vpop.permute.xlu0 %1568
      %1570 = vrot.lane.b32.xlu0 %v348, 96
      %v1571 = vpop.permute.xlu0 %1570
      %1572 = vrot.lane.b32.xlu0 %v351, 96
      %v1573 = vpop.permute.xlu0 %1572
      %1574 = vrot.lane.b32.xlu0 %v353, 96
      %v1575 = vpop.permute.xlu0 %1574
      %1576 = vrot.lane.b32.xlu0 %v356, 96
      %v1577 = vpop.permute.xlu0 %1576
      %1578 = vrot.lane.b32.xlu0 %v358, 96
      %v1579 = vpop.permute.xlu0 %1578
      %1588 = vrot.lane.b32.xlu0 %v341, 80
      %v1589 = vpop.permute.xlu0 %1588
      %1590 = vrot.lane.b32.xlu0 %v343, 80
      %v1591 = vpop.permute.xlu0 %1590
      %1592 = vrot.lane.b32.xlu0 %v346, 80
      %v1593 = vpop.permute.xlu0 %1592
      %1594 = vrot.lane.b32.xlu0 %v348, 80
      %v1595 = vpop.permute.xlu0 %1594
      %1596 = vrot.lane.b32.xlu0 %v351, 80
      %v1597 = vpop.permute.xlu0 %1596
      %1598 = vrot.lane.b32.xlu0 %v353, 80
      %v1599 = vpop.permute.xlu0 %1598
      %1600 = vrot.lane.b32.xlu0 %v356, 80
      %v1601 = vpop.permute.xlu0 %1600
      %1602 = vrot.lane.b32.xlu0 %v358, 80
      %v1603 = vpop.permute.xlu0 %1602
      %v1612 = vpack.c.bf16 %v341, %v341
      %v1613 = vpack.c.bf16 %v343, %v343
      %v1614 = vpack.c.bf16 %v346, %v346
      %v1615 = vpack.c.bf16 %v348, %v348
      %v1616 = vpack.c.bf16 %v351, %v351
      %v1617 = vpack.c.bf16 %v353, %v353
      %v1618 = vpack.c.bf16 %v356, %v356
      %v1619 = vpack.c.bf16 %v358, %v358
      %v1620 = vpack.c.bf16 %v1541, %v1541
      %v1621 = vpack.c.bf16 %v1543, %v1543
      %v1622 = vpack.c.bf16 %v1545, %v1545
      %v1623 = vpack.c.bf16 %v1547, %v1547
      %v1624 = vpack.c.bf16 %v1549, %v1549
      %v1625 = vpack.c.bf16 %v1551, %v1551
      %v1626 = vpack.c.bf16 %v1553, %v1553
      %v1627 = vpack.c.bf16 %v1555, %v1555
      %v1628 = vpack.c.bf16 %v1565, %v1565
      %v1629 = vpack.c.bf16 %v1567, %v1567
      %v1630 = vpack.c.bf16 %v1569, %v1569
      %v1631 = vpack.c.bf16 %v1571, %v1571
      %v1632 = vpack.c.bf16 %v1573, %v1573
      %v1633 = vpack.c.bf16 %v1575, %v1575
      %v1634 = vpack.c.bf16 %v1577, %v1577
      %v1635 = vpack.c.bf16 %v1579, %v1579
      %v1636 = vpack.c.bf16 %v1589, %v1589
      %v1637 = vpack.c.bf16 %v1591, %v1591
      %v1638 = vpack.c.bf16 %v1593, %v1593
      %v1639 = vpack.c.bf16 %v1595, %v1595
      %v1640 = vpack.c.bf16 %v1597, %v1597
      %v1641 = vpack.c.bf16 %v1599, %v1599
      %v1642 = vpack.c.bf16 %v1601, %v1601
      %v1643 = vpack.c.bf16 %v1603, %v1603
      %v1644 = vld [vmem:[#allocation4] sm:$0xff]
      %v1645 = vld [vmem:[#allocation4 + $0x8] sm:$0xff]
      %v1646 = vld [vmem:[#allocation4 + $0x10] sm:$0xff]
      %v1647 = vld [vmem:[#allocation4 + $0x18] sm:$0xff]
      %v1648 = vld [vmem:[#allocation4 + $0x20] sm:$0xff]
      %v1649 = vld [vmem:[#allocation4 + $0x28] sm:$0xff]
      %v1650 = vld [vmem:[#allocation4 + $0x30] sm:$0xff]
      %v1651 = vld [vmem:[#allocation4 + $0x38] sm:$0xff]
      %1660 = vrot.lane.b32.xlu0 %v1644, 112
      %v1661 = vpop.permute.xlu0 %1660
      %1662 = vrot.lane.b32.xlu0 %v1645, 112
      %v1663 = vpop.permute.xlu0 %1662
      %1664 = vrot.lane.b32.xlu0 %v1646, 112
      %v1665 = vpop.permute.xlu0 %1664
      %1666 = vrot.lane.b32.xlu0 %v1647, 112
      %v1667 = vpop.permute.xlu0 %1666
      %1668 = vrot.lane.b32.xlu0 %v1648, 112
      %v1669 = vpop.permute.xlu0 %1668
      %1670 = vrot.lane.b32.xlu0 %v1649, 112
      %v1671 = vpop.permute.xlu0 %1670
      %1672 = vrot.lane.b32.xlu0 %v1650, 112
      %v1673 = vpop.permute.xlu0 %1672
      %1674 = vrot.lane.b32.xlu0 %v1651, 112
      %v1675 = vpop.permute.xlu0 %1674
      %1684 = vrot.lane.b32.xlu0 %v1644, 96
      %v1685 = vpop.permute.xlu0 %1684
      %1686 = vrot.lane.b32.xlu0 %v1645, 96
      %v1687 = vpop.permute.xlu0 %1686
      %1688 = vrot.lane.b32.xlu0 %v1646, 96
      %v1689 = vpop.permute.xlu0 %1688
      %1690 = vrot.lane.b32.xlu0 %v1647, 96
      %v1691 = vpop.permute.xlu0 %1690
      %1692 = vrot.lane.b32.xlu0 %v1648, 96
      %v1693 = vpop.permute.xlu0 %1692
      %1694 = vrot.lane.b32.xlu0 %v1649, 96
      %v1695 = vpop.permute.xlu0 %1694
      %1696 = vrot.lane.b32.xlu0 %v1650, 96
      %v1697 = vpop.permute.xlu0 %1696
      %1698 = vrot.lane.b32.xlu0 %v1651, 96
      %v1699 = vpop.permute.xlu0 %1698
      %1708 = vrot.lane.b32.xlu0 %v1644, 80
      %v1709 = vpop.permute.xlu0 %1708
      %1710 = vrot.lane.b32.xlu0 %v1645, 80
      %v1711 = vpop.permute.xlu0 %1710
      %1712 = vrot.lane.b32.xlu0 %v1646, 80
      %v1713 = vpop.permute.xlu0 %1712
      %1714 = vrot.lane.b32.xlu0 %v1647, 80
      %v1715 = vpop.permute.xlu0 %1714
      %1716 = vrot.lane.b32.xlu0 %v1648, 80
      %v1717 = vpop.permute.xlu0 %1716
      %1718 = vrot.lane.b32.xlu0 %v1649, 80
      %v1719 = vpop.permute.xlu0 %1718
      %1720 = vrot.lane.b32.xlu0 %v1650, 80
      %v1721 = vpop.permute.xlu0 %1720
      %1722 = vrot.lane.b32.xlu0 %v1651, 80
      %v1723 = vpop.permute.xlu0 %1722
      %v1740 = vunpack.c.l.b16 %v1388
      %v1741 = vunpack.c.l.b16 %v1389
      %v1742 = vunpack.c.l.b16 %v1390
      %v1743 = vunpack.c.l.b16 %v1391
      %v1744 = vunpack.c.l.b16 %v1392
      %v1745 = vunpack.c.l.b16 %v1393
      %v1746 = vunpack.c.l.b16 %v1394
      %v1747 = vunpack.c.l.b16 %v1395
      %v1748 = vpack.c.b16 %v1741, %v1740
      %v1749 = vpack.c.b16 %v1743, %v1742
      %v1750 = vpack.c.b16 %v1745, %v1744
      %v1751 = vpack.c.b16 %v1747, %v1746
      %v1760 = vunpack.c.l.b16 %v1500
      %v1761 = vunpack.c.l.b16 %v1501
      %v1762 = vunpack.c.l.b16 %v1502
      %v1763 = vunpack.c.l.b16 %v1503
      %v1764 = vunpack.c.l.b16 %v1504
      %v1765 = vunpack.c.l.b16 %v1505
      %v1766 = vunpack.c.l.b16 %v1506
      %v1767 = vunpack.c.l.b16 %v1507
      %v1768 = vpack.c.b16 %v1761, %v1760
      %v1769 = vpack.c.b16 %v1763, %v1762
      %v1770 = vpack.c.b16 %v1765, %v1764
      %v1771 = vpack.c.b16 %v1767, %v1766
      %1772 = vrot.lane.b32.xlu0 %v1768, 64
      %v1773 = vpop.permute.xlu0 %1772
      %1774 = vrot.lane.b32.xlu0 %v1769, 64
      %v1775 = vpop.permute.xlu0 %1774
      %1776 = vrot.lane.b32.xlu0 %v1770, 64
      %v1777 = vpop.permute.xlu0 %1776
      %1778 = vrot.lane.b32.xlu0 %v1771, 64
      %v1779 = vpop.permute.xlu0 %1778
      %vm1780 = vcmask 130048
      %v1782 = vsel %vm1780, %v1748, 0
      %v1785 = vsel %vm1780, %v1749, 0
      %v1788 = vsel %vm1780, %v1750, 0
      %v1791 = vsel %vm1780, %v1751, 0
      %v1794 = vsel %vm1780, %v1773, 0
      %v1797 = vsel %vm1780, %v1775, 0
      %v1800 = vsel %vm1780, %v1777, 0
      %v1803 = vsel %vm1780, %v1779, 0
      %1805 = vmatpush.bf16.xpose.msra.mxu0 0
      %1806 = vmatpush.bf16.xpose.msra.mxu0 0
      %1807 = vmatpush.bf16.xpose.msra.mxu0 0
      %1808 = vmatpush.bf16.xpose.msra.mxu0 0
      %1809 = vmatpush.bf16.xpose.msra.mxu0 %v1803
      %1810 = vmatpush.bf16.xpose.msra.mxu0 %v1800
      %1811 = vmatpush.bf16.xpose.msra.mxu0 %v1797
      %1812 = vmatpush.bf16.xpose.msra.mxu0 %v1794
      %1813 = vmatmul.bf16.gmra.mxu0 %v1782
      %v1814 = vpop.f32.mrf.mxu0
      %v1815 = vadd.f32 0.0, %v1814
      %v1816 = vpop.f32.mrf.mxu0
      %v1817 = vadd.f32 0.0, %v1816
      %1818 = vmatmul.bf16.gmra.mxu0 %v1785
      %v1819 = vpop.f32.mrf.mxu0
      %v1820 = vadd.f32 0.0, %v1819
      %v1821 = vpop.f32.mrf.mxu0
      %v1822 = vadd.f32 0.0, %v1821
      %1823 = vmatmul.bf16.gmra.mxu0 %v1788
      %v1824 = vpop.f32.mrf.mxu0
      %v1825 = vadd.f32 0.0, %v1824
      %v1826 = vpop.f32.mrf.mxu0
      %v1827 = vadd.f32 0.0, %v1826
      %1828 = vmatmul.bf16.gmra.mxu0 %v1791
      %v1829 = vpop.f32.mrf.mxu0
      %v1830 = vadd.f32 0.0, %v1829
      %v1831 = vpop.f32.mrf.mxu0
      %v1832 = vadd.f32 0.0, %v1831
      %1833 = vdwg.mxu0
      %v1842 = vunpack.c.l.b16 %v1396
      %v1843 = vunpack.c.l.b16 %v1397
      %v1844 = vunpack.c.l.b16 %v1398
      %v1845 = vunpack.c.l.b16 %v1399
      %v1846 = vunpack.c.l.b16 %v1400
      %v1847 = vunpack.c.l.b16 %v1401
      %v1848 = vunpack.c.l.b16 %v1402
      %v1849 = vunpack.c.l.b16 %v1403
      %v1850 = vpack.c.b16 %v1843, %v1842
      %v1851 = vpack.c.b16 %v1845, %v1844
      %v1852 = vpack.c.b16 %v1847, %v1846
      %v1853 = vpack.c.b16 %v1849, %v1848
      %v1862 = vunpack.c.l.b16 %v1508
      %v1863 = vunpack.c.l.b16 %v1509
      %v1864 = vunpack.c.l.b16 %v1510
      %v1865 = vunpack.c.l.b16 %v1511
      %v1866 = vunpack.c.l.b16 %v1512
      %v1867 = vunpack.c.l.b16 %v1513
      %v1868 = vunpack.c.l.b16 %v1514
      %v1869 = vunpack.c.l.b16 %v1515
      %v1870 = vpack.c.b16 %v1863, %v1862
      %v1871 = vpack.c.b16 %v1865, %v1864
      %v1872 = vpack.c.b16 %v1867, %v1866
      %v1873 = vpack.c.b16 %v1869, %v1868
      %1874 = vrot.lane.b32.xlu0 %v1870, 64
      %v1875 = vpop.permute.xlu0 %1874
      %1876 = vrot.lane.b32.xlu0 %v1871, 64
      %v1877 = vpop.permute.xlu0 %1876
      %1878 = vrot.lane.b32.xlu0 %v1872, 64
      %v1879 = vpop.permute.xlu0 %1878
      %1880 = vrot.lane.b32.xlu0 %v1873, 64
      %v1881 = vpop.permute.xlu0 %1880
      %v1883 = vsel %vm1780, %v1850, 0
      %v1886 = vsel %vm1780, %v1851, 0
      %v1889 = vsel %vm1780, %v1852, 0
      %v1892 = vsel %vm1780, %v1853, 0
      %v1895 = vsel %vm1780, %v1875, 0
      %v1898 = vsel %vm1780, %v1877, 0
      %v1901 = vsel %vm1780, %v1879, 0
      %v1904 = vsel %vm1780, %v1881, 0
      %1906 = vmatpush.bf16.xpose.msra.mxu0 0
      %1907 = vmatpush.bf16.xpose.msra.mxu0 0
      %1908 = vmatpush.bf16.xpose.msra.mxu0 0
      %1909 = vmatpush.bf16.xpose.msra.mxu0 0
      %1910 = vmatpush.bf16.xpose.msra.mxu0 %v1904
      %1911 = vmatpush.bf16.xpose.msra.mxu0 %v1901
      %1912 = vmatpush.bf16.xpose.msra.mxu0 %v1898
      %1913 = vmatpush.bf16.xpose.msra.mxu0 %v1895
      %1914 = vmatmul.bf16.gmra.mxu0 %v1883
      %v1915 = vpop.f32.mrf.mxu0
      %v1916 = vadd.f32 0.0, %v1915
      %v1917 = vpop.f32.mrf.mxu0
      %v1918 = vadd.f32 0.0, %v1917
      %1919 = vmatmul.bf16.gmra.mxu0 %v1886
      %v1920 = vpop.f32.mrf.mxu0
      %v1921 = vadd.f32 0.0, %v1920
      %v1922 = vpop.f32.mrf.mxu0
      %v1923 = vadd.f32 0.0, %v1922
      %1924 = vmatmul.bf16.gmra.mxu0 %v1889
      %v1925 = vpop.f32.mrf.mxu0
      %v1926 = vadd.f32 0.0, %v1925
      %v1927 = vpop.f32.mrf.mxu0
      %v1928 = vadd.f32 0.0, %v1927
      %1929 = vmatmul.bf16.gmra.mxu0 %v1892
      %v1930 = vpop.f32.mrf.mxu0
      %v1931 = vadd.f32 0.0, %v1930
      %v1932 = vpop.f32.mrf.mxu0
      %v1933 = vadd.f32 0.0, %v1932
      %1934 = vdwg.mxu0
      %v1943 = vunpack.c.l.b16 %v1404
      %v1944 = vunpack.c.l.b16 %v1405
      %v1945 = vunpack.c.l.b16 %v1406
      %v1946 = vunpack.c.l.b16 %v1407
      %v1947 = vunpack.c.l.b16 %v1408
      %v1948 = vunpack.c.l.b16 %v1409
      %v1949 = vunpack.c.l.b16 %v1410
      %v1950 = vunpack.c.l.b16 %v1411
      %v1951 = vpack.c.b16 %v1944, %v1943
      %v1952 = vpack.c.b16 %v1946, %v1945
      %v1953 = vpack.c.b16 %v1948, %v1947
      %v1954 = vpack.c.b16 %v1950, %v1949
      %v1963 = vunpack.c.l.b16 %v1516
      %v1964 = vunpack.c.l.b16 %v1517
      %v1965 = vunpack.c.l.b16 %v1518
      %v1966 = vunpack.c.l.b16 %v1519
      %v1967 = vunpack.c.l.b16 %v1520
      %v1968 = vunpack.c.l.b16 %v1521
      %v1969 = vunpack.c.l.b16 %v1522
      %v1970 = vunpack.c.l.b16 %v1523
      %v1971 = vpack.c.b16 %v1964, %v1963
      %v1972 = vpack.c.b16 %v1966, %v1965
      %v1973 = vpack.c.b16 %v1968, %v1967
      %v1974 = vpack.c.b16 %v1970, %v1969
      %1975 = vrot.lane.b32.xlu0 %v1971, 64
      %v1976 = vpop.permute.xlu0 %1975
      %1977 = vrot.lane.b32.xlu0 %v1972, 64
      %v1978 = vpop.permute.xlu0 %1977
      %1979 = vrot.lane.b32.xlu0 %v1973, 64
      %v1980 = vpop.permute.xlu0 %1979
      %1981 = vrot.lane.b32.xlu0 %v1974, 64
      %v1982 = vpop.permute.xlu0 %1981
      %v1984 = vsel %vm1780, %v1951, 0
      %v1987 = vsel %vm1780, %v1952, 0
      %v1990 = vsel %vm1780, %v1953, 0
      %v1993 = vsel %vm1780, %v1954, 0
      %v1996 = vsel %vm1780, %v1976, 0
      %v1999 = vsel %vm1780, %v1978, 0
      %v2002 = vsel %vm1780, %v1980, 0
      %v2005 = vsel %vm1780, %v1982, 0
      %2007 = vmatpush.bf16.xpose.msra.mxu0 0
      %2008 = vmatpush.bf16.xpose.msra.mxu0 0
      %2009 = vmatpush.bf16.xpose.msra.mxu0 0
      %2010 = vmatpush.bf16.xpose.msra.mxu0 0
      %2011 = vmatpush.bf16.xpose.msra.mxu0 %v2005
      %2012 = vmatpush.bf16.xpose.msra.mxu0 %v2002
      %2013 = vmatpush.bf16.xpose.msra.mxu0 %v1999
      %2014 = vmatpush.bf16.xpose.msra.mxu0 %v1996
      %2015 = vmatmul.bf16.gmra.mxu0 %v1984
      %v2016 = vpop.f32.mrf.mxu0
      %v2017 = vadd.f32 0.0, %v2016
      %v2018 = vpop.f32.mrf.mxu0
      %v2019 = vadd.f32 0.0, %v2018
      %2020 = vmatmul.bf16.gmra.mxu0 %v1987
      %v2021 = vpop.f32.mrf.mxu0
      %v2022 = vadd.f32 0.0, %v2021
      %v2023 = vpop.f32.mrf.mxu0
      %v2024 = vadd.f32 0.0, %v2023
      %2025 = vmatmul.bf16.gmra.mxu0 %v1990
      %v2026 = vpop.f32.mrf.mxu0
      %v2027 = vadd.f32 0.0, %v2026
      %v2028 = vpop.f32.mrf.mxu0
      %v2029 = vadd.f32 0.0, %v2028
      %2030 = vmatmul.bf16.gmra.mxu0 %v1993
      %v2031 = vpop.f32.mrf.mxu0
      %v2032 = vadd.f32 0.0, %v2031
      %v2033 = vpop.f32.mrf.mxu0
      %v2034 = vadd.f32 0.0, %v2033
      %2035 = vdwg.mxu0
      %v2044 = vunpack.c.l.b16 %v1412
      %v2045 = vunpack.c.l.b16 %v1413
      %v2046 = vunpack.c.l.b16 %v1414
      %v2047 = vunpack.c.l.b16 %v1415
      %v2048 = vunpack.c.l.b16 %v1416
      %v2049 = vunpack.c.l.b16 %v1417
      %v2050 = vunpack.c.l.b16 %v1418
      %v2051 = vunpack.c.l.b16 %v1419
      %v2052 = vpack.c.b16 %v2045, %v2044
      %v2053 = vpack.c.b16 %v2047, %v2046
      %v2054 = vpack.c.b16 %v2049, %v2048
      %v2055 = vpack.c.b16 %v2051, %v2050
      %v2064 = vunpack.c.l.b16 %v1524
      %v2065 = vunpack.c.l.b16 %v1525
      %v2066 = vunpack.c.l.b16 %v1526
      %v2067 = vunpack.c.l.b16 %v1527
      %v2068 = vunpack.c.l.b16 %v1528
      %v2069 = vunpack.c.l.b16 %v1529
      %v2070 = vunpack.c.l.b16 %v1530
      %v2071 = vunpack.c.l.b16 %v1531
      %v2072 = vpack.c.b16 %v2065, %v2064
      %v2073 = vpack.c.b16 %v2067, %v2066
      %v2074 = vpack.c.b16 %v2069, %v2068
      %v2075 = vpack.c.b16 %v2071, %v2070
      %2076 = vrot.lane.b32.xlu0 %v2072, 64
      %v2077 = vpop.permute.xlu0 %2076
      %2078 = vrot.lane.b32.xlu0 %v2073, 64
      %v2079 = vpop.permute.xlu0 %2078
      %2080 = vrot.lane.b32.xlu0 %v2074, 64
      %v2081 = vpop.permute.xlu0 %2080
      %2082 = vrot.lane.b32.xlu0 %v2075, 64
      %v2083 = vpop.permute.xlu0 %2082
      %v2085 = vsel %vm1780, %v2052, 0
      %v2088 = vsel %vm1780, %v2053, 0
      %v2091 = vsel %vm1780, %v2054, 0
      %v2094 = vsel %vm1780, %v2055, 0
      %v2097 = vsel %vm1780, %v2077, 0
      %v2100 = vsel %vm1780, %v2079, 0
      %v2103 = vsel %vm1780, %v2081, 0
      %v2106 = vsel %vm1780, %v2083, 0
      %2108 = vmatpush.bf16.xpose.msra.mxu0 0
      %2109 = vmatpush.bf16.xpose.msra.mxu0 0
      %2110 = vmatpush.bf16.xpose.msra.mxu0 0
      %2111 = vmatpush.bf16.xpose.msra.mxu0 0
      %2112 = vmatpush.bf16.xpose.msra.mxu0 %v2106
      %2113 = vmatpush.bf16.xpose.msra.mxu0 %v2103
      %2114 = vmatpush.bf16.xpose.msra.mxu0 %v2100
      %2115 = vmatpush.bf16.xpose.msra.mxu0 %v2097
      %2116 = vmatmul.bf16.gmra.mxu0 %v2085
      %v2117 = vpop.f32.mrf.mxu0
      %v2118 = vadd.f32 0.0, %v2117
      %v2119 = vpop.f32.mrf.mxu0
      %v2120 = vadd.f32 0.0, %v2119
      %2121 = vmatmul.bf16.gmra.mxu0 %v2088
      %v2122 = vpop.f32.mrf.mxu0
      %v2123 = vadd.f32 0.0, %v2122
      %v2124 = vpop.f32.mrf.mxu0
      %v2125 = vadd.f32 0.0, %v2124
      %2126 = vmatmul.bf16.gmra.mxu0 %v2091
      %v2127 = vpop.f32.mrf.mxu0
      %v2128 = vadd.f32 0.0, %v2127
      %v2129 = vpop.f32.mrf.mxu0
      %v2130 = vadd.f32 0.0, %v2129
      %2131 = vmatmul.bf16.gmra.mxu0 %v2094
      %v2132 = vpop.f32.mrf.mxu0
      %v2133 = vadd.f32 0.0, %v2132
      %v2134 = vpop.f32.mrf.mxu0
      %v2135 = vadd.f32 0.0, %v2134
      %2136 = vdwg.mxu0
      %v2137 = vadd.s32 %v842, 16
      %v2138 = vadd.s32 %v842, 24
      %v2139 = vadd.s32 %v842, 32
      %v2140 = vadd.s32 %v842, 40
      %v2141 = vadd.s32 %v842, 48
      %v2142 = vadd.s32 %v842, 56
      %vm2143 = vcmp.ge.s32.totalorder %v2137, %v845
      %vm2144 = vcmp.ge.s32.totalorder %v2138, %v845
      %vm2145 = vcmp.ge.s32.totalorder %v2139, %v845
      %vm2146 = vcmp.ge.s32.totalorder %v2140, %v845
      %vm2147 = vcmp.ge.s32.totalorder %v2141, %v845
      %vm2148 = vcmp.ge.s32.totalorder %v2142, %v845
      %v2149 = vsel %vm846, 1, 0
      %v2150 = vsel %vm847, 1, 0
      %v2151 = vsel %vm2143, 1, 0
      %v2152 = vsel %vm2144, 1, 0
      %v2153 = vsel %vm2145, 1, 0
      %v2154 = vsel %vm2146, 1, 0
      %v2155 = vsel %vm2147, 1, 0
      %v2156 = vsel %vm2148, 1, 0
      %vm2157 = vcmp.eq.s32.totalorder %v2149, 1
      %vm2158 = vcmp.eq.s32.totalorder %v2150, 1
      %vm2159 = vcmp.eq.s32.totalorder %v2151, 1
      %vm2160 = vcmp.eq.s32.totalorder %v2152, 1
      %vm2161 = vcmp.eq.s32.totalorder %v2153, 1
      %vm2162 = vcmp.eq.s32.totalorder %v2154, 1
      %vm2163 = vcmp.eq.s32.totalorder %v2155, 1
      %vm2164 = vcmp.eq.s32.totalorder %v2156, 1
      %v2165 = vsel %vm2157, %v1815, -1e+30
      %v2166 = vsel %vm2158, %v1817, -1e+30
      %v2167 = vsel %vm2159, %v1820, -1e+30
      %v2168 = vsel %vm2160, %v1822, -1e+30
      %v2169 = vsel %vm2161, %v1825, -1e+30
      %v2170 = vsel %vm2162, %v1827, -1e+30
      %v2171 = vsel %vm2163, %v1830, -1e+30
      %v2172 = vsel %vm2164, %v1832, -1e+30
      %v2173 = vsel %vm2157, %v1916, -1e+30
      %v2174 = vsel %vm2158, %v1918, -1e+30
      %v2175 = vsel %vm2159, %v1921, -1e+30
      %v2176 = vsel %vm2160, %v1923, -1e+30
      %v2177 = vsel %vm2161, %v1926, -1e+30
      %v2178 = vsel %vm2162, %v1928, -1e+30
      %v2179 = vsel %vm2163, %v1931, -1e+30
      %v2180 = vsel %vm2164, %v1933, -1e+30
      %v2181 = vsel %vm2157, %v2017, -1e+30
      %v2182 = vsel %vm2158, %v2019, -1e+30
      %v2183 = vsel %vm2159, %v2022, -1e+30
      %v2184 = vsel %vm2160, %v2024, -1e+30
      %v2185 = vsel %vm2161, %v2027, -1e+30
      %v2186 = vsel %vm2162, %v2029, -1e+30
      %v2187 = vsel %vm2163, %v2032, -1e+30
      %v2188 = vsel %vm2164, %v2034, -1e+30
      %v2189 = vsel %vm2157, %v2118, -1e+30
      %v2190 = vsel %vm2158, %v2120, -1e+30
      %v2191 = vsel %vm2159, %v2123, -1e+30
      %v2192 = vsel %vm2160, %v2125, -1e+30
      %v2193 = vsel %vm2161, %v2128, -1e+30
      %v2194 = vsel %vm2162, %v2130, -1e+30
      %v2195 = vsel %vm2163, %v2133, -1e+30
      %v2196 = vsel %vm2164, %v2135, -1e+30
      %v2197 = vsel %vm789, %v2165, -inf
      %2198 = vmax.xlane.f32.xlu0 %v2197
      %v2199 = vpop.xlane.xlu0 %2198
      %v2200 = vsel %vm789, %v2166, -inf
      %2201 = vmax.xlane.f32.xlu0 %v2200
      %v2202 = vpop.xlane.xlu0 %2201
      %v2203 = vsel %vm789, %v2167, -inf
      %2204 = vmax.xlane.f32.xlu0 %v2203
      %v2205 = vpop.xlane.xlu0 %2204
      %v2206 = vsel %vm789, %v2168, -inf
      %2207 = vmax.xlane.f32.xlu0 %v2206
      %v2208 = vpop.xlane.xlu0 %2207
      %v2209 = vsel %vm789, %v2169, -inf
      %2210 = vmax.xlane.f32.xlu0 %v2209
      %v2211 = vpop.xlane.xlu0 %2210
      %v2212 = vsel %vm789, %v2170, -inf
      %2213 = vmax.xlane.f32.xlu0 %v2212
      %v2214 = vpop.xlane.xlu0 %2213
      %v2215 = vsel %vm789, %v2171, -inf
      %2216 = vmax.xlane.f32.xlu0 %v2215
      %v2217 = vpop.xlane.xlu0 %2216
      %v2218 = vsel %vm789, %v2172, -inf
      %2219 = vmax.xlane.f32.xlu0 %v2218
      %v2220 = vpop.xlane.xlu0 %2219
      %v2221 = vsel %vm789, %v2173, -inf
      %2222 = vmax.xlane.f32.xlu0 %v2221
      %v2223 = vpop.xlane.xlu0 %2222
      %v2224 = vsel %vm789, %v2174, -inf
      %2225 = vmax.xlane.f32.xlu0 %v2224
      %v2226 = vpop.xlane.xlu0 %2225
      %v2227 = vsel %vm789, %v2175, -inf
      %2228 = vmax.xlane.f32.xlu0 %v2227
      %v2229 = vpop.xlane.xlu0 %2228
      %v2230 = vsel %vm789, %v2176, -inf
      %2231 = vmax.xlane.f32.xlu0 %v2230
      %v2232 = vpop.xlane.xlu0 %2231
      %v2233 = vsel %vm789, %v2177, -inf
      %2234 = vmax.xlane.f32.xlu0 %v2233
      %v2235 = vpop.xlane.xlu0 %2234
      %v2236 = vsel %vm789, %v2178, -inf
      %2237 = vmax.xlane.f32.xlu0 %v2236
      %v2238 = vpop.xlane.xlu0 %2237
      %v2239 = vsel %vm789, %v2179, -inf
      %2240 = vmax.xlane.f32.xlu0 %v2239
      %v2241 = vpop.xlane.xlu0 %2240
      %v2242 = vsel %vm789, %v2180, -inf
      %2243 = vmax.xlane.f32.xlu0 %v2242
      %v2244 = vpop.xlane.xlu0 %2243
      %v2245 = vsel %vm789, %v2181, -inf
      %2246 = vmax.xlane.f32.xlu0 %v2245
      %v2247 = vpop.xlane.xlu0 %2246
      %v2248 = vsel %vm789, %v2182, -inf
      %2249 = vmax.xlane.f32.xlu0 %v2248
      %v2250 = vpop.xlane.xlu0 %2249
      %v2251 = vsel %vm789, %v2183, -inf
      %2252 = vmax.xlane.f32.xlu0 %v2251
      %v2253 = vpop.xlane.xlu0 %2252
      %v2254 = vsel %vm789, %v2184, -inf
      %2255 = vmax.xlane.f32.xlu0 %v2254
      %v2256 = vpop.xlane.xlu0 %2255
      %v2257 = vsel %vm789, %v2185, -inf
      %2258 = vmax.xlane.f32.xlu0 %v2257
      %v2259 = vpop.xlane.xlu0 %2258
      %v2260 = vsel %vm789, %v2186, -inf
      %2261 = vmax.xlane.f32.xlu0 %v2260
      %v2262 = vpop.xlane.xlu0 %2261
      %v2263 = vsel %vm789, %v2187, -inf
      %2264 = vmax.xlane.f32.xlu0 %v2263
      %v2265 = vpop.xlane.xlu0 %2264
      %v2266 = vsel %vm789, %v2188, -inf
      %2267 = vmax.xlane.f32.xlu0 %v2266
      %v2268 = vpop.xlane.xlu0 %2267
      %v2269 = vsel %vm789, %v2189, -inf
      %2270 = vmax.xlane.f32.xlu0 %v2269
      %v2271 = vpop.xlane.xlu0 %2270
      %v2272 = vsel %vm789, %v2190, -inf
      %2273 = vmax.xlane.f32.xlu0 %v2272
      %v2274 = vpop.xlane.xlu0 %2273
      %v2275 = vsel %vm789, %v2191, -inf
      %2276 = vmax.xlane.f32.xlu0 %v2275
      %v2277 = vpop.xlane.xlu0 %2276
      %v2278 = vsel %vm789, %v2192, -inf
      %2279 = vmax.xlane.f32.xlu0 %v2278
      %v2280 = vpop.xlane.xlu0 %2279
      %v2281 = vsel %vm789, %v2193, -inf
      %2282 = vmax.xlane.f32.xlu0 %v2281
      %v2283 = vpop.xlane.xlu0 %2282
      %v2284 = vsel %vm789, %v2194, -inf
      %2285 = vmax.xlane.f32.xlu0 %v2284
      %v2286 = vpop.xlane.xlu0 %2285
      %v2287 = vsel %vm789, %v2195, -inf
      %2288 = vmax.xlane.f32.xlu0 %v2287
      %v2289 = vpop.xlane.xlu0 %2288
      %v2290 = vsel %vm789, %v2196, -inf
      %2291 = vmax.xlane.f32.xlu0 %v2290
      %v2292 = vpop.xlane.xlu0 %2291
      %v2293 = vsub.f32 %v2165, %v2199
      %v2294 = vsub.f32 %v2166, %v2202
      %v2295 = vsub.f32 %v2167, %v2205
      %v2296 = vsub.f32 %v2168, %v2208
      %v2297 = vsub.f32 %v2169, %v2211
      %v2298 = vsub.f32 %v2170, %v2214
      %v2299 = vsub.f32 %v2171, %v2217
      %v2300 = vsub.f32 %v2172, %v2220
      %v2301 = vsub.f32 %v2173, %v2223
      %v2302 = vsub.f32 %v2174, %v2226
      %v2303 = vsub.f32 %v2175, %v2229
      %v2304 = vsub.f32 %v2176, %v2232
      %v2305 = vsub.f32 %v2177, %v2235
      %v2306 = vsub.f32 %v2178, %v2238
      %v2307 = vsub.f32 %v2179, %v2241
      %v2308 = vsub.f32 %v2180, %v2244
      %v2309 = vsub.f32 %v2181, %v2247
      %v2310 = vsub.f32 %v2182, %v2250
      %v2311 = vsub.f32 %v2183, %v2253
      %v2312 = vsub.f32 %v2184, %v2256
      %v2313 = vsub.f32 %v2185, %v2259
      %v2314 = vsub.f32 %v2186, %v2262
      %v2315 = vsub.f32 %v2187, %v2265
      %v2316 = vsub.f32 %v2188, %v2268
      %v2317 = vsub.f32 %v2189, %v2271
      %v2318 = vsub.f32 %v2190, %v2274
      %v2319 = vsub.f32 %v2191, %v2277
      %v2320 = vsub.f32 %v2192, %v2280
      %v2321 = vsub.f32 %v2193, %v2283
      %v2322 = vsub.f32 %v2194, %v2286
      %v2323 = vsub.f32 %v2195, %v2289
      %v2324 = vsub.f32 %v2196, %v2292
      %v2325 = vmul.f32 %v2293, 1.442695
      %v2326 = vpow.pop %v2325
      %v2327 = vmul.f32 %v2294, 1.442695
      %v2328 = vpow.pop %v2327
      %v2329 = vmul.f32 %v2295, 1.442695
      %v2330 = vpow.pop %v2329
      %v2331 = vmul.f32 %v2296, 1.442695
      %v2332 = vpow.pop %v2331
      %v2333 = vmul.f32 %v2297, 1.442695
      %v2334 = vpow.pop %v2333
      %v2335 = vmul.f32 %v2298, 1.442695
      %v2336 = vpow.pop %v2335
      %v2337 = vmul.f32 %v2299, 1.442695
      %v2338 = vpow.pop %v2337
      %v2339 = vmul.f32 %v2300, 1.442695
      %v2340 = vpow.pop %v2339
      %v2341 = vmul.f32 %v2301, 1.442695
      %v2342 = vpow.pop %v2341
      %v2343 = vmul.f32 %v2302, 1.442695
      %v2344 = vpow.pop %v2343
      %v2345 = vmul.f32 %v2303, 1.442695
      %v2346 = vpow.pop %v2345
      %v2347 = vmul.f32 %v2304, 1.442695
      %v2348 = vpow.pop %v2347
      %v2349 = vmul.f32 %v2305, 1.442695
      %v2350 = vpow.pop %v2349
      %v2351 = vmul.f32 %v2306, 1.442695
      %v2352 = vpow.pop %v2351
      %v2353 = vmul.f32 %v2307, 1.442695
      %v2354 = vpow.pop %v2353
      %v2355 = vmul.f32 %v2308, 1.442695
      %v2356 = vpow.pop %v2355
      %v2357 = vmul.f32 %v2309, 1.442695
      %v2358 = vpow.pop %v2357
      %v2359 = vmul.f32 %v2310, 1.442695
      %v2360 = vpow.pop %v2359
      %v2361 = vmul.f32 %v2311, 1.442695
      %v2362 = vpow.pop %v2361
      %v2363 = vmul.f32 %v2312, 1.442695
      %v2364 = vpow.pop %v2363
      %v2365 = vmul.f32 %v2313, 1.442695
      %v2366 = vpow.pop %v2365
      %v2367 = vmul.f32 %v2314, 1.442695
      %v2368 = vpow.pop %v2367
      %v2369 = vmul.f32 %v2315, 1.442695
      %v2370 = vpow.pop %v2369
      %v2371 = vmul.f32 %v2316, 1.442695
      %v2372 = vpow.pop %v2371
      %v2373 = vmul.f32 %v2317, 1.442695
      %v2374 = vpow.pop %v2373
      %v2375 = vmul.f32 %v2318, 1.442695
      %v2376 = vpow.pop %v2375
      %v2377 = vmul.f32 %v2319, 1.442695
      %v2378 = vpow.pop %v2377
      %v2379 = vmul.f32 %v2320, 1.442695
      %v2380 = vpow.pop %v2379
      %v2381 = vmul.f32 %v2321, 1.442695
      %v2382 = vpow.pop %v2381
      %v2383 = vmul.f32 %v2322, 1.442695
      %v2384 = vpow.pop %v2383
      %v2385 = vmul.f32 %v2323, 1.442695
      %v2386 = vpow.pop %v2385
      %v2387 = vmul.f32 %v2324, 1.442695
      %v2388 = vpow.pop %v2387
      %v2389 = vsel %vm789, %v2326, 0.0
      %2390 = vadd.xlane.f32.xlu0 %v2389
      %v2391 = vpop.xlane.xlu0 %2390
      %v2392 = vsel %vm789, %v2328, 0.0
      %2393 = vadd.xlane.f32.xlu0 %v2392
      %v2394 = vpop.xlane.xlu0 %2393
      %v2395 = vsel %vm789, %v2330, 0.0
      %2396 = vadd.xlane.f32.xlu0 %v2395
      %v2397 = vpop.xlane.xlu0 %2396
      %v2398 = vsel %vm789, %v2332, 0.0
      %2399 = vadd.xlane.f32.xlu0 %v2398
      %v2400 = vpop.xlane.xlu0 %2399
      %v2401 = vsel %vm789, %v2334, 0.0
      %2402 = vadd.xlane.f32.xlu0 %v2401
      %v2403 = vpop.xlane.xlu0 %2402
      %v2404 = vsel %vm789, %v2336, 0.0
      %2405 = vadd.xlane.f32.xlu0 %v2404
      %v2406 = vpop.xlane.xlu0 %2405
      %v2407 = vsel %vm789, %v2338, 0.0
      %2408 = vadd.xlane.f32.xlu0 %v2407
      %v2409 = vpop.xlane.xlu0 %2408
      %v2410 = vsel %vm789, %v2340, 0.0
      %2411 = vadd.xlane.f32.xlu0 %v2410
      %v2412 = vpop.xlane.xlu0 %2411
      %v2413 = vsel %vm789, %v2342, 0.0
      %2414 = vadd.xlane.f32.xlu0 %v2413
      %v2415 = vpop.xlane.xlu0 %2414
      %v2416 = vsel %vm789, %v2344, 0.0
      %2417 = vadd.xlane.f32.xlu0 %v2416
      %v2418 = vpop.xlane.xlu0 %2417
      %v2419 = vsel %vm789, %v2346, 0.0
      %2420 = vadd.xlane.f32.xlu0 %v2419
      %v2421 = vpop.xlane.xlu0 %2420
      %v2422 = vsel %vm789, %v2348, 0.0
      %2423 = vadd.xlane.f32.xlu0 %v2422
      %v2424 = vpop.xlane.xlu0 %2423
      %v2425 = vsel %vm789, %v2350, 0.0
      %2426 = vadd.xlane.f32.xlu0 %v2425
      %v2427 = vpop.xlane.xlu0 %2426
      %v2428 = vsel %vm789, %v2352, 0.0
      %2429 = vadd.xlane.f32.xlu0 %v2428
      %v2430 = vpop.xlane.xlu0 %2429
      %v2431 = vsel %vm789, %v2354, 0.0
      %2432 = vadd.xlane.f32.xlu0 %v2431
      %v2433 = vpop.xlane.xlu0 %2432
      %v2434 = vsel %vm789, %v2356, 0.0
      %2435 = vadd.xlane.f32.xlu0 %v2434
      %v2436 = vpop.xlane.xlu0 %2435
      %v2437 = vsel %vm789, %v2358, 0.0
      %2438 = vadd.xlane.f32.xlu0 %v2437
      %v2439 = vpop.xlane.xlu0 %2438
      %v2440 = vsel %vm789, %v2360, 0.0
      %2441 = vadd.xlane.f32.xlu0 %v2440
      %v2442 = vpop.xlane.xlu0 %2441
      %v2443 = vsel %vm789, %v2362, 0.0
      %2444 = vadd.xlane.f32.xlu0 %v2443
      %v2445 = vpop.xlane.xlu0 %2444
      %v2446 = vsel %vm789, %v2364, 0.0
      %2447 = vadd.xlane.f32.xlu0 %v2446
      %v2448 = vpop.xlane.xlu0 %2447
      %v2449 = vsel %vm789, %v2366, 0.0
      %2450 = vadd.xlane.f32.xlu0 %v2449
      %v2451 = vpop.xlane.xlu0 %2450
      %v2452 = vsel %vm789, %v2368, 0.0
      %2453 = vadd.xlane.f32.xlu0 %v2452
      %v2454 = vpop.xlane.xlu0 %2453
      %v2455 = vsel %vm789, %v2370, 0.0
      %2456 = vadd.xlane.f32.xlu0 %v2455
      %v2457 = vpop.xlane.xlu0 %2456
      %v2458 = vsel %vm789, %v2372, 0.0
      %2459 = vadd.xlane.f32.xlu0 %v2458
      %v2460 = vpop.xlane.xlu0 %2459
      %v2461 = vsel %vm789, %v2374, 0.0
      %2462 = vadd.xlane.f32.xlu0 %v2461
      %v2463 = vpop.xlane.xlu0 %2462
      %v2464 = vsel %vm789, %v2376, 0.0
      %2465 = vadd.xlane.f32.xlu0 %v2464
      %v2466 = vpop.xlane.xlu0 %2465
      %v2467 = vsel %vm789, %v2378, 0.0
      %2468 = vadd.xlane.f32.xlu0 %v2467
      %v2469 = vpop.xlane.xlu0 %2468
      %v2470 = vsel %vm789, %v2380, 0.0
      %2471 = vadd.xlane.f32.xlu0 %v2470
      %v2472 = vpop.xlane.xlu0 %2471
      %v2473 = vsel %vm789, %v2382, 0.0
      %2474 = vadd.xlane.f32.xlu0 %v2473
      %v2475 = vpop.xlane.xlu0 %2474
      %v2476 = vsel %vm789, %v2384, 0.0
      %2477 = vadd.xlane.f32.xlu0 %v2476
      %v2478 = vpop.xlane.xlu0 %2477
      %v2479 = vsel %vm789, %v2386, 0.0
      %2480 = vadd.xlane.f32.xlu0 %v2479
      %v2481 = vpop.xlane.xlu0 %2480
      %v2482 = vsel %vm789, %v2388, 0.0
      %2483 = vadd.xlane.f32.xlu0 %v2482
      %v2484 = vpop.xlane.xlu0 %2483
      %v2485 = vrcp.pop %v2391
      %v2486 = vrcp.pop %v2394
      %v2487 = vrcp.pop %v2397
      %v2488 = vrcp.pop %v2400
      %v2489 = vrcp.pop %v2403
      %v2490 = vrcp.pop %v2406
      %v2491 = vrcp.pop %v2409
      %v2492 = vrcp.pop %v2412
      %v2493 = vrcp.pop %v2415
      %v2494 = vrcp.pop %v2418
      %v2495 = vrcp.pop %v2421
      %v2496 = vrcp.pop %v2424
      %v2497 = vrcp.pop %v2427
      %v2498 = vrcp.pop %v2430
      %v2499 = vrcp.pop %v2433
      %v2500 = vrcp.pop %v2436
      %v2501 = vrcp.pop %v2439
      %v2502 = vrcp.pop %v2442
      %v2503 = vrcp.pop %v2445
      %v2504 = vrcp.pop %v2448
      %v2505 = vrcp.pop %v2451
      %v2506 = vrcp.pop %v2454
      %v2507 = vrcp.pop %v2457
      %v2508 = vrcp.pop %v2460
      %v2509 = vrcp.pop %v2463
      %v2510 = vrcp.pop %v2466
      %v2511 = vrcp.pop %v2469
      %v2512 = vrcp.pop %v2472
      %v2513 = vrcp.pop %v2475
      %v2514 = vrcp.pop %v2478
      %v2515 = vrcp.pop %v2481
      %v2516 = vrcp.pop %v2484
      %v2517 = vmul.f32 %v2326, %v2485
      %v2518 = vmul.f32 %v2328, %v2486
      %v2519 = vmul.f32 %v2330, %v2487
      %v2520 = vmul.f32 %v2332, %v2488
      %v2521 = vmul.f32 %v2334, %v2489
      %v2522 = vmul.f32 %v2336, %v2490
      %v2523 = vmul.f32 %v2338, %v2491
      %v2524 = vmul.f32 %v2340, %v2492
      %v2525 = vmul.f32 %v2342, %v2493
      %v2526 = vmul.f32 %v2344, %v2494
      %v2527 = vmul.f32 %v2346, %v2495
      %v2528 = vmul.f32 %v2348, %v2496
      %v2529 = vmul.f32 %v2350, %v2497
      %v2530 = vmul.f32 %v2352, %v2498
      %v2531 = vmul.f32 %v2354, %v2499
      %v2532 = vmul.f32 %v2356, %v2500
      %v2533 = vmul.f32 %v2358, %v2501
      %v2534 = vmul.f32 %v2360, %v2502
      %v2535 = vmul.f32 %v2362, %v2503
      %v2536 = vmul.f32 %v2364, %v2504
      %v2537 = vmul.f32 %v2366, %v2505
      %v2538 = vmul.f32 %v2368, %v2506
      %v2539 = vmul.f32 %v2370, %v2507
      %v2540 = vmul.f32 %v2372, %v2508
      %v2541 = vmul.f32 %v2374, %v2509
      %v2542 = vmul.f32 %v2376, %v2510
      %v2543 = vmul.f32 %v2378, %v2511
      %v2544 = vmul.f32 %v2380, %v2512
      %v2545 = vmul.f32 %v2382, %v2513
      %v2546 = vmul.f32 %v2384, %v2514
      %v2547 = vmul.f32 %v2386, %v2515
      %v2548 = vmul.f32 %v2388, %v2516
      %v2549 = vpack.c.bf16 %v2517, %v2517
      %v2550 = vpack.c.bf16 %v2518, %v2518
      %v2551 = vpack.c.bf16 %v2519, %v2519
      %v2552 = vpack.c.bf16 %v2520, %v2520
      %v2553 = vpack.c.bf16 %v2521, %v2521
      %v2554 = vpack.c.bf16 %v2522, %v2522
      %v2555 = vpack.c.bf16 %v2523, %v2523
      %v2556 = vpack.c.bf16 %v2524, %v2524
      %v2557 = vpack.c.bf16 %v2525, %v2525
      %v2558 = vpack.c.bf16 %v2526, %v2526
      %v2559 = vpack.c.bf16 %v2527, %v2527
      %v2560 = vpack.c.bf16 %v2528, %v2528
      %v2561 = vpack.c.bf16 %v2529, %v2529
      %v2562 = vpack.c.bf16 %v2530, %v2530
      %v2563 = vpack.c.bf16 %v2531, %v2531
      %v2564 = vpack.c.bf16 %v2532, %v2532
      %v2565 = vpack.c.bf16 %v2533, %v2533
      %v2566 = vpack.c.bf16 %v2534, %v2534
      %v2567 = vpack.c.bf16 %v2535, %v2535
      %v2568 = vpack.c.bf16 %v2536, %v2536
      %v2569 = vpack.c.bf16 %v2537, %v2537
      %v2570 = vpack.c.bf16 %v2538, %v2538
      %v2571 = vpack.c.bf16 %v2539, %v2539
      %v2572 = vpack.c.bf16 %v2540, %v2540
      %v2573 = vpack.c.bf16 %v2541, %v2541
      %v2574 = vpack.c.bf16 %v2542, %v2542
      %v2575 = vpack.c.bf16 %v2543, %v2543
      %v2576 = vpack.c.bf16 %v2544, %v2544
      %v2577 = vpack.c.bf16 %v2545, %v2545
      %v2578 = vpack.c.bf16 %v2546, %v2546
      %v2579 = vpack.c.bf16 %v2547, %v2547
      %v2580 = vpack.c.bf16 %v2548, %v2548
      %v2589 = vunpack.c.l.b16 %v2549
      %v2590 = vunpack.c.l.b16 %v2550
      %v2591 = vunpack.c.l.b16 %v2551
      %v2592 = vunpack.c.l.b16 %v2552
      %v2593 = vunpack.c.l.b16 %v2553
      %v2594 = vunpack.c.l.b16 %v2554
      %v2595 = vunpack.c.l.b16 %v2555
      %v2596 = vunpack.c.l.b16 %v2556
      %v2597 = vpack.c.b16 %v2590, %v2589
      %v2598 = vpack.c.b16 %v2592, %v2591
      %v2599 = vpack.c.b16 %v2594, %v2593
      %v2600 = vpack.c.b16 %v2596, %v2595
      %v2609 = vunpack.c.l.b16 %v1612
      %v2610 = vunpack.c.l.b16 %v1613
      %v2611 = vunpack.c.l.b16 %v1614
      %v2612 = vunpack.c.l.b16 %v1615
      %v2613 = vunpack.c.l.b16 %v1616
      %v2614 = vunpack.c.l.b16 %v1617
      %v2615 = vunpack.c.l.b16 %v1618
      %v2616 = vunpack.c.l.b16 %v1619
      %v2617 = vpack.c.b16 %v2610, %v2609
      %v2618 = vpack.c.b16 %v2612, %v2611
      %v2619 = vpack.c.b16 %v2614, %v2613
      %v2620 = vpack.c.b16 %v2616, %v2615
      %v2626 = vsel %vm789, %v2597, 0
      %v2629 = vsel %vm789, %v2598, 0
      %v2632 = vsel %vm789, %v2599, 0
      %v2635 = vsel %vm789, %v2600, 0
      %2637 = vmatpush.bf16.msra.mxu0 0
      %2638 = vmatpush.bf16.msra.mxu0 0
      %2639 = vmatpush.bf16.msra.mxu0 0
      %2640 = vmatpush.bf16.msra.mxu0 0
      %2641 = vmatpush.bf16.msra.mxu0 %v2620
      %2642 = vmatpush.bf16.msra.mxu0 %v2619
      %2643 = vmatpush.bf16.msra.mxu0 %v2618
      %2644 = vmatpush.bf16.msra.mxu0 %v2617
      %2645 = vmatmul.bf16.gmra.mxu0 %v2626
      %v2646 = vpop.f32.mrf.mxu0
      %v2647 = vadd.f32 0.0, %v2646
      %v2648 = vpop.f32.mrf.mxu0
      %v2649 = vadd.f32 0.0, %v2648
      %2650 = vmatmul.bf16.gmra.mxu0 %v2629
      %v2651 = vpop.f32.mrf.mxu0
      %v2652 = vadd.f32 0.0, %v2651
      %v2653 = vpop.f32.mrf.mxu0
      %v2654 = vadd.f32 0.0, %v2653
      %2655 = vmatmul.bf16.gmra.mxu0 %v2632
      %v2656 = vpop.f32.mrf.mxu0
      %v2657 = vadd.f32 0.0, %v2656
      %v2658 = vpop.f32.mrf.mxu0
      %v2659 = vadd.f32 0.0, %v2658
      %2660 = vmatmul.bf16.gmra.mxu0 %v2635
      %v2661 = vpop.f32.mrf.mxu0
      %v2662 = vadd.f32 0.0, %v2661
      %v2663 = vpop.f32.mrf.mxu0
      %v2664 = vadd.f32 0.0, %v2663
      %2665 = vdwg.mxu0
      %v2674 = vunpack.c.l.b16 %v2557
      %v2675 = vunpack.c.l.b16 %v2558
      %v2676 = vunpack.c.l.b16 %v2559
      %v2677 = vunpack.c.l.b16 %v2560
      %v2678 = vunpack.c.l.b16 %v2561
      %v2679 = vunpack.c.l.b16 %v2562
      %v2680 = vunpack.c.l.b16 %v2563
      %v2681 = vunpack.c.l.b16 %v2564
      %v2682 = vpack.c.b16 %v2675, %v2674
      %v2683 = vpack.c.b16 %v2677, %v2676
      %v2684 = vpack.c.b16 %v2679, %v2678
      %v2685 = vpack.c.b16 %v2681, %v2680
      %v2694 = vunpack.c.l.b16 %v1620
      %v2695 = vunpack.c.l.b16 %v1621
      %v2696 = vunpack.c.l.b16 %v1622
      %v2697 = vunpack.c.l.b16 %v1623
      %v2698 = vunpack.c.l.b16 %v1624
      %v2699 = vunpack.c.l.b16 %v1625
      %v2700 = vunpack.c.l.b16 %v1626
      %v2701 = vunpack.c.l.b16 %v1627
      %v2702 = vpack.c.b16 %v2695, %v2694
      %v2703 = vpack.c.b16 %v2697, %v2696
      %v2704 = vpack.c.b16 %v2699, %v2698
      %v2705 = vpack.c.b16 %v2701, %v2700
      %v2711 = vsel %vm789, %v2682, 0
      %v2714 = vsel %vm789, %v2683, 0
      %v2717 = vsel %vm789, %v2684, 0
      %v2720 = vsel %vm789, %v2685, 0
      %2722 = vmatpush.bf16.msra.mxu0 0
      %2723 = vmatpush.bf16.msra.mxu0 0
      %2724 = vmatpush.bf16.msra.mxu0 0
      %2725 = vmatpush.bf16.msra.mxu0 0
      %2726 = vmatpush.bf16.msra.mxu0 %v2705
      %2727 = vmatpush.bf16.msra.mxu0 %v2704
      %2728 = vmatpush.bf16.msra.mxu0 %v2703
      %2729 = vmatpush.bf16.msra.mxu0 %v2702
      %2730 = vmatmul.bf16.gmra.mxu0 %v2711
      %v2731 = vpop.f32.mrf.mxu0
      %v2732 = vadd.f32 0.0, %v2731
      %v2733 = vpop.f32.mrf.mxu0
      %v2734 = vadd.f32 0.0, %v2733
      %2735 = vmatmul.bf16.gmra.mxu0 %v2714
      %v2736 = vpop.f32.mrf.mxu0
      %v2737 = vadd.f32 0.0, %v2736
      %v2738 = vpop.f32.mrf.mxu0
      %v2739 = vadd.f32 0.0, %v2738
      %2740 = vmatmul.bf16.gmra.mxu0 %v2717
      %v2741 = vpop.f32.mrf.mxu0
      %v2742 = vadd.f32 0.0, %v2741
      %v2743 = vpop.f32.mrf.mxu0
      %v2744 = vadd.f32 0.0, %v2743
      %2745 = vmatmul.bf16.gmra.mxu0 %v2720
      %v2746 = vpop.f32.mrf.mxu0
      %v2747 = vadd.f32 0.0, %v2746
      %v2748 = vpop.f32.mrf.mxu0
      %v2749 = vadd.f32 0.0, %v2748
      %2750 = vdwg.mxu0
      %v2759 = vunpack.c.l.b16 %v2565
      %v2760 = vunpack.c.l.b16 %v2566
      %v2761 = vunpack.c.l.b16 %v2567
      %v2762 = vunpack.c.l.b16 %v2568
      %v2763 = vunpack.c.l.b16 %v2569
      %v2764 = vunpack.c.l.b16 %v2570
      %v2765 = vunpack.c.l.b16 %v2571
      %v2766 = vunpack.c.l.b16 %v2572
      %v2767 = vpack.c.b16 %v2760, %v2759
      %v2768 = vpack.c.b16 %v2762, %v2761
      %v2769 = vpack.c.b16 %v2764, %v2763
      %v2770 = vpack.c.b16 %v2766, %v2765
      %v2779 = vunpack.c.l.b16 %v1628
      %v2780 = vunpack.c.l.b16 %v1629
      %v2781 = vunpack.c.l.b16 %v1630
      %v2782 = vunpack.c.l.b16 %v1631
      %v2783 = vunpack.c.l.b16 %v1632
      %v2784 = vunpack.c.l.b16 %v1633
      %v2785 = vunpack.c.l.b16 %v1634
      %v2786 = vunpack.c.l.b16 %v1635
      %v2787 = vpack.c.b16 %v2780, %v2779
      %v2788 = vpack.c.b16 %v2782, %v2781
      %v2789 = vpack.c.b16 %v2784, %v2783
      %v2790 = vpack.c.b16 %v2786, %v2785
      %v2796 = vsel %vm789, %v2767, 0
      %v2799 = vsel %vm789, %v2768, 0
      %v2802 = vsel %vm789, %v2769, 0
      %v2805 = vsel %vm789, %v2770, 0
      %2807 = vmatpush.bf16.msra.mxu0 0
      %2808 = vmatpush.bf16.msra.mxu0 0
      %2809 = vmatpush.bf16.msra.mxu0 0
      %2810 = vmatpush.bf16.msra.mxu0 0
      %2811 = vmatpush.bf16.msra.mxu0 %v2790
      %2812 = vmatpush.bf16.msra.mxu0 %v2789
      %2813 = vmatpush.bf16.msra.mxu0 %v2788
      %2814 = vmatpush.bf16.msra.mxu0 %v2787
      %2815 = vmatmul.bf16.gmra.mxu0 %v2796
      %v2816 = vpop.f32.mrf.mxu0
      %v2817 = vadd.f32 0.0, %v2816
      %v2818 = vpop.f32.mrf.mxu0
      %v2819 = vadd.f32 0.0, %v2818
      %2820 = vmatmul.bf16.gmra.mxu0 %v2799
      %v2821 = vpop.f32.mrf.mxu0
      %v2822 = vadd.f32 0.0, %v2821
      %v2823 = vpop.f32.mrf.mxu0
      %v2824 = vadd.f32 0.0, %v2823
      %2825 = vmatmul.bf16.gmra.mxu0 %v2802
      %v2826 = vpop.f32.mrf.mxu0
      %v2827 = vadd.f32 0.0, %v2826
      %v2828 = vpop.f32.mrf.mxu0
      %v2829 = vadd.f32 0.0, %v2828
      %2830 = vmatmul.bf16.gmra.mxu0 %v2805
      %v2831 = vpop.f32.mrf.mxu0
      %v2832 = vadd.f32 0.0, %v2831
      %v2833 = vpop.f32.mrf.mxu0
      %v2834 = vadd.f32 0.0, %v2833
      %2835 = vdwg.mxu0
      %v2844 = vunpack.c.l.b16 %v2573
      %v2845 = vunpack.c.l.b16 %v2574
      %v2846 = vunpack.c.l.b16 %v2575
      %v2847 = vunpack.c.l.b16 %v2576
      %v2848 = vunpack.c.l.b16 %v2577
      %v2849 = vunpack.c.l.b16 %v2578
      %v2850 = vunpack.c.l.b16 %v2579
      %v2851 = vunpack.c.l.b16 %v2580
      %v2852 = vpack.c.b16 %v2845, %v2844
      %v2853 = vpack.c.b16 %v2847, %v2846
      %v2854 = vpack.c.b16 %v2849, %v2848
      %v2855 = vpack.c.b16 %v2851, %v2850
      %v2864 = vunpack.c.l.b16 %v1636
      %v2865 = vunpack.c.l.b16 %v1637
      %v2866 = vunpack.c.l.b16 %v1638
      %v2867 = vunpack.c.l.b16 %v1639
      %v2868 = vunpack.c.l.b16 %v1640
      %v2869 = vunpack.c.l.b16 %v1641
      %v2870 = vunpack.c.l.b16 %v1642
      %v2871 = vunpack.c.l.b16 %v1643
      %v2872 = vpack.c.b16 %v2865, %v2864
      %v2873 = vpack.c.b16 %v2867, %v2866
      %v2874 = vpack.c.b16 %v2869, %v2868
      %v2875 = vpack.c.b16 %v2871, %v2870
      %v2881 = vsel %vm789, %v2852, 0
      %v2884 = vsel %vm789, %v2853, 0
      %v2887 = vsel %vm789, %v2854, 0
      %v2890 = vsel %vm789, %v2855, 0
      %2892 = vmatpush.bf16.msra.mxu0 0
      %2893 = vmatpush.bf16.msra.mxu0 0
      %2894 = vmatpush.bf16.msra.mxu0 0
      %2895 = vmatpush.bf16.msra.mxu0 0
      %2896 = vmatpush.bf16.msra.mxu0 %v2875
      %2897 = vmatpush.bf16.msra.mxu0 %v2874
      %2898 = vmatpush.bf16.msra.mxu0 %v2873
      %2899 = vmatpush.bf16.msra.mxu0 %v2872
      %2900 = vmatmul.bf16.gmra.mxu0 %v2881
      %v2901 = vpop.f32.mrf.mxu0
      %v2902 = vadd.f32 0.0, %v2901
      %v2903 = vpop.f32.mrf.mxu0
      %v2904 = vadd.f32 0.0, %v2903
      %2905 = vmatmul.bf16.gmra.mxu0 %v2884
      %v2906 = vpop.f32.mrf.mxu0
      %v2907 = vadd.f32 0.0, %v2906
      %v2908 = vpop.f32.mrf.mxu0
      %v2909 = vadd.f32 0.0, %v2908
      %2910 = vmatmul.bf16.gmra.mxu0 %v2887
      %v2911 = vpop.f32.mrf.mxu0
      %v2912 = vadd.f32 0.0, %v2911
      %v2913 = vpop.f32.mrf.mxu0
      %v2914 = vadd.f32 0.0, %v2913
      %2915 = vmatmul.bf16.gmra.mxu0 %v2890
      %v2916 = vpop.f32.mrf.mxu0
      %v2917 = vadd.f32 0.0, %v2916
      %v2918 = vpop.f32.mrf.mxu0
      %v2919 = vadd.f32 0.0, %v2918
      %2920 = vdwg.mxu0
      %v2921 = vld [vmem:[%s3] sm:$0x1]
      %v2922 = vld [vmem:[%s4] sm:$0x1]
      %v2923 = vmul.f32 %v1644, %v1644
      %v2924 = vmul.f32 %v1645, %v1645
      %v2925 = vmul.f32 %v1646, %v1646
      %v2926 = vmul.f32 %v1647, %v1647
      %v2927 = vmul.f32 %v1648, %v1648
      %v2928 = vmul.f32 %v1649, %v1649
      %v2929 = vmul.f32 %v1650, %v1650
      %v2930 = vmul.f32 %v1651, %v1651
      %v2931 = vmul.f32 %v1661, %v1661
      %v2932 = vmul.f32 %v1663, %v1663
      %v2933 = vmul.f32 %v1665, %v1665
      %v2934 = vmul.f32 %v1667, %v1667
      %v2935 = vmul.f32 %v1669, %v1669
      %v2936 = vmul.f32 %v1671, %v1671
      %v2937 = vmul.f32 %v1673, %v1673
      %v2938 = vmul.f32 %v1675, %v1675
      %v2939 = vmul.f32 %v1685, %v1685
      %v2940 = vmul.f32 %v1687, %v1687
      %v2941 = vmul.f32 %v1689, %v1689
      %v2942 = vmul.f32 %v1691, %v1691
      %v2943 = vmul.f32 %v1693, %v1693
      %v2944 = vmul.f32 %v1695, %v1695
      %v2945 = vmul.f32 %v1697, %v1697
      %v2946 = vmul.f32 %v1699, %v1699
      %v2947 = vmul.f32 %v1709, %v1709
      %v2948 = vmul.f32 %v1711, %v1711
      %v2949 = vmul.f32 %v1713, %v1713
      %v2950 = vmul.f32 %v1715, %v1715
      %v2951 = vmul.f32 %v1717, %v1717
      %v2952 = vmul.f32 %v1719, %v1719
      %v2953 = vmul.f32 %v1721, %v1721
      %v2954 = vmul.f32 %v1723, %v1723
      %v2955 = vsel %vm1780, %v2923, 0.0
      %2956 = vadd.xlane.f32.xlu0 %v2955
      %v2957 = vpop.xlane.xlu0 %2956
      %v2958 = vsel %vm1780, %v2924, 0.0
      %2959 = vadd.xlane.f32.xlu0 %v2958
      %v2960 = vpop.xlane.xlu0 %2959
      %v2961 = vsel %vm1780, %v2925, 0.0
      %2962 = vadd.xlane.f32.xlu0 %v2961
      %v2963 = vpop.xlane.xlu0 %2962
      %v2964 = vsel %vm1780, %v2926, 0.0
      %2965 = vadd.xlane.f32.xlu0 %v2964
      %v2966 = vpop.xlane.xlu0 %2965
      %v2967 = vsel %vm1780, %v2927, 0.0
      %2968 = vadd.xlane.f32.xlu0 %v2967
      %v2969 = vpop.xlane.xlu0 %2968
      %v2970 = vsel %vm1780, %v2928, 0.0
      %2971 = vadd.xlane.f32.xlu0 %v2970
      %v2972 = vpop.xlane.xlu0 %2971
      %v2973 = vsel %vm1780, %v2929, 0.0
      %2974 = vadd.xlane.f32.xlu0 %v2973
      %v2975 = vpop.xlane.xlu0 %2974
      %v2976 = vsel %vm1780, %v2930, 0.0
      %2977 = vadd.xlane.f32.xlu0 %v2976
      %v2978 = vpop.xlane.xlu0 %2977
      %v2979 = vsel %vm1780, %v2931, 0.0
      %2980 = vadd.xlane.f32.xlu0 %v2979
      %v2981 = vpop.xlane.xlu0 %2980
      %v2982 = vsel %vm1780, %v2932, 0.0
      %2983 = vadd.xlane.f32.xlu0 %v2982
      %v2984 = vpop.xlane.xlu0 %2983
      %v2985 = vsel %vm1780, %v2933, 0.0
      %2986 = vadd.xlane.f32.xlu0 %v2985
      %v2987 = vpop.xlane.xlu0 %2986
      %v2988 = vsel %vm1780, %v2934, 0.0
      %2989 = vadd.xlane.f32.xlu0 %v2988
      %v2990 = vpop.xlane.xlu0 %2989
      %v2991 = vsel %vm1780, %v2935, 0.0
      %2992 = vadd.xlane.f32.xlu0 %v2991
      %v2993 = vpop.xlane.xlu0 %2992
      %v2994 = vsel %vm1780, %v2936, 0.0
      %2995 = vadd.xlane.f32.xlu0 %v2994
      %v2996 = vpop.xlane.xlu0 %2995
      %v2997 = vsel %vm1780, %v2937, 0.0
      %2998 = vadd.xlane.f32.xlu0 %v2997
      %v2999 = vpop.xlane.xlu0 %2998
      %v3000 = vsel %vm1780, %v2938, 0.0
      %3001 = vadd.xlane.f32.xlu0 %v3000
      %v3002 = vpop.xlane.xlu0 %3001
      %v3003 = vsel %vm1780, %v2939, 0.0
      %3004 = vadd.xlane.f32.xlu0 %v3003
      %v3005 = vpop.xlane.xlu0 %3004
      %v3006 = vsel %vm1780, %v2940, 0.0
      %3007 = vadd.xlane.f32.xlu0 %v3006
      %v3008 = vpop.xlane.xlu0 %3007
      %v3009 = vsel %vm1780, %v2941, 0.0
      %3010 = vadd.xlane.f32.xlu0 %v3009
      %v3011 = vpop.xlane.xlu0 %3010
      %v3012 = vsel %vm1780, %v2942, 0.0
      %3013 = vadd.xlane.f32.xlu0 %v3012
      %v3014 = vpop.xlane.xlu0 %3013
      %v3015 = vsel %vm1780, %v2943, 0.0
      %3016 = vadd.xlane.f32.xlu0 %v3015
      %v3017 = vpop.xlane.xlu0 %3016
      %v3018 = vsel %vm1780, %v2944, 0.0
      %3019 = vadd.xlane.f32.xlu0 %v3018
      %v3020 = vpop.xlane.xlu0 %3019
      %v3021 = vsel %vm1780, %v2945, 0.0
      %3022 = vadd.xlane.f32.xlu0 %v3021
      %v3023 = vpop.xlane.xlu0 %3022
      %v3024 = vsel %vm1780, %v2946, 0.0
      %3025 = vadd.xlane.f32.xlu0 %v3024
      %v3026 = vpop.xlane.xlu0 %3025
      %v3027 = vsel %vm1780, %v2947, 0.0
      %3028 = vadd.xlane.f32.xlu0 %v3027
      %v3029 = vpop.xlane.xlu0 %3028
      %v3030 = vsel %vm1780, %v2948, 0.0
      %3031 = vadd.xlane.f32.xlu0 %v3030
      %v3032 = vpop.xlane.xlu0 %3031
      %v3033 = vsel %vm1780, %v2949, 0.0
      %3034 = vadd.xlane.f32.xlu0 %v3033
      %v3035 = vpop.xlane.xlu0 %3034
      %v3036 = vsel %vm1780, %v2950, 0.0
      %3037 = vadd.xlane.f32.xlu0 %v3036
      %v3038 = vpop.xlane.xlu0 %3037
      %v3039 = vsel %vm1780, %v2951, 0.0
      %3040 = vadd.xlane.f32.xlu0 %v3039
      %v3041 = vpop.xlane.xlu0 %3040
      %v3042 = vsel %vm1780, %v2952, 0.0
      %3043 = vadd.xlane.f32.xlu0 %v3042
      %v3044 = vpop.xlane.xlu0 %3043
      %v3045 = vsel %vm1780, %v2953, 0.0
      %3046 = vadd.xlane.f32.xlu0 %v3045
      %v3047 = vpop.xlane.xlu0 %3046
      %v3048 = vsel %vm1780, %v2954, 0.0
      %3049 = vadd.xlane.f32.xlu0 %v3048
      %v3050 = vpop.xlane.xlu0 %3049
      %v3051 = vrcp.pop 16.0
      %v3052 = vmul.f32 16.0, %v3051
      %v3053 = vsub.f32 1.0, %v3052
      %v3054 = vmul.f32 %v3051, %v3053
      %v3055 = vadd.f32 %v3051, %v3054
      %vm3056 = vweird.f32 %v3051
      %v3057 = vsel %vm3056, %v3051, %v3055
      %v3058 = vmul.f32 %v2957, %v3057
      %v3059 = vmul.f32 %v2960, %v3057
      %v3060 = vmul.f32 %v2963, %v3057
      %v3061 = vmul.f32 %v2966, %v3057
      %v3062 = vmul.f32 %v2969, %v3057
      %v3063 = vmul.f32 %v2972, %v3057
      %v3064 = vmul.f32 %v2975, %v3057
      %v3065 = vmul.f32 %v2978, %v3057
      %v3066 = vmul.f32 %v2981, %v3057
      %v3067 = vmul.f32 %v2984, %v3057
      %v3068 = vmul.f32 %v2987, %v3057
      %v3069 = vmul.f32 %v2990, %v3057
      %v3070 = vmul.f32 %v2993, %v3057
      %v3071 = vmul.f32 %v2996, %v3057
      %v3072 = vmul.f32 %v2999, %v3057
      %v3073 = vmul.f32 %v3002, %v3057
      %v3074 = vmul.f32 %v3005, %v3057
      %v3075 = vmul.f32 %v3008, %v3057
      %v3076 = vmul.f32 %v3011, %v3057
      %v3077 = vmul.f32 %v3014, %v3057
      %v3078 = vmul.f32 %v3017, %v3057
      %v3079 = vmul.f32 %v3020, %v3057
      %v3080 = vmul.f32 %v3023, %v3057
      %v3081 = vmul.f32 %v3026, %v3057
      %v3082 = vmul.f32 %v3029, %v3057
      %v3083 = vmul.f32 %v3032, %v3057
      %v3084 = vmul.f32 %v3035, %v3057
      %v3085 = vmul.f32 %v3038, %v3057
      %v3086 = vmul.f32 %v3041, %v3057
      %v3087 = vmul.f32 %v3044, %v3057
      %v3088 = vmul.f32 %v3047, %v3057
      %v3089 = vmul.f32 %v3050, %v3057
      %v3090 = vadd.f32 %v3058, 1.1920929e-07
      %v3091 = vadd.f32 %v3059, 1.1920929e-07
      %v3092 = vadd.f32 %v3060, 1.1920929e-07
      %v3093 = vadd.f32 %v3061, 1.1920929e-07
      %v3094 = vadd.f32 %v3062, 1.1920929e-07
      %v3095 = vadd.f32 %v3063, 1.1920929e-07
      %v3096 = vadd.f32 %v3064, 1.1920929e-07
      %v3097 = vadd.f32 %v3065, 1.1920929e-07
      %v3098 = vadd.f32 %v3066, 1.1920929e-07
      %v3099 = vadd.f32 %v3067, 1.1920929e-07
      %v3100 = vadd.f32 %v3068, 1.1920929e-07
      %v3101 = vadd.f32 %v3069, 1.1920929e-07
      %v3102 = vadd.f32 %v3070, 1.1920929e-07
      %v3103 = vadd.f32 %v3071, 1.1920929e-07
      %v3104 = vadd.f32 %v3072, 1.1920929e-07
      %v3105 = vadd.f32 %v3073, 1.1920929e-07
      %v3106 = vadd.f32 %v3074, 1.1920929e-07
      %v3107 = vadd.f32 %v3075, 1.1920929e-07
      %v3108 = vadd.f32 %v3076, 1.1920929e-07
      %v3109 = vadd.f32 %v3077, 1.1920929e-07
      %v3110 = vadd.f32 %v3078, 1.1920929e-07
      %v3111 = vadd.f32 %v3079, 1.1920929e-07
      %v3112 = vadd.f32 %v3080, 1.1920929e-07
      %v3113 = vadd.f32 %v3081, 1.1920929e-07
      %v3114 = vadd.f32 %v3082, 1.1920929e-07
      %v3115 = vadd.f32 %v3083, 1.1920929e-07
      %v3116 = vadd.f32 %v3084, 1.1920929e-07
      %v3117 = vadd.f32 %v3085, 1.1920929e-07
      %v3118 = vadd.f32 %v3086, 1.1920929e-07
      %v3119 = vadd.f32 %v3087, 1.1920929e-07
      %v3120 = vadd.f32 %v3088, 1.1920929e-07
      %v3121 = vadd.f32 %v3089, 1.1920929e-07
      %v3122 = vrsqrt.pop %v3090
      %v3123 = vmul.f32 %v3122, %v3090
      %v3124 = vmul.f32 %v3123, %v3122
      %v3125 = vmul.f32 0.5, %v3124
      %v3126 = vsub.f32 1.5, %v3125
      %v3127 = vmul.f32 %v3122, %v3126
      %vm3128 = vweird.f32 %v3090
      %vm3129 = vweird.f32 %v3122
      %vm3130 = vmor %vm3128, %vm3129
      %v3131 = vsel %vm3130, %v3122, %v3127
      %v3132 = vrsqrt.pop %v3091
      %v3133 = vmul.f32 %v3132, %v3091
      %v3134 = vmul.f32 %v3133, %v3132
      %v3135 = vmul.f32 0.5, %v3134
      %v3136 = vsub.f32 1.5, %v3135
      %v3137 = vmul.f32 %v3132, %v3136
      %vm3138 = vweird.f32 %v3091
      %vm3139 = vweird.f32 %v3132
      %vm3140 = vmor %vm3138, %vm3139
      %v3141 = vsel %vm3140, %v3132, %v3137
      %v3142 = vrsqrt.pop %v3092
      %v3143 = vmul.f32 %v3142, %v3092
      %v3144 = vmul.f32 %v3143, %v3142
      %v3145 = vmul.f32 0.5, %v3144
      %v3146 = vsub.f32 1.5, %v3145
      %v3147 = vmul.f32 %v3142, %v3146
      %vm3148 = vweird.f32 %v3092
      %vm3149 = vweird.f32 %v3142
      %vm3150 = vmor %vm3148, %vm3149
      %v3151 = vsel %vm3150, %v3142, %v3147
      %v3152 = vrsqrt.pop %v3093
      %v3153 = vmul.f32 %v3152, %v3093
      %v3154 = vmul.f32 %v3153, %v3152
      %v3155 = vmul.f32 0.5, %v3154
      %v3156 = vsub.f32 1.5, %v3155
      %v3157 = vmul.f32 %v3152, %v3156
      %vm3158 = vweird.f32 %v3093
      %vm3159 = vweird.f32 %v3152
      %vm3160 = vmor %vm3158, %vm3159
      %v3161 = vsel %vm3160, %v3152, %v3157
      %v3162 = vrsqrt.pop %v3094
      %v3163 = vmul.f32 %v3162, %v3094
      %v3164 = vmul.f32 %v3163, %v3162
      %v3165 = vmul.f32 0.5, %v3164
      %v3166 = vsub.f32 1.5, %v3165
      %v3167 = vmul.f32 %v3162, %v3166
      %vm3168 = vweird.f32 %v3094
      %vm3169 = vweird.f32 %v3162
      %vm3170 = vmor %vm3168, %vm3169
      %v3171 = vsel %vm3170, %v3162, %v3167
      %v3172 = vrsqrt.pop %v3095
      %v3173 = vmul.f32 %v3172, %v3095
      %v3174 = vmul.f32 %v3173, %v3172
      %v3175 = vmul.f32 0.5, %v3174
      %v3176 = vsub.f32 1.5, %v3175
      %v3177 = vmul.f32 %v3172, %v3176
      %vm3178 = vweird.f32 %v3095
      %vm3179 = vweird.f32 %v3172
      %vm3180 = vmor %vm3178, %vm3179
      %v3181 = vsel %vm3180, %v3172, %v3177
      %v3182 = vrsqrt.pop %v3096
      %v3183 = vmul.f32 %v3182, %v3096
      %v3184 = vmul.f32 %v3183, %v3182
      %v3185 = vmul.f32 0.5, %v3184
      %v3186 = vsub.f32 1.5, %v3185
      %v3187 = vmul.f32 %v3182, %v3186
      %vm3188 = vweird.f32 %v3096
      %vm3189 = vweird.f32 %v3182
      %vm3190 = vmor %vm3188, %vm3189
      %v3191 = vsel %vm3190, %v3182, %v3187
      %v3192 = vrsqrt.pop %v3097
      %v3193 = vmul.f32 %v3192, %v3097
      %v3194 = vmul.f32 %v3193, %v3192
      %v3195 = vmul.f32 0.5, %v3194
      %v3196 = vsub.f32 1.5, %v3195
      %v3197 = vmul.f32 %v3192, %v3196
      %vm3198 = vweird.f32 %v3097
      %vm3199 = vweird.f32 %v3192
      %vm3200 = vmor %vm3198, %vm3199
      %v3201 = vsel %vm3200, %v3192, %v3197
      %v3202 = vrsqrt.pop %v3098
      %v3203 = vmul.f32 %v3202, %v3098
      %v3204 = vmul.f32 %v3203, %v3202
      %v3205 = vmul.f32 0.5, %v3204
      %v3206 = vsub.f32 1.5, %v3205
      %v3207 = vmul.f32 %v3202, %v3206
      %vm3208 = vweird.f32 %v3098
      %vm3209 = vweird.f32 %v3202
      %vm3210 = vmor %vm3208, %vm3209
      %v3211 = vsel %vm3210, %v3202, %v3207
      %v3212 = vrsqrt.pop %v3099
      %v3213 = vmul.f32 %v3212, %v3099
      %v3214 = vmul.f32 %v3213, %v3212
      %v3215 = vmul.f32 0.5, %v3214
      %v3216 = vsub.f32 1.5, %v3215
      %v3217 = vmul.f32 %v3212, %v3216
      %vm3218 = vweird.f32 %v3099
      %vm3219 = vweird.f32 %v3212
      %vm3220 = vmor %vm3218, %vm3219
      %v3221 = vsel %vm3220, %v3212, %v3217
      %v3222 = vrsqrt.pop %v3100
      %v3223 = vmul.f32 %v3222, %v3100
      %v3224 = vmul.f32 %v3223, %v3222
      %v3225 = vmul.f32 0.5, %v3224
      %v3226 = vsub.f32 1.5, %v3225
      %v3227 = vmul.f32 %v3222, %v3226
      %vm3228 = vweird.f32 %v3100
      %vm3229 = vweird.f32 %v3222
      %vm3230 = vmor %vm3228, %vm3229
      %v3231 = vsel %vm3230, %v3222, %v3227
      %v3232 = vrsqrt.pop %v3101
      %v3233 = vmul.f32 %v3232, %v3101
      %v3234 = vmul.f32 %v3233, %v3232
      %v3235 = vmul.f32 0.5, %v3234
      %v3236 = vsub.f32 1.5, %v3235
      %v3237 = vmul.f32 %v3232, %v3236
      %vm3238 = vweird.f32 %v3101
      %vm3239 = vweird.f32 %v3232
      %vm3240 = vmor %vm3238, %vm3239
      %v3241 = vsel %vm3240, %v3232, %v3237
      %v3242 = vrsqrt.pop %v3102
      %v3243 = vmul.f32 %v3242, %v3102
      %v3244 = vmul.f32 %v3243, %v3242
      %v3245 = vmul.f32 0.5, %v3244
      %v3246 = vsub.f32 1.5, %v3245
      %v3247 = vmul.f32 %v3242, %v3246
      %vm3248 = vweird.f32 %v3102
      %vm3249 = vweird.f32 %v3242
      %vm3250 = vmor %vm3248, %vm3249
      %v3251 = vsel %vm3250, %v3242, %v3247
      %v3252 = vrsqrt.pop %v3103
      %v3253 = vmul.f32 %v3252, %v3103
      %v3254 = vmul.f32 %v3253, %v3252
      %v3255 = vmul.f32 0.5, %v3254
      %v3256 = vsub.f32 1.5, %v3255
      %v3257 = vmul.f32 %v3252, %v3256
      %vm3258 = vweird.f32 %v3103
      %vm3259 = vweird.f32 %v3252
      %vm3260 = vmor %vm3258, %vm3259
      %v3261 = vsel %vm3260, %v3252, %v3257
      %v3262 = vrsqrt.pop %v3104
      %v3263 = vmul.f32 %v3262, %v3104
      %v3264 = vmul.f32 %v3263, %v3262
      %v3265 = vmul.f32 0.5, %v3264
      %v3266 = vsub.f32 1.5, %v3265
      %v3267 = vmul.f32 %v3262, %v3266
      %vm3268 = vweird.f32 %v3104
      %vm3269 = vweird.f32 %v3262
      %vm3270 = vmor %vm3268, %vm3269
      %v3271 = vsel %vm3270, %v3262, %v3267
      %v3272 = vrsqrt.pop %v3105
      %v3273 = vmul.f32 %v3272, %v3105
      %v3274 = vmul.f32 %v3273, %v3272
      %v3275 = vmul.f32 0.5, %v3274
      %v3276 = vsub.f32 1.5, %v3275
      %v3277 = vmul.f32 %v3272, %v3276
      %vm3278 = vweird.f32 %v3105
      %vm3279 = vweird.f32 %v3272
      %vm3280 = vmor %vm3278, %vm3279
      %v3281 = vsel %vm3280, %v3272, %v3277
      %v3282 = vrsqrt.pop %v3106
      %v3283 = vmul.f32 %v3282, %v3106
      %v3284 = vmul.f32 %v3283, %v3282
      %v3285 = vmul.f32 0.5, %v3284
      %v3286 = vsub.f32 1.5, %v3285
      %v3287 = vmul.f32 %v3282, %v3286
      %vm3288 = vweird.f32 %v3106
      %vm3289 = vweird.f32 %v3282
      %vm3290 = vmor %vm3288, %vm3289
      %v3291 = vsel %vm3290, %v3282, %v3287
      %v3292 = vrsqrt.pop %v3107
      %v3293 = vmul.f32 %v3292, %v3107
      %v3294 = vmul.f32 %v3293, %v3292
      %v3295 = vmul.f32 0.5, %v3294
      %v3296 = vsub.f32 1.5, %v3295
      %v3297 = vmul.f32 %v3292, %v3296
      %vm3298 = vweird.f32 %v3107
      %vm3299 = vweird.f32 %v3292
      %vm3300 = vmor %vm3298, %vm3299
      %v3301 = vsel %vm3300, %v3292, %v3297
      %v3302 = vrsqrt.pop %v3108
      %v3303 = vmul.f32 %v3302, %v3108
      %v3304 = vmul.f32 %v3303, %v3302
      %v3305 = vmul.f32 0.5, %v3304
      %v3306 = vsub.f32 1.5, %v3305
      %v3307 = vmul.f32 %v3302, %v3306
      %vm3308 = vweird.f32 %v3108
      %vm3309 = vweird.f32 %v3302
      %vm3310 = vmor %vm3308, %vm3309
      %v3311 = vsel %vm3310, %v3302, %v3307
      %v3312 = vrsqrt.pop %v3109
      %v3313 = vmul.f32 %v3312, %v3109
      %v3314 = vmul.f32 %v3313, %v3312
      %v3315 = vmul.f32 0.5, %v3314
      %v3316 = vsub.f32 1.5, %v3315
      %v3317 = vmul.f32 %v3312, %v3316
      %vm3318 = vweird.f32 %v3109
      %vm3319 = vweird.f32 %v3312
      %vm3320 = vmor %vm3318, %vm3319
      %v3321 = vsel %vm3320, %v3312, %v3317
      %v3322 = vrsqrt.pop %v3110
      %v3323 = vmul.f32 %v3322, %v3110
      %v3324 = vmul.f32 %v3323, %v3322
      %v3325 = vmul.f32 0.5, %v3324
      %v3326 = vsub.f32 1.5, %v3325
      %v3327 = vmul.f32 %v3322, %v3326
      %vm3328 = vweird.f32 %v3110
      %vm3329 = vweird.f32 %v3322
      %vm3330 = vmor %vm3328, %vm3329
      %v3331 = vsel %vm3330, %v3322, %v3327
      %v3332 = vrsqrt.pop %v3111
      %v3333 = vmul.f32 %v3332, %v3111
      %v3334 = vmul.f32 %v3333, %v3332
      %v3335 = vmul.f32 0.5, %v3334
      %v3336 = vsub.f32 1.5, %v3335
      %v3337 = vmul.f32 %v3332, %v3336
      %vm3338 = vweird.f32 %v3111
      %vm3339 = vweird.f32 %v3332
      %vm3340 = vmor %vm3338, %vm3339
      %v3341 = vsel %vm3340, %v3332, %v3337
      %v3342 = vrsqrt.pop %v3112
      %v3343 = vmul.f32 %v3342, %v3112
      %v3344 = vmul.f32 %v3343, %v3342
      %v3345 = vmul.f32 0.5, %v3344
      %v3346 = vsub.f32 1.5, %v3345
      %v3347 = vmul.f32 %v3342, %v3346
      %vm3348 = vweird.f32 %v3112
      %vm3349 = vweird.f32 %v3342
      %vm3350 = vmor %vm3348, %vm3349
      %v3351 = vsel %vm3350, %v3342, %v3347
      %v3352 = vrsqrt.pop %v3113
      %v3353 = vmul.f32 %v3352, %v3113
      %v3354 = vmul.f32 %v3353, %v3352
      %v3355 = vmul.f32 0.5, %v3354
      %v3356 = vsub.f32 1.5, %v3355
      %v3357 = vmul.f32 %v3352, %v3356
      %vm3358 = vweird.f32 %v3113
      %vm3359 = vweird.f32 %v3352
      %vm3360 = vmor %vm3358, %vm3359
      %v3361 = vsel %vm3360, %v3352, %v3357
      %v3362 = vrsqrt.pop %v3114
      %v3363 = vmul.f32 %v3362, %v3114
      %v3364 = vmul.f32 %v3363, %v3362
      %v3365 = vmul.f32 0.5, %v3364
      %v3366 = vsub.f32 1.5, %v3365
      %v3367 = vmul.f32 %v3362, %v3366
      %vm3368 = vweird.f32 %v3114
      %vm3369 = vweird.f32 %v3362
      %vm3370 = vmor %vm3368, %vm3369
      %v3371 = vsel %vm3370, %v3362, %v3367
      %v3372 = vrsqrt.pop %v3115
      %v3373 = vmul.f32 %v3372, %v3115
      %v3374 = vmul.f32 %v3373, %v3372
      %v3375 = vmul.f32 0.5, %v3374
      %v3376 = vsub.f32 1.5, %v3375
      %v3377 = vmul.f32 %v3372, %v3376
      %vm3378 = vweird.f32 %v3115
      %vm3379 = vweird.f32 %v3372
      %vm3380 = vmor %vm3378, %vm3379
      %v3381 = vsel %vm3380, %v3372, %v3377
      %v3382 = vrsqrt.pop %v3116
      %v3383 = vmul.f32 %v3382, %v3116
      %v3384 = vmul.f32 %v3383, %v3382
      %v3385 = vmul.f32 0.5, %v3384
      %v3386 = vsub.f32 1.5, %v3385
      %v3387 = vmul.f32 %v3382, %v3386
      %vm3388 = vweird.f32 %v3116
      %vm3389 = vweird.f32 %v3382
      %vm3390 = vmor %vm3388, %vm3389
      %v3391 = vsel %vm3390, %v3382, %v3387
      %v3392 = vrsqrt.pop %v3117
      %v3393 = vmul.f32 %v3392, %v3117
      %v3394 = vmul.f32 %v3393, %v3392
      %v3395 = vmul.f32 0.5, %v3394
      %v3396 = vsub.f32 1.5, %v3395
      %v3397 = vmul.f32 %v3392, %v3396
      %vm3398 = vweird.f32 %v3117
      %vm3399 = vweird.f32 %v3392
      %vm3400 = vmor %vm3398, %vm3399
      %v3401 = vsel %vm3400, %v3392, %v3397
      %v3402 = vrsqrt.pop %v3118
      %v3403 = vmul.f32 %v3402, %v3118
      %v3404 = vmul.f32 %v3403, %v3402
      %v3405 = vmul.f32 0.5, %v3404
      %v3406 = vsub.f32 1.5, %v3405
      %v3407 = vmul.f32 %v3402, %v3406
      %vm3408 = vweird.f32 %v3118
      %vm3409 = vweird.f32 %v3402
      %vm3410 = vmor %vm3408, %vm3409
      %v3411 = vsel %vm3410, %v3402, %v3407
      %v3412 = vrsqrt.pop %v3119
      %v3413 = vmul.f32 %v3412, %v3119
      %v3414 = vmul.f32 %v3413, %v3412
      %v3415 = vmul.f32 0.5, %v3414
      %v3416 = vsub.f32 1.5, %v3415
      %v3417 = vmul.f32 %v3412, %v3416
      %vm3418 = vweird.f32 %v3119
      %vm3419 = vweird.f32 %v3412
      %vm3420 = vmor %vm3418, %vm3419
      %v3421 = vsel %vm3420, %v3412, %v3417
      %v3422 = vrsqrt.pop %v3120
      %v3423 = vmul.f32 %v3422, %v3120
      %v3424 = vmul.f32 %v3423, %v3422
      %v3425 = vmul.f32 0.5, %v3424
      %v3426 = vsub.f32 1.5, %v3425
      %v3427 = vmul.f32 %v3422, %v3426
      %vm3428 = vweird.f32 %v3120
      %vm3429 = vweird.f32 %v3422
      %vm3430 = vmor %vm3428, %vm3429
      %v3431 = vsel %vm3430, %v3422, %v3427
      %v3432 = vrsqrt.pop %v3121
      %v3433 = vmul.f32 %v3432, %v3121
      %v3434 = vmul.f32 %v3433, %v3432
      %v3435 = vmul.f32 0.5, %v3434
      %v3436 = vsub.f32 1.5, %v3435
      %v3437 = vmul.f32 %v3432, %v3436
      %vm3438 = vweird.f32 %v3121
      %vm3439 = vweird.f32 %v3432
      %vm3440 = vmor %vm3438, %vm3439
      %v3441 = vsel %vm3440, %v3432, %v3437
      %v3442 = vmul.f32 %v1644, %v3131
      %v3443 = vmul.f32 %v1645, %v3141
      %v3444 = vmul.f32 %v1646, %v3151
      %v3445 = vmul.f32 %v1647, %v3161
      %v3446 = vmul.f32 %v1648, %v3171
      %v3447 = vmul.f32 %v1649, %v3181
      %v3448 = vmul.f32 %v1650, %v3191
      %v3449 = vmul.f32 %v1651, %v3201
      %v3450 = vmul.f32 %v1661, %v3211
      %v3451 = vmul.f32 %v1663, %v3221
      %v3452 = vmul.f32 %v1665, %v3231
      %v3453 = vmul.f32 %v1667, %v3241
      %v3454 = vmul.f32 %v1669, %v3251
      %v3455 = vmul.f32 %v1671, %v3261
      %v3456 = vmul.f32 %v1673, %v3271
      %v3457 = vmul.f32 %v1675, %v3281
      %v3458 = vmul.f32 %v1685, %v3291
      %v3459 = vmul.f32 %v1687, %v3301
      %v3460 = vmul.f32 %v1689, %v3311
      %v3461 = vmul.f32 %v1691, %v3321
      %v3462 = vmul.f32 %v1693, %v3331
      %v3463 = vmul.f32 %v1695, %v3341
      %v3464 = vmul.f32 %v1697, %v3351
      %v3465 = vmul.f32 %v1699, %v3361
      %v3466 = vmul.f32 %v1709, %v3371
      %v3467 = vmul.f32 %v1711, %v3381
      %v3468 = vmul.f32 %v1713, %v3391
      %v3469 = vmul.f32 %v1715, %v3401
      %v3470 = vmul.f32 %v1717, %v3411
      %v3471 = vmul.f32 %v1719, %v3421
      %v3472 = vmul.f32 %v1721, %v3431
      %v3473 = vmul.f32 %v1723, %v3441
      %v3475 = vperm.slane %v2921, 0
      %v3477 = vmul.f32 %v3442, %v3475
      %v3478 = vmul.f32 %v3443, %v3475
      %v3479 = vmul.f32 %v3444, %v3475
      %v3480 = vmul.f32 %v3445, %v3475
      %v3481 = vmul.f32 %v3446, %v3475
      %v3482 = vmul.f32 %v3447, %v3475
      %v3483 = vmul.f32 %v3448, %v3475
      %v3484 = vmul.f32 %v3449, %v3475
      %v3485 = vmul.f32 %v3450, %v3475
      %v3486 = vmul.f32 %v3451, %v3475
      %v3487 = vmul.f32 %v3452, %v3475
      %v3488 = vmul.f32 %v3453, %v3475
      %v3489 = vmul.f32 %v3454, %v3475
      %v3490 = vmul.f32 %v3455, %v3475
      %v3491 = vmul.f32 %v3456, %v3475
      %v3492 = vmul.f32 %v3457, %v3475
      %v3493 = vmul.f32 %v3458, %v3475
      %v3494 = vmul.f32 %v3459, %v3475
      %v3495 = vmul.f32 %v3460, %v3475
      %v3496 = vmul.f32 %v3461, %v3475
      %v3497 = vmul.f32 %v3462, %v3475
      %v3498 = vmul.f32 %v3463, %v3475
      %v3499 = vmul.f32 %v3464, %v3475
      %v3500 = vmul.f32 %v3465, %v3475
      %v3501 = vmul.f32 %v3466, %v3475
      %v3502 = vmul.f32 %v3467, %v3475
      %v3503 = vmul.f32 %v3468, %v3475
      %v3504 = vmul.f32 %v3469, %v3475
      %v3505 = vmul.f32 %v3470, %v3475
      %v3506 = vmul.f32 %v3471, %v3475
      %v3507 = vmul.f32 %v3472, %v3475
      %v3508 = vmul.f32 %v3473, %v3475
      %v3509 = vmul.f32 %v2647, %v2647
      %v3510 = vmul.f32 %v2649, %v2649
      %v3511 = vmul.f32 %v2652, %v2652
      %v3512 = vmul.f32 %v2654, %v2654
      %v3513 = vmul.f32 %v2657, %v2657
      %v3514 = vmul.f32 %v2659, %v2659
      %v3515 = vmul.f32 %v2662, %v2662
      %v3516 = vmul.f32 %v2664, %v2664
      %v3517 = vmul.f32 %v2732, %v2732
      %v3518 = vmul.f32 %v2734, %v2734
      %v3519 = vmul.f32 %v2737, %v2737
      %v3520 = vmul.f32 %v2739, %v2739
      %v3521 = vmul.f32 %v2742, %v2742
      %v3522 = vmul.f32 %v2744, %v2744
      %v3523 = vmul.f32 %v2747, %v2747
      %v3524 = vmul.f32 %v2749, %v2749
      %v3525 = vmul.f32 %v2817, %v2817
      %v3526 = vmul.f32 %v2819, %v2819
      %v3527 = vmul.f32 %v2822, %v2822
      %v3528 = vmul.f32 %v2824, %v2824
      %v3529 = vmul.f32 %v2827, %v2827
      %v3530 = vmul.f32 %v2829, %v2829
      %v3531 = vmul.f32 %v2832, %v2832
      %v3532 = vmul.f32 %v2834, %v2834
      %v3533 = vmul.f32 %v2902, %v2902
      %v3534 = vmul.f32 %v2904, %v2904
      %v3535 = vmul.f32 %v2907, %v2907
      %v3536 = vmul.f32 %v2909, %v2909
      %v3537 = vmul.f32 %v2912, %v2912
      %v3538 = vmul.f32 %v2914, %v2914
      %v3539 = vmul.f32 %v2917, %v2917
      %v3540 = vmul.f32 %v2919, %v2919
      %v3541 = vsel %vm1780, %v3509, 0.0
      %3542 = vadd.xlane.f32.xlu0 %v3541
      %v3543 = vpop.xlane.xlu0 %3542
      %v3544 = vsel %vm1780, %v3510, 0.0
      %3545 = vadd.xlane.f32.xlu0 %v3544
      %v3546 = vpop.xlane.xlu0 %3545
      %v3547 = vsel %vm1780, %v3511, 0.0
      %3548 = vadd.xlane.f32.xlu0 %v3547
      %v3549 = vpop.xlane.xlu0 %3548
      %v3550 = vsel %vm1780, %v3512, 0.0
      %3551 = vadd.xlane.f32.xlu0 %v3550
      %v3552 = vpop.xlane.xlu0 %3551
      %v3553 = vsel %vm1780, %v3513, 0.0
      %3554 = vadd.xlane.f32.xlu0 %v3553
      %v3555 = vpop.xlane.xlu0 %3554
      %v3556 = vsel %vm1780, %v3514, 0.0
      %3557 = vadd.xlane.f32.xlu0 %v3556
      %v3558 = vpop.xlane.xlu0 %3557
      %v3559 = vsel %vm1780, %v3515, 0.0
      %3560 = vadd.xlane.f32.xlu0 %v3559
      %v3561 = vpop.xlane.xlu0 %3560
      %v3562 = vsel %vm1780, %v3516, 0.0
      %3563 = vadd.xlane.f32.xlu0 %v3562
      %v3564 = vpop.xlane.xlu0 %3563
      %v3565 = vsel %vm1780, %v3517, 0.0
      %3566 = vadd.xlane.f32.xlu0 %v3565
      %v3567 = vpop.xlane.xlu0 %3566
      %v3568 = vsel %vm1780, %v3518, 0.0
      %3569 = vadd.xlane.f32.xlu0 %v3568
      %v3570 = vpop.xlane.xlu0 %3569
      %v3571 = vsel %vm1780, %v3519, 0.0
      %3572 = vadd.xlane.f32.xlu0 %v3571
      %v3573 = vpop.xlane.xlu0 %3572
      %v3574 = vsel %vm1780, %v3520, 0.0
      %3575 = vadd.xlane.f32.xlu0 %v3574
      %v3576 = vpop.xlane.xlu0 %3575
      %v3577 = vsel %vm1780, %v3521, 0.0
      %3578 = vadd.xlane.f32.xlu0 %v3577
      %v3579 = vpop.xlane.xlu0 %3578
      %v3580 = vsel %vm1780, %v3522, 0.0
      %3581 = vadd.xlane.f32.xlu0 %v3580
      %v3582 = vpop.xlane.xlu0 %3581
      %v3583 = vsel %vm1780, %v3523, 0.0
      %3584 = vadd.xlane.f32.xlu0 %v3583
      %v3585 = vpop.xlane.xlu0 %3584
      %v3586 = vsel %vm1780, %v3524, 0.0
      %3587 = vadd.xlane.f32.xlu0 %v3586
      %v3588 = vpop.xlane.xlu0 %3587
      %v3589 = vsel %vm1780, %v3525, 0.0
      %3590 = vadd.xlane.f32.xlu0 %v3589
      %v3591 = vpop.xlane.xlu0 %3590
      %v3592 = vsel %vm1780, %v3526, 0.0
      %3593 = vadd.xlane.f32.xlu0 %v3592
      %v3594 = vpop.xlane.xlu0 %3593
      %v3595 = vsel %vm1780, %v3527, 0.0
      %3596 = vadd.xlane.f32.xlu0 %v3595
      %v3597 = vpop.xlane.xlu0 %3596
      %v3598 = vsel %vm1780, %v3528, 0.0
      %3599 = vadd.xlane.f32.xlu0 %v3598
      %v3600 = vpop.xlane.xlu0 %3599
      %v3601 = vsel %vm1780, %v3529, 0.0
      %3602 = vadd.xlane.f32.xlu0 %v3601
      %v3603 = vpop.xlane.xlu0 %3602
      %v3604 = vsel %vm1780, %v3530, 0.0
      %3605 = vadd.xlane.f32.xlu0 %v3604
      %v3606 = vpop.xlane.xlu0 %3605
      %v3607 = vsel %vm1780, %v3531, 0.0
      %3608 = vadd.xlane.f32.xlu0 %v3607
      %v3609 = vpop.xlane.xlu0 %3608
      %v3610 = vsel %vm1780, %v3532, 0.0
      %3611 = vadd.xlane.f32.xlu0 %v3610
      %v3612 = vpop.xlane.xlu0 %3611
      %v3613 = vsel %vm1780, %v3533, 0.0
      %3614 = vadd.xlane.f32.xlu0 %v3613
      %v3615 = vpop.xlane.xlu0 %3614
      %v3616 = vsel %vm1780, %v3534, 0.0
      %3617 = vadd.xlane.f32.xlu0 %v3616
      %v3618 = vpop.xlane.xlu0 %3617
      %v3619 = vsel %vm1780, %v3535, 0.0
      %3620 = vadd.xlane.f32.xlu0 %v3619
      %v3621 = vpop.xlane.xlu0 %3620
      %v3622 = vsel %vm1780, %v3536, 0.0
      %3623 = vadd.xlane.f32.xlu0 %v3622
      %v3624 = vpop.xlane.xlu0 %3623
      %v3625 = vsel %vm1780, %v3537, 0.0
      %3626 = vadd.xlane.f32.xlu0 %v3625
      %v3627 = vpop.xlane.xlu0 %3626
      %v3628 = vsel %vm1780, %v3538, 0.0
      %3629 = vadd.xlane.f32.xlu0 %v3628
      %v3630 = vpop.xlane.xlu0 %3629
      %v3631 = vsel %vm1780, %v3539, 0.0
      %3632 = vadd.xlane.f32.xlu0 %v3631
      %v3633 = vpop.xlane.xlu0 %3632
      %v3634 = vsel %vm1780, %v3540, 0.0
      %3635 = vadd.xlane.f32.xlu0 %v3634
      %v3636 = vpop.xlane.xlu0 %3635
      %v3637 = vmul.f32 %v3543, %v3057
      %v3638 = vmul.f32 %v3546, %v3057
      %v3639 = vmul.f32 %v3549, %v3057
      %v3640 = vmul.f32 %v3552, %v3057
      %v3641 = vmul.f32 %v3555, %v3057
      %v3642 = vmul.f32 %v3558, %v3057
      %v3643 = vmul.f32 %v3561, %v3057
      %v3644 = vmul.f32 %v3564, %v3057
      %v3645 = vmul.f32 %v3567, %v3057
      %v3646 = vmul.f32 %v3570, %v3057
      %v3647 = vmul.f32 %v3573, %v3057
      %v3648 = vmul.f32 %v3576, %v3057
      %v3649 = vmul.f32 %v3579, %v3057
      %v3650 = vmul.f32 %v3582, %v3057
      %v3651 = vmul.f32 %v3585, %v3057
      %v3652 = vmul.f32 %v3588, %v3057
      %v3653 = vmul.f32 %v3591, %v3057
      %v3654 = vmul.f32 %v3594, %v3057
      %v3655 = vmul.f32 %v3597, %v3057
      %v3656 = vmul.f32 %v3600, %v3057
      %v3657 = vmul.f32 %v3603, %v3057
      %v3658 = vmul.f32 %v3606, %v3057
      %v3659 = vmul.f32 %v3609, %v3057
      %v3660 = vmul.f32 %v3612, %v3057
      %v3661 = vmul.f32 %v3615, %v3057
      %v3662 = vmul.f32 %v3618, %v3057
      %v3663 = vmul.f32 %v3621, %v3057
      %v3664 = vmul.f32 %v3624, %v3057
      %v3665 = vmul.f32 %v3627, %v3057
      %v3666 = vmul.f32 %v3630, %v3057
      %v3667 = vmul.f32 %v3633, %v3057
      %v3668 = vmul.f32 %v3636, %v3057
      %v3669 = vadd.f32 %v3637, 1.1920929e-07
      %v3670 = vadd.f32 %v3638, 1.1920929e-07
      %v3671 = vadd.f32 %v3639, 1.1920929e-07
      %v3672 = vadd.f32 %v3640, 1.1920929e-07
      %v3673 = vadd.f32 %v3641, 1.1920929e-07
      %v3674 = vadd.f32 %v3642, 1.1920929e-07
      %v3675 = vadd.f32 %v3643, 1.1920929e-07
      %v3676 = vadd.f32 %v3644, 1.1920929e-07
      %v3677 = vadd.f32 %v3645, 1.1920929e-07
      %v3678 = vadd.f32 %v3646, 1.1920929e-07
      %v3679 = vadd.f32 %v3647, 1.1920929e-07
      %v3680 = vadd.f32 %v3648, 1.1920929e-07
      %v3681 = vadd.f32 %v3649, 1.1920929e-07
      %v3682 = vadd.f32 %v3650, 1.1920929e-07
      %v3683 = vadd.f32 %v3651, 1.1920929e-07
      %v3684 = vadd.f32 %v3652, 1.1920929e-07
      %v3685 = vadd.f32 %v3653, 1.1920929e-07
      %v3686 = vadd.f32 %v3654, 1.1920929e-07
      %v3687 = vadd.f32 %v3655, 1.1920929e-07
      %v3688 = vadd.f32 %v3656, 1.1920929e-07
      %v3689 = vadd.f32 %v3657, 1.1920929e-07
      %v3690 = vadd.f32 %v3658, 1.1920929e-07
      %v3691 = vadd.f32 %v3659, 1.1920929e-07
      %v3692 = vadd.f32 %v3660, 1.1920929e-07
      %v3693 = vadd.f32 %v3661, 1.1920929e-07
      %v3694 = vadd.f32 %v3662, 1.1920929e-07
      %v3695 = vadd.f32 %v3663, 1.1920929e-07
      %v3696 = vadd.f32 %v3664, 1.1920929e-07
      %v3697 = vadd.f32 %v3665, 1.1920929e-07
      %v3698 = vadd.f32 %v3666, 1.1920929e-07
      %v3699 = vadd.f32 %v3667, 1.1920929e-07
      %v3700 = vadd.f32 %v3668, 1.1920929e-07
      %v3701 = vrsqrt.pop %v3669
      %v3702 = vmul.f32 %v3701, %v3669
      %v3703 = vmul.f32 %v3702, %v3701
      %v3704 = vmul.f32 0.5, %v3703
      %v3705 = vsub.f32 1.5, %v3704
      %v3706 = vmul.f32 %v3701, %v3705
      %vm3707 = vweird.f32 %v3669
      %vm3708 = vweird.f32 %v3701
      %vm3709 = vmor %vm3707, %vm3708
      %v3710 = vsel %vm3709, %v3701, %v3706
      %v3711 = vrsqrt.pop %v3670
      %v3712 = vmul.f32 %v3711, %v3670
      %v3713 = vmul.f32 %v3712, %v3711
      %v3714 = vmul.f32 0.5, %v3713
      %v3715 = vsub.f32 1.5, %v3714
      %v3716 = vmul.f32 %v3711, %v3715
      %vm3717 = vweird.f32 %v3670
      %vm3718 = vweird.f32 %v3711
      %vm3719 = vmor %vm3717, %vm3718
      %v3720 = vsel %vm3719, %v3711, %v3716
      %v3721 = vrsqrt.pop %v3671
      %v3722 = vmul.f32 %v3721, %v3671
      %v3723 = vmul.f32 %v3722, %v3721
      %v3724 = vmul.f32 0.5, %v3723
      %v3725 = vsub.f32 1.5, %v3724
      %v3726 = vmul.f32 %v3721, %v3725
      %vm3727 = vweird.f32 %v3671
      %vm3728 = vweird.f32 %v3721
      %vm3729 = vmor %vm3727, %vm3728
      %v3730 = vsel %vm3729, %v3721, %v3726
      %v3731 = vrsqrt.pop %v3672
      %v3732 = vmul.f32 %v3731, %v3672
      %v3733 = vmul.f32 %v3732, %v3731
      %v3734 = vmul.f32 0.5, %v3733
      %v3735 = vsub.f32 1.5, %v3734
      %v3736 = vmul.f32 %v3731, %v3735
      %vm3737 = vweird.f32 %v3672
      %vm3738 = vweird.f32 %v3731
      %vm3739 = vmor %vm3737, %vm3738
      %v3740 = vsel %vm3739, %v3731, %v3736
      %v3741 = vrsqrt.pop %v3673
      %v3742 = vmul.f32 %v3741, %v3673
      %v3743 = vmul.f32 %v3742, %v3741
      %v3744 = vmul.f32 0.5, %v3743
      %v3745 = vsub.f32 1.5, %v3744
      %v3746 = vmul.f32 %v3741, %v3745
      %vm3747 = vweird.f32 %v3673
      %vm3748 = vweird.f32 %v3741
      %vm3749 = vmor %vm3747, %vm3748
      %v3750 = vsel %vm3749, %v3741, %v3746
      %v3751 = vrsqrt.pop %v3674
      %v3752 = vmul.f32 %v3751, %v3674
      %v3753 = vmul.f32 %v3752, %v3751
      %v3754 = vmul.f32 0.5, %v3753
      %v3755 = vsub.f32 1.5, %v3754
      %v3756 = vmul.f32 %v3751, %v3755
      %vm3757 = vweird.f32 %v3674
      %vm3758 = vweird.f32 %v3751
      %vm3759 = vmor %vm3757, %vm3758
      %v3760 = vsel %vm3759, %v3751, %v3756
      %v3761 = vrsqrt.pop %v3675
      %v3762 = vmul.f32 %v3761, %v3675
      %v3763 = vmul.f32 %v3762, %v3761
      %v3764 = vmul.f32 0.5, %v3763
      %v3765 = vsub.f32 1.5, %v3764
      %v3766 = vmul.f32 %v3761, %v3765
      %vm3767 = vweird.f32 %v3675
      %vm3768 = vweird.f32 %v3761
      %vm3769 = vmor %vm3767, %vm3768
      %v3770 = vsel %vm3769, %v3761, %v3766
      %v3771 = vrsqrt.pop %v3676
      %v3772 = vmul.f32 %v3771, %v3676
      %v3773 = vmul.f32 %v3772, %v3771
      %v3774 = vmul.f32 0.5, %v3773
      %v3775 = vsub.f32 1.5, %v3774
      %v3776 = vmul.f32 %v3771, %v3775
      %vm3777 = vweird.f32 %v3676
      %vm3778 = vweird.f32 %v3771
      %vm3779 = vmor %vm3777, %vm3778
      %v3780 = vsel %vm3779, %v3771, %v3776
      %v3781 = vrsqrt.pop %v3677
      %v3782 = vmul.f32 %v3781, %v3677
      %v3783 = vmul.f32 %v3782, %v3781
      %v3784 = vmul.f32 0.5, %v3783
      %v3785 = vsub.f32 1.5, %v3784
      %v3786 = vmul.f32 %v3781, %v3785
      %vm3787 = vweird.f32 %v3677
      %vm3788 = vweird.f32 %v3781
      %vm3789 = vmor %vm3787, %vm3788
      %v3790 = vsel %vm3789, %v3781, %v3786
      %v3791 = vrsqrt.pop %v3678
      %v3792 = vmul.f32 %v3791, %v3678
      %v3793 = vmul.f32 %v3792, %v3791
      %v3794 = vmul.f32 0.5, %v3793
      %v3795 = vsub.f32 1.5, %v3794
      %v3796 = vmul.f32 %v3791, %v3795
      %vm3797 = vweird.f32 %v3678
      %vm3798 = vweird.f32 %v3791
      %vm3799 = vmor %vm3797, %vm3798
      %v3800 = vsel %vm3799, %v3791, %v3796
      %v3801 = vrsqrt.pop %v3679
      %v3802 = vmul.f32 %v3801, %v3679
      %v3803 = vmul.f32 %v3802, %v3801
      %v3804 = vmul.f32 0.5, %v3803
      %v3805 = vsub.f32 1.5, %v3804
      %v3806 = vmul.f32 %v3801, %v3805
      %vm3807 = vweird.f32 %v3679
      %vm3808 = vweird.f32 %v3801
      %vm3809 = vmor %vm3807, %vm3808
      %v3810 = vsel %vm3809, %v3801, %v3806
      %v3811 = vrsqrt.pop %v3680
      %v3812 = vmul.f32 %v3811, %v3680
      %v3813 = vmul.f32 %v3812, %v3811
      %v3814 = vmul.f32 0.5, %v3813
      %v3815 = vsub.f32 1.5, %v3814
      %v3816 = vmul.f32 %v3811, %v3815
      %vm3817 = vweird.f32 %v3680
      %vm3818 = vweird.f32 %v3811
      %vm3819 = vmor %vm3817, %vm3818
      %v3820 = vsel %vm3819, %v3811, %v3816
      %v3821 = vrsqrt.pop %v3681
      %v3822 = vmul.f32 %v3821, %v3681
      %v3823 = vmul.f32 %v3822, %v3821
      %v3824 = vmul.f32 0.5, %v3823
      %v3825 = vsub.f32 1.5, %v3824
      %v3826 = vmul.f32 %v3821, %v3825
      %vm3827 = vweird.f32 %v3681
      %vm3828 = vweird.f32 %v3821
      %vm3829 = vmor %vm3827, %vm3828
      %v3830 = vsel %vm3829, %v3821, %v3826
      %v3831 = vrsqrt.pop %v3682
      %v3832 = vmul.f32 %v3831, %v3682
      %v3833 = vmul.f32 %v3832, %v3831
      %v3834 = vmul.f32 0.5, %v3833
      %v3835 = vsub.f32 1.5, %v3834
      %v3836 = vmul.f32 %v3831, %v3835
      %vm3837 = vweird.f32 %v3682
      %vm3838 = vweird.f32 %v3831
      %vm3839 = vmor %vm3837, %vm3838
      %v3840 = vsel %vm3839, %v3831, %v3836
      %v3841 = vrsqrt.pop %v3683
      %v3842 = vmul.f32 %v3841, %v3683
      %v3843 = vmul.f32 %v3842, %v3841
      %v3844 = vmul.f32 0.5, %v3843
      %v3845 = vsub.f32 1.5, %v3844
      %v3846 = vmul.f32 %v3841, %v3845
      %vm3847 = vweird.f32 %v3683
      %vm3848 = vweird.f32 %v3841
      %vm3849 = vmor %vm3847, %vm3848
      %v3850 = vsel %vm3849, %v3841, %v3846
      %v3851 = vrsqrt.pop %v3684
      %v3852 = vmul.f32 %v3851, %v3684
      %v3853 = vmul.f32 %v3852, %v3851
      %v3854 = vmul.f32 0.5, %v3853
      %v3855 = vsub.f32 1.5, %v3854
      %v3856 = vmul.f32 %v3851, %v3855
      %vm3857 = vweird.f32 %v3684
      %vm3858 = vweird.f32 %v3851
      %vm3859 = vmor %vm3857, %vm3858
      %v3860 = vsel %vm3859, %v3851, %v3856
      %v3861 = vrsqrt.pop %v3685
      %v3862 = vmul.f32 %v3861, %v3685
      %v3863 = vmul.f32 %v3862, %v3861
      %v3864 = vmul.f32 0.5, %v3863
      %v3865 = vsub.f32 1.5, %v3864
      %v3866 = vmul.f32 %v3861, %v3865
      %vm3867 = vweird.f32 %v3685
      %vm3868 = vweird.f32 %v3861
      %vm3869 = vmor %vm3867, %vm3868
      %v3870 = vsel %vm3869, %v3861, %v3866
      %v3871 = vrsqrt.pop %v3686
      %v3872 = vmul.f32 %v3871, %v3686
      %v3873 = vmul.f32 %v3872, %v3871
      %v3874 = vmul.f32 0.5, %v3873
      %v3875 = vsub.f32 1.5, %v3874
      %v3876 = vmul.f32 %v3871, %v3875
      %vm3877 = vweird.f32 %v3686
      %vm3878 = vweird.f32 %v3871
      %vm3879 = vmor %vm3877, %vm3878
      %v3880 = vsel %vm3879, %v3871, %v3876
      %v3881 = vrsqrt.pop %v3687
      %v3882 = vmul.f32 %v3881, %v3687
      %v3883 = vmul.f32 %v3882, %v3881
      %v3884 = vmul.f32 0.5, %v3883
      %v3885 = vsub.f32 1.5, %v3884
      %v3886 = vmul.f32 %v3881, %v3885
      %vm3887 = vweird.f32 %v3687
      %vm3888 = vweird.f32 %v3881
      %vm3889 = vmor %vm3887, %vm3888
      %v3890 = vsel %vm3889, %v3881, %v3886
      %v3891 = vrsqrt.pop %v3688
      %v3892 = vmul.f32 %v3891, %v3688
      %v3893 = vmul.f32 %v3892, %v3891
      %v3894 = vmul.f32 0.5, %v3893
      %v3895 = vsub.f32 1.5, %v3894
      %v3896 = vmul.f32 %v3891, %v3895
      %vm3897 = vweird.f32 %v3688
      %vm3898 = vweird.f32 %v3891
      %vm3899 = vmor %vm3897, %vm3898
      %v3900 = vsel %vm3899, %v3891, %v3896
      %v3901 = vrsqrt.pop %v3689
      %v3902 = vmul.f32 %v3901, %v3689
      %v3903 = vmul.f32 %v3902, %v3901
      %v3904 = vmul.f32 0.5, %v3903
      %v3905 = vsub.f32 1.5, %v3904
      %v3906 = vmul.f32 %v3901, %v3905
      %vm3907 = vweird.f32 %v3689
      %vm3908 = vweird.f32 %v3901
      %vm3909 = vmor %vm3907, %vm3908
      %v3910 = vsel %vm3909, %v3901, %v3906
      %v3911 = vrsqrt.pop %v3690
      %v3912 = vmul.f32 %v3911, %v3690
      %v3913 = vmul.f32 %v3912, %v3911
      %v3914 = vmul.f32 0.5, %v3913
      %v3915 = vsub.f32 1.5, %v3914
      %v3916 = vmul.f32 %v3911, %v3915
      %vm3917 = vweird.f32 %v3690
      %vm3918 = vweird.f32 %v3911
      %vm3919 = vmor %vm3917, %vm3918
      %v3920 = vsel %vm3919, %v3911, %v3916
      %v3921 = vrsqrt.pop %v3691
      %v3922 = vmul.f32 %v3921, %v3691
      %v3923 = vmul.f32 %v3922, %v3921
      %v3924 = vmul.f32 0.5, %v3923
      %v3925 = vsub.f32 1.5, %v3924
      %v3926 = vmul.f32 %v3921, %v3925
      %vm3927 = vweird.f32 %v3691
      %vm3928 = vweird.f32 %v3921
      %vm3929 = vmor %vm3927, %vm3928
      %v3930 = vsel %vm3929, %v3921, %v3926
      %v3931 = vrsqrt.pop %v3692
      %v3932 = vmul.f32 %v3931, %v3692
      %v3933 = vmul.f32 %v3932, %v3931
      %v3934 = vmul.f32 0.5, %v3933
      %v3935 = vsub.f32 1.5, %v3934
      %v3936 = vmul.f32 %v3931, %v3935
      %vm3937 = vweird.f32 %v3692
      %vm3938 = vweird.f32 %v3931
      %vm3939 = vmor %vm3937, %vm3938
      %v3940 = vsel %vm3939, %v3931, %v3936
      %v3941 = vrsqrt.pop %v3693
      %v3942 = vmul.f32 %v3941, %v3693
      %v3943 = vmul.f32 %v3942, %v3941
      %v3944 = vmul.f32 0.5, %v3943
      %v3945 = vsub.f32 1.5, %v3944
      %v3946 = vmul.f32 %v3941, %v3945
      %vm3947 = vweird.f32 %v3693
      %vm3948 = vweird.f32 %v3941
      %vm3949 = vmor %vm3947, %vm3948
      %v3950 = vsel %vm3949, %v3941, %v3946
      %v3951 = vrsqrt.pop %v3694
      %v3952 = vmul.f32 %v3951, %v3694
      %v3953 = vmul.f32 %v3952, %v3951
      %v3954 = vmul.f32 0.5, %v3953
      %v3955 = vsub.f32 1.5, %v3954
      %v3956 = vmul.f32 %v3951, %v3955
      %vm3957 = vweird.f32 %v3694
      %vm3958 = vweird.f32 %v3951
      %vm3959 = vmor %vm3957, %vm3958
      %v3960 = vsel %vm3959, %v3951, %v3956
      %v3961 = vrsqrt.pop %v3695
      %v3962 = vmul.f32 %v3961, %v3695
      %v3963 = vmul.f32 %v3962, %v3961
      %v3964 = vmul.f32 0.5, %v3963
      %v3965 = vsub.f32 1.5, %v3964
      %v3966 = vmul.f32 %v3961, %v3965
      %vm3967 = vweird.f32 %v3695
      %vm3968 = vweird.f32 %v3961
      %vm3969 = vmor %vm3967, %vm3968
      %v3970 = vsel %vm3969, %v3961, %v3966
      %v3971 = vrsqrt.pop %v3696
      %v3972 = vmul.f32 %v3971, %v3696
      %v3973 = vmul.f32 %v3972, %v3971
      %v3974 = vmul.f32 0.5, %v3973
      %v3975 = vsub.f32 1.5, %v3974
      %v3976 = vmul.f32 %v3971, %v3975
      %vm3977 = vweird.f32 %v3696
      %vm3978 = vweird.f32 %v3971
      %vm3979 = vmor %vm3977, %vm3978
      %v3980 = vsel %vm3979, %v3971, %v3976
      %v3981 = vrsqrt.pop %v3697
      %v3982 = vmul.f32 %v3981, %v3697
      %v3983 = vmul.f32 %v3982, %v3981
      %v3984 = vmul.f32 0.5, %v3983
      %v3985 = vsub.f32 1.5, %v3984
      %v3986 = vmul.f32 %v3981, %v3985
      %vm3987 = vweird.f32 %v3697
      %vm3988 = vweird.f32 %v3981
      %vm3989 = vmor %vm3987, %vm3988
      %v3990 = vsel %vm3989, %v3981, %v3986
      %v3991 = vrsqrt.pop %v3698
      %v3992 = vmul.f32 %v3991, %v3698
      %v3993 = vmul.f32 %v3992, %v3991
      %v3994 = vmul.f32 0.5, %v3993
      %v3995 = vsub.f32 1.5, %v3994
      %v3996 = vmul.f32 %v3991, %v3995
      %vm3997 = vweird.f32 %v3698
      %vm3998 = vweird.f32 %v3991
      %vm3999 = vmor %vm3997, %vm3998
      %v4000 = vsel %vm3999, %v3991, %v3996
      %v4001 = vrsqrt.pop %v3699
      %v4002 = vmul.f32 %v4001, %v3699
      %v4003 = vmul.f32 %v4002, %v4001
      %v4004 = vmul.f32 0.5, %v4003
      %v4005 = vsub.f32 1.5, %v4004
      %v4006 = vmul.f32 %v4001, %v4005
      %vm4007 = vweird.f32 %v3699
      %vm4008 = vweird.f32 %v4001
      %vm4009 = vmor %vm4007, %vm4008
      %v4010 = vsel %vm4009, %v4001, %v4006
      %v4011 = vrsqrt.pop %v3700
      %v4012 = vmul.f32 %v4011, %v3700
      %v4013 = vmul.f32 %v4012, %v4011
      %v4014 = vmul.f32 0.5, %v4013
      %v4015 = vsub.f32 1.5, %v4014
      %v4016 = vmul.f32 %v4011, %v4015
      %vm4017 = vweird.f32 %v3700
      %vm4018 = vweird.f32 %v4011
      %vm4019 = vmor %vm4017, %vm4018
      %v4020 = vsel %vm4019, %v4011, %v4016
      %v4021 = vmul.f32 %v2647, %v3710
      %v4022 = vmul.f32 %v2649, %v3720
      %v4023 = vmul.f32 %v2652, %v3730
      %v4024 = vmul.f32 %v2654, %v3740
      %v4025 = vmul.f32 %v2657, %v3750
      %v4026 = vmul.f32 %v2659, %v3760
      %v4027 = vmul.f32 %v2662, %v3770
      %v4028 = vmul.f32 %v2664, %v3780
      %v4029 = vmul.f32 %v2732, %v3790
      %v4030 = vmul.f32 %v2734, %v3800
      %v4031 = vmul.f32 %v2737, %v3810
      %v4032 = vmul.f32 %v2739, %v3820
      %v4033 = vmul.f32 %v2742, %v3830
      %v4034 = vmul.f32 %v2744, %v3840
      %v4035 = vmul.f32 %v2747, %v3850
      %v4036 = vmul.f32 %v2749, %v3860
      %v4037 = vmul.f32 %v2817, %v3870
      %v4038 = vmul.f32 %v2819, %v3880
      %v4039 = vmul.f32 %v2822, %v3890
      %v4040 = vmul.f32 %v2824, %v3900
      %v4041 = vmul.f32 %v2827, %v3910
      %v4042 = vmul.f32 %v2829, %v3920
      %v4043 = vmul.f32 %v2832, %v3930
      %v4044 = vmul.f32 %v2834, %v3940
      %v4045 = vmul.f32 %v2902, %v3950
      %v4046 = vmul.f32 %v2904, %v3960
      %v4047 = vmul.f32 %v2907, %v3970
      %v4048 = vmul.f32 %v2909, %v3980
      %v4049 = vmul.f32 %v2912, %v3990
      %v4050 = vmul.f32 %v2914, %v4000
      %v4051 = vmul.f32 %v2917, %v4010
      %v4052 = vmul.f32 %v2919, %v4020
      %v4054 = vperm.slane %v2922, 0
      %v4056 = vmul.f32 %v4021, %v4054
      %v4057 = vmul.f32 %v4022, %v4054
      %v4058 = vmul.f32 %v4023, %v4054
      %v4059 = vmul.f32 %v4024, %v4054
      %v4060 = vmul.f32 %v4025, %v4054
      %v4061 = vmul.f32 %v4026, %v4054
      %v4062 = vmul.f32 %v4027, %v4054
      %v4063 = vmul.f32 %v4028, %v4054
      %v4064 = vmul.f32 %v4029, %v4054
      %v4065 = vmul.f32 %v4030, %v4054
      %v4066 = vmul.f32 %v4031, %v4054
      %v4067 = vmul.f32 %v4032, %v4054
      %v4068 = vmul.f32 %v4033, %v4054
      %v4069 = vmul.f32 %v4034, %v4054
      %v4070 = vmul.f32 %v4035, %v4054
      %v4071 = vmul.f32 %v4036, %v4054
      %v4072 = vmul.f32 %v4037, %v4054
      %v4073 = vmul.f32 %v4038, %v4054
      %v4074 = vmul.f32 %v4039, %v4054
      %v4075 = vmul.f32 %v4040, %v4054
      %v4076 = vmul.f32 %v4041, %v4054
      %v4077 = vmul.f32 %v4042, %v4054
      %v4078 = vmul.f32 %v4043, %v4054
      %v4079 = vmul.f32 %v4044, %v4054
      %v4080 = vmul.f32 %v4045, %v4054
      %v4081 = vmul.f32 %v4046, %v4054
      %v4082 = vmul.f32 %v4047, %v4054
      %v4083 = vmul.f32 %v4048, %v4054
      %v4084 = vmul.f32 %v4049, %v4054
      %v4085 = vmul.f32 %v4050, %v4054
      %v4086 = vmul.f32 %v4051, %v4054
      %v4087 = vmul.f32 %v4052, %v4054
      %v4088 = vadd.f32 %v3477, %v4056
      %v4089 = vadd.f32 %v3478, %v4057
      %v4090 = vadd.f32 %v3479, %v4058
      %v4091 = vadd.f32 %v3480, %v4059
      %v4092 = vadd.f32 %v3481, %v4060
      %v4093 = vadd.f32 %v3482, %v4061
      %v4094 = vadd.f32 %v3483, %v4062
      %v4095 = vadd.f32 %v3484, %v4063
      %v4096 = vadd.f32 %v3485, %v4064
      %v4097 = vadd.f32 %v3486, %v4065
      %v4098 = vadd.f32 %v3487, %v4066
      %v4099 = vadd.f32 %v3488, %v4067
      %v4100 = vadd.f32 %v3489, %v4068
      %v4101 = vadd.f32 %v3490, %v4069
      %v4102 = vadd.f32 %v3491, %v4070
      %v4103 = vadd.f32 %v3492, %v4071
      %v4104 = vadd.f32 %v3493, %v4072
      %v4105 = vadd.f32 %v3494, %v4073
      %v4106 = vadd.f32 %v3495, %v4074
      %v4107 = vadd.f32 %v3496, %v4075
      %v4108 = vadd.f32 %v3497, %v4076
      %v4109 = vadd.f32 %v3498, %v4077
      %v4110 = vadd.f32 %v3499, %v4078
      %v4111 = vadd.f32 %v3500, %v4079
      %v4112 = vadd.f32 %v3501, %v4080
      %v4113 = vadd.f32 %v3502, %v4081
      %v4114 = vadd.f32 %v3503, %v4082
      %v4115 = vadd.f32 %v3504, %v4083
      %v4116 = vadd.f32 %v3505, %v4084
      %v4117 = vadd.f32 %v3506, %v4085
      %v4118 = vadd.f32 %v3507, %v4086
      %v4119 = vadd.f32 %v3508, %v4087
      %v4120 = vmul.f32 %v4088, 0.5
      %v4121 = vmul.f32 %v4089, 0.5
      %v4122 = vmul.f32 %v4090, 0.5
      %v4123 = vmul.f32 %v4091, 0.5
      %v4124 = vmul.f32 %v4092, 0.5
      %v4125 = vmul.f32 %v4093, 0.5
      %v4126 = vmul.f32 %v4094, 0.5
      %v4127 = vmul.f32 %v4095, 0.5
      %v4128 = vmul.f32 %v4096, 0.5
      %v4129 = vmul.f32 %v4097, 0.5
      %v4130 = vmul.f32 %v4098, 0.5
      %v4131 = vmul.f32 %v4099, 0.5
      %v4132 = vmul.f32 %v4100, 0.5
      %v4133 = vmul.f32 %v4101, 0.5
      %v4134 = vmul.f32 %v4102, 0.5
      %v4135 = vmul.f32 %v4103, 0.5
      %v4136 = vmul.f32 %v4104, 0.5
      %v4137 = vmul.f32 %v4105, 0.5
      %v4138 = vmul.f32 %v4106, 0.5
      %v4139 = vmul.f32 %v4107, 0.5
      %v4140 = vmul.f32 %v4108, 0.5
      %v4141 = vmul.f32 %v4109, 0.5
      %v4142 = vmul.f32 %v4110, 0.5
      %v4143 = vmul.f32 %v4111, 0.5
      %v4144 = vmul.f32 %v4112, 0.5
      %v4145 = vmul.f32 %v4113, 0.5
      %v4146 = vmul.f32 %v4114, 0.5
      %v4147 = vmul.f32 %v4115, 0.5
      %v4148 = vmul.f32 %v4116, 0.5
      %v4149 = vmul.f32 %v4117, 0.5
      %v4150 = vmul.f32 %v4118, 0.5
      %v4151 = vmul.f32 %v4119, 0.5
      %v4152 = vpack.c.bf16 %v4120, %v4120
      %v4153 = vpack.c.bf16 %v4121, %v4121
      %v4154 = vpack.c.bf16 %v4122, %v4122
      %v4155 = vpack.c.bf16 %v4123, %v4123
      %v4156 = vpack.c.bf16 %v4124, %v4124
      %v4157 = vpack.c.bf16 %v4125, %v4125
      %v4158 = vpack.c.bf16 %v4126, %v4126
      %v4159 = vpack.c.bf16 %v4127, %v4127
      %v4160 = vpack.c.bf16 %v4128, %v4128
      %v4161 = vpack.c.bf16 %v4129, %v4129
      %v4162 = vpack.c.bf16 %v4130, %v4130
      %v4163 = vpack.c.bf16 %v4131, %v4131
      %v4164 = vpack.c.bf16 %v4132, %v4132
      %v4165 = vpack.c.bf16 %v4133, %v4133
      %v4166 = vpack.c.bf16 %v4134, %v4134
      %v4167 = vpack.c.bf16 %v4135, %v4135
      %v4168 = vpack.c.bf16 %v4136, %v4136
      %v4169 = vpack.c.bf16 %v4137, %v4137
      %v4170 = vpack.c.bf16 %v4138, %v4138
      %v4171 = vpack.c.bf16 %v4139, %v4139
      %v4172 = vpack.c.bf16 %v4140, %v4140
      %v4173 = vpack.c.bf16 %v4141, %v4141
      %v4174 = vpack.c.bf16 %v4142, %v4142
      %v4175 = vpack.c.bf16 %v4143, %v4143
      %v4176 = vpack.c.bf16 %v4144, %v4144
      %v4177 = vpack.c.bf16 %v4145, %v4145
      %v4178 = vpack.c.bf16 %v4146, %v4146
      %v4179 = vpack.c.bf16 %v4147, %v4147
      %v4180 = vpack.c.bf16 %v4148, %v4148
      %v4181 = vpack.c.bf16 %v4149, %v4149
      %v4182 = vpack.c.bf16 %v4150, %v4150
      %v4183 = vpack.c.bf16 %v4151, %v4151
      %v4184 = vld [vmem:[%s5] sm:$0xf]
      %v4185 = vld [vmem:[%s5 + $0x4] sm:$0xf]
      %s4186 = scalar_lea.vmem %s5, 8
      %v4187 = vld [vmem:[%s4186] sm:$0xf]
      %v4188 = vld [vmem:[%s4186 + $0x4] sm:$0xf]
      %v4197 = vunpack.c.l.b16 %v4160
      %v4198 = vunpack.c.l.b16 %v4161
      %v4199 = vunpack.c.l.b16 %v4162
      %v4200 = vunpack.c.l.b16 %v4163
      %v4201 = vunpack.c.l.b16 %v4164
      %v4202 = vunpack.c.l.b16 %v4165
      %v4203 = vunpack.c.l.b16 %v4166
      %v4204 = vunpack.c.l.b16 %v4167
      %v4205 = vpack.c.b16 %v4198, %v4197
      %v4206 = vpack.c.b16 %v4200, %v4199
      %v4207 = vpack.c.b16 %v4202, %v4201
      %v4208 = vpack.c.b16 %v4204, %v4203
      %v4211 = vunpack.c.l.b16 %v4187
      %v4212 = vunpack.c.l.b16 %v4188
      %v4213 = vpack.c.b16 %v4212, %v4211
      %v4216 = vsel %vm1780, %v4205, 0
      %v4219 = vsel %vm1780, %v4206, 0
      %v4222 = vsel %vm1780, %v4207, 0
      %v4225 = vsel %vm1780, %v4208, 0
      %4227 = vmatpush.bf16.msra.mxu0 0
      %4228 = vmatpush.bf16.msra.mxu0 0
      %4229 = vmatpush.bf16.msra.mxu0 0
      %4230 = vmatpush.bf16.msra.mxu0 0
      %4231 = vmatpush.bf16.msra.mxu0 0
      %4232 = vmatpush.bf16.msra.mxu0 0
      %4233 = vmatpush.bf16.msra.mxu0 0
      %4234 = vmatpush.bf16.msra.mxu0 %v4213
      %4235 = vmatmul.bf16.gmra.mxu0 %v4216
      %v4236 = vpop.f32.mrf.mxu0
      %v4237 = vadd.f32 0.0, %v4236
      %v4238 = vpop.f32.mrf.mxu0
      %v4239 = vadd.f32 0.0, %v4238
      %4240 = vmatmul.bf16.gmra.mxu0 %v4219
      %v4241 = vpop.f32.mrf.mxu0
      %v4242 = vadd.f32 0.0, %v4241
      %v4243 = vpop.f32.mrf.mxu0
      %v4244 = vadd.f32 0.0, %v4243
      %4245 = vmatmul.bf16.gmra.mxu0 %v4222
      %v4246 = vpop.f32.mrf.mxu0
      %v4247 = vadd.f32 0.0, %v4246
      %v4248 = vpop.f32.mrf.mxu0
      %v4249 = vadd.f32 0.0, %v4248
      %4250 = vmatmul.bf16.gmra.mxu0 %v4225
      %v4251 = vpop.f32.mrf.mxu0
      %v4252 = vadd.f32 0.0, %v4251
      %v4253 = vpop.f32.mrf.mxu0
      %v4254 = vadd.f32 0.0, %v4253
      %4255 = vdwg.mxu0
      %v4264 = vunpack.c.l.b16 %v4152
      %v4265 = vunpack.c.l.b16 %v4153
      %v4266 = vunpack.c.l.b16 %v4154
      %v4267 = vunpack.c.l.b16 %v4155
      %v4268 = vunpack.c.l.b16 %v4156
      %v4269 = vunpack.c.l.b16 %v4157
      %v4270 = vunpack.c.l.b16 %v4158
      %v4271 = vunpack.c.l.b16 %v4159
      %v4272 = vpack.c.b16 %v4265, %v4264
      %v4273 = vpack.c.b16 %v4267, %v4266
      %v4274 = vpack.c.b16 %v4269, %v4268
      %v4275 = vpack.c.b16 %v4271, %v4270
      %v4278 = vunpack.c.l.b16 %v4184
      %v4279 = vunpack.c.l.b16 %v4185
      %v4280 = vpack.c.b16 %v4279, %v4278
      %v4283 = vsel %vm1780, %v4272, 0
      %v4286 = vsel %vm1780, %v4273, 0
      %v4289 = vsel %vm1780, %v4274, 0
      %v4292 = vsel %vm1780, %v4275, 0
      %4294 = vmatpush.bf16.msra.mxu0 0
      %4295 = vmatpush.bf16.msra.mxu0 0
      %4296 = vmatpush.bf16.msra.mxu0 0
      %4297 = vmatpush.bf16.msra.mxu0 0
      %4298 = vmatpush.bf16.msra.mxu0 0
      %4299 = vmatpush.bf16.msra.mxu0 0
      %4300 = vmatpush.bf16.msra.mxu0 0
      %4301 = vmatpush.bf16.msra.mxu0 %v4280
      %4302 = vmatmul.bf16.gmra.mxu0 %v4283
      %v4303 = vpop.f32.mrf.mxu0
      %v4304 = vadd.f32 %v4237, %v4303
      %v4305 = vpop.f32.mrf.mxu0
      %v4306 = vadd.f32 %v4239, %v4305
      %4307 = vmatmul.bf16.gmra.mxu0 %v4286
      %v4308 = vpop.f32.mrf.mxu0
      %v4309 = vadd.f32 %v4242, %v4308
      %v4310 = vpop.f32.mrf.mxu0
      %v4311 = vadd.f32 %v4244, %v4310
      %4312 = vmatmul.bf16.gmra.mxu0 %v4289
      %v4313 = vpop.f32.mrf.mxu0
      %v4314 = vadd.f32 %v4247, %v4313
      %v4315 = vpop.f32.mrf.mxu0
      %v4316 = vadd.f32 %v4249, %v4315
      %4317 = vmatmul.bf16.gmra.mxu0 %v4292
      %v4318 = vpop.f32.mrf.mxu0
      %v4319 = vadd.f32 %v4252, %v4318
      %v4320 = vpop.f32.mrf.mxu0
      %v4321 = vadd.f32 %v4254, %v4320
      %4322 = vdwg.mxu0
      %s4323 = scalar_lea.vmem %s5, 16
      %v4324 = vld [vmem:[%s4323] sm:$0xf]
      %v4325 = vld [vmem:[%s4323 + $0x4] sm:$0xf]
      %v4334 = vunpack.c.l.b16 %v4168
      %v4335 = vunpack.c.l.b16 %v4169
      %v4336 = vunpack.c.l.b16 %v4170
      %v4337 = vunpack.c.l.b16 %v4171
      %v4338 = vunpack.c.l.b16 %v4172
      %v4339 = vunpack.c.l.b16 %v4173
      %v4340 = vunpack.c.l.b16 %v4174
      %v4341 = vunpack.c.l.b16 %v4175
      %v4342 = vpack.c.b16 %v4335, %v4334
      %v4343 = vpack.c.b16 %v4337, %v4336
      %v4344 = vpack.c.b16 %v4339, %v4338
      %v4345 = vpack.c.b16 %v4341, %v4340
      %v4348 = vunpack.c.l.b16 %v4324
      %v4349 = vunpack.c.l.b16 %v4325
      %v4350 = vpack.c.b16 %v4349, %v4348
      %v4353 = vsel %vm1780, %v4342, 0
      %v4356 = vsel %vm1780, %v4343, 0
      %v4359 = vsel %vm1780, %v4344, 0
      %v4362 = vsel %vm1780, %v4345, 0
      %4364 = vmatpush.bf16.msra.mxu0 0
      %4365 = vmatpush.bf16.msra.mxu0 0
      %4366 = vmatpush.bf16.msra.mxu0 0
      %4367 = vmatpush.bf16.msra.mxu0 0
      %4368 = vmatpush.bf16.msra.mxu0 0
      %4369 = vmatpush.bf16.msra.mxu0 0
      %4370 = vmatpush.bf16.msra.mxu0 0
      %4371 = vmatpush.bf16.msra.mxu0 %v4350
      %4372 = vmatmul.bf16.gmra.mxu0 %v4353
      %v4373 = vpop.f32.mrf.mxu0
      %v4374 = vadd.f32 0.0, %v4373
      %v4375 = vpop.f32.mrf.mxu0
      %v4376 = vadd.f32 0.0, %v4375
      %4377 = vmatmul.bf16.gmra.mxu0 %v4356
      %v4378 = vpop.f32.mrf.mxu0
      %v4379 = vadd.f32 0.0, %v4378
      %v4380 = vpop.f32.mrf.mxu0
      %v4381 = vadd.f32 0.0, %v4380
      %4382 = vmatmul.bf16.gmra.mxu0 %v4359
      %v4383 = vpop.f32.mrf.mxu0
      %v4384 = vadd.f32 0.0, %v4383
      %v4385 = vpop.f32.mrf.mxu0
      %v4386 = vadd.f32 0.0, %v4385
      %4387 = vmatmul.bf16.gmra.mxu0 %v4362
      %v4388 = vpop.f32.mrf.mxu0
      %v4389 = vadd.f32 0.0, %v4388
      %v4390 = vpop.f32.mrf.mxu0
      %v4391 = vadd.f32 0.0, %v4390
      %4392 = vdwg.mxu0
      %v4393 = vadd.f32 %v4304, %v4374
      %v4394 = vadd.f32 %v4306, %v4376
      %v4395 = vadd.f32 %v4309, %v4379
      %v4396 = vadd.f32 %v4311, %v4381
      %v4397 = vadd.f32 %v4314, %v4384
      %v4398 = vadd.f32 %v4316, %v4386
      %v4399 = vadd.f32 %v4319, %v4389
      %v4400 = vadd.f32 %v4321, %v4391
      %s4401 = scalar_lea.vmem %s5, 24
      %v4402 = vld [vmem:[%s4401] sm:$0xf]
      %v4403 = vld [vmem:[%s4401 + $0x4] sm:$0xf]
      %v4412 = vunpack.c.l.b16 %v4176
      %v4413 = vunpack.c.l.b16 %v4177
      %v4414 = vunpack.c.l.b16 %v4178
      %v4415 = vunpack.c.l.b16 %v4179
      %v4416 = vunpack.c.l.b16 %v4180
      %v4417 = vunpack.c.l.b16 %v4181
      %v4418 = vunpack.c.l.b16 %v4182
      %v4419 = vunpack.c.l.b16 %v4183
      %v4420 = vpack.c.b16 %v4413, %v4412
      %v4421 = vpack.c.b16 %v4415, %v4414
      %v4422 = vpack.c.b16 %v4417, %v4416
      %v4423 = vpack.c.b16 %v4419, %v4418
      %v4426 = vunpack.c.l.b16 %v4402
      %v4427 = vunpack.c.l.b16 %v4403
      %v4428 = vpack.c.b16 %v4427, %v4426
      %v4431 = vsel %vm1780, %v4420, 0
      %v4434 = vsel %vm1780, %v4421, 0
      %v4437 = vsel %vm1780, %v4422, 0
      %v4440 = vsel %vm1780, %v4423, 0
      %4442 = vmatpush.bf16.msra.mxu0 0
      %4443 = vmatpush.bf16.msra.mxu0 0
      %4444 = vmatpush.bf16.msra.mxu0 0
      %4445 = vmatpush.bf16.msra.mxu0 0
      %4446 = vmatpush.bf16.msra.mxu0 0
      %4447 = vmatpush.bf16.msra.mxu0 0
      %4448 = vmatpush.bf16.msra.mxu0 0
      %4449 = vmatpush.bf16.msra.mxu0 %v4428
      %4450 = vmatmul.bf16.gmra.mxu0 %v4431
      %v4451 = vpop.f32.mrf.mxu0
      %v4452 = vadd.f32 0.0, %v4451
      %v4453 = vpop.f32.mrf.mxu0
      %v4454 = vadd.f32 0.0, %v4453
      %4455 = vmatmul.bf16.gmra.mxu0 %v4434
      %v4456 = vpop.f32.mrf.mxu0
      %v4457 = vadd.f32 0.0, %v4456
      %v4458 = vpop.f32.mrf.mxu0
      %v4459 = vadd.f32 0.0, %v4458
      %4460 = vmatmul.bf16.gmra.mxu0 %v4437
      %v4461 = vpop.f32.mrf.mxu0
      %v4462 = vadd.f32 0.0, %v4461
      %v4463 = vpop.f32.mrf.mxu0
      %v4464 = vadd.f32 0.0, %v4463
      %4465 = vmatmul.bf16.gmra.mxu0 %v4440
      %v4466 = vpop.f32.mrf.mxu0
      %v4467 = vadd.f32 0.0, %v4466
      %v4468 = vpop.f32.mrf.mxu0
      %v4469 = vadd.f32 0.0, %v4468
      %4470 = vdwg.mxu0
      %v4471 = vadd.f32 %v4393, %v4452
      %v4472 = vadd.f32 %v4394, %v4454
      %v4473 = vadd.f32 %v4395, %v4457
      %v4474 = vadd.f32 %v4396, %v4459
      %v4475 = vadd.f32 %v4397, %v4462
      %v4476 = vadd.f32 %v4398, %v4464
      %v4477 = vadd.f32 %v4399, %v4467
      %v4478 = vadd.f32 %v4400, %v4469
      %4479 = vst.msk [vmem:[%s251] sm:$0xff] %vm289, %v4471
      %4480 = vst.msk [vmem:[%s251 + $0x8] sm:$0xff] %vm289, %v4472
      %4481 = vst.msk [vmem:[%s251 + $0x10] sm:$0xff] %vm289, %v4473
      %4482 = vst.msk [vmem:[%s251 + $0x18] sm:$0xff] %vm289, %v4474
      %4483 = vst.msk [vmem:[%s251 + $0x20] sm:$0xff] %vm289, %v4475
      %4484 = vst.msk [vmem:[%s251 + $0x28] sm:$0xff] %vm289, %v4476
      %4485 = vst.msk [vmem:[%s251 + $0x30] sm:$0xff] %vm289, %v4477
      %4486 = vst.msk [vmem:[%s251 + $0x38] sm:$0xff] %vm289, %v4478
      %p4487 = scmp.lt.s32.totalorder %s17, 1
      %s4488 = scalar_select %p4487, %s17, 1
      %s4489 = smul.addr %s4488, 8
      %s4490 = smul.addr %s4489, 8
      %s4491 = scalar_lea.vmem %s6, %s4490
      // Predicated region
      $region52: #{tpu_custom_call.1} parent=43 // pred_check
        %p4492 = pneg %p166
      $region53: #{tpu_custom_call.1} parent=43 // pred_check_branch
        %4494 = sbr.rel (%p4492) target = $region55
      $region54: #{tpu_custom_call.1} parent=43 // pred_region
        _
      $region55: #{tpu_custom_call.1} parent=43 // pred_fallthru
        _
    $region44: #{tpu_custom_call.1} parent=5 // pred_fallthru
      _
    %p4495 = scmp.le.s32.totalorder 2, %s12
    // Predicated region
    $region56: #{tpu_custom_call.1} parent=5 // pred_check
      %p4496 = pneg %p4495
    $region57: #{tpu_custom_call.1} parent=5 // pred_check_branch
      %4498 = sbr.rel (%p4496) target = $region59
    $region58: #{tpu_custom_call.1} parent=5 // pred_region
      %s4499 = ssub.s32 %s12, 2
      // Predicated region
      $region60: #{tpu_custom_call.1} parent=58 // pred_check
        %p4500 = pneg %p172
      $region61: #{tpu_custom_call.1} parent=58 // pred_check_branch
        %4502 = sbr.rel (%p4500) target = $region63
      $region62: #{tpu_custom_call.1} parent=58 // pred_region
        %p4503 = scmp.lt.s32.totalorder %s18, 1
        %s4504 = scalar_select %p4503, %s18, 1
        %s4505 = smul.addr %s4504, 8
        %s4506 = smul.addr %s4505, 8
        %s4507 = scalar_lea.vmem %s6, %s4506
      $region63: #{tpu_custom_call.1} parent=58 // pred_fallthru
        _
    $region59: #{tpu_custom_call.1} parent=5 // pred_fallthru
      _
  $region6: #{tpu_custom_call.1} parent=0 // loop_footer
    %s16 = sadd.s32 1, %s12
  $region7: #{tpu_custom_call.1} parent=0 // loop_footer_branch
    %11 = sbr.rel target = $region3
  $region8: #{tpu_custom_call.1} parent=0 // loop_exit
    _

</llo_original>
